<compile_context>
chip_gen: v5e
topology: v5e:2x2
jax: 0.10.0
libtpu: 0.0.40
codegen_flags: <defaults>
</compile_context>

<pallas_src>
import jax
import jax.numpy as jnp
from jax import lax
from jax.experimental import pallas as pl
from jax.experimental.pallas import tpu as pltpu

GN_GROUPS = 32
GN_EPS = 1e-5
GUARD = 128          # zero guard band (lanes) around the flat activation, >= W+1


# ----------------------------- in-kernel helpers ------------------------------
def _gn_silu(x, w_col, b_col, a_mat):
    """GroupNorm32 + SiLU on a (C, L) f32 slab, one-pass stats.

    a_mat is a (C, C) same-group indicator scaled by 1/(Cg*L); a single MXU dot
    against [sum(x), sum(x*x)] yields per-channel-broadcast E[x], E[x^2].
    """
    s1 = jnp.sum(x, axis=1, keepdims=True)                                  # (C,1)
    s2 = jnp.sum(x * x, axis=1, keepdims=True)                              # (C,1)
    stats = jnp.dot(a_mat, jnp.concatenate([s1, s2], axis=1),
                    preferred_element_type=jnp.float32)                     # (C,2)
    mean = stats[:, 0:1]
    var = stats[:, 1:2] - mean * mean
    scale = lax.rsqrt(var + GN_EPS) * w_col
    shift = b_col - mean * scale
    y = x * scale + shift
    return y * jax.nn.sigmoid(y)


def _conv3x3(h, wmat_ref, bias_col, m_left, m_right, *, img_w):
    """3x3 'same' conv on a flat (Cin, L=H*W) f32 slab -> (Cout, L) f32.

    The slab is cast to bf16 ONCE and embedded in a zero guard band so
    out-of-image row taps read zeros; left/right image-edge wrap is removed by
    baking two column masks into the 6 shifted copies that need them.  The 9
    shifted bf16 copies are stacked into a (9*Cin, L) im2col slab and the whole
    conv is a single bf16 MXU dot with f32 accumulation (lane-dense output L).
    """
    cin, l = h.shape
    hb = h.astype(jnp.bfloat16)                       # single bf16 cast per conv
    zg = jnp.zeros((cin, GUARD), jnp.bfloat16)
    hp = jnp.concatenate([zg, hb, zg], axis=1)        # (Cin, L + 2*GUARD) bf16
    parts = []
    for di in range(3):
        for dj in range(3):
            oi, oj = di - 1, dj - 1
            base = GUARD + oi * img_w + oj
            sh = hp[:, base:base + l]                 # (Cin, L) shifted copy
            if oj == 1:
                sh = sh * m_right                     # zero last image column
            elif oj == -1:
                sh = sh * m_left                      # zero first image column
            parts.append(sh)
    patches = jnp.concatenate(parts, axis=0)          # (9*Cin, L) bf16
    return jnp.dot(wmat_ref[...], patches,
                   preferred_element_type=jnp.float32) + bias_col


def _make_resblock_kernel(*, img_w, has_skip):
    def kernel(x_ref, emb_ref, ml_ref, mr_ref,
               gn1w_ref, gn1b_ref, a1_ref, w1_ref, b1_ref,
               embw_ref, embb_ref,
               gn2w_ref, gn2b_ref, a2_ref, w2_ref, b2_ref,
               *rest):
        if has_skip:
            skw_ref, skb_ref, out_ref = rest
        else:
            (out_ref,) = rest

        n = pl.program_id(0)
        x = x_ref[0]                                                        # (Cin, L) f32
        m_left = ml_ref[...]                                                # (1, L) bf16
        m_right = mr_ref[...]

        # skip connection first: park it in out_ref so x dies after GN1.
        if has_skip:
            skip = jnp.dot(skw_ref[...], x.astype(jnp.bfloat16),
                           preferred_element_type=jnp.float32) + skb_ref[...]
        else:
            skip = x
        out_ref[0] = skip.astype(out_ref.dtype)

        # emb_layers: SiLU -> Linear, folded into conv1's bias column.
        erow = emb_ref[pl.ds(n, 1), :]                                      # (1, D)
        erow = erow * jax.nn.sigmoid(erow)
        e_col = jnp.sum(embw_ref[...] * erow, axis=1, keepdims=True) + embb_ref[...]

        # in_layers: GroupNorm32 + SiLU -> 3x3 conv (bias + emb fused)
        h = _gn_silu(x, gn1w_ref[...], gn1b_ref[...], a1_ref[...])
        h = _conv3x3(h, w1_ref, b1_ref[...] + e_col, m_left, m_right, img_w=img_w)

        # out_layers: GroupNorm32 + SiLU -> (Dropout p=0 == identity) -> 3x3 conv
        h = _gn_silu(h, gn2w_ref[...], gn2b_ref[...], a2_ref[...])
        h = _conv3x3(h, w2_ref, b2_ref[...], m_left, m_right, img_w=img_w)

        # residual add (skip already parked in out_ref)
        out_ref[0] = out_ref[0] + h.astype(out_ref.dtype)

    return kernel


# ------------------------------- host-side wrapper ----------------------------
def resblock_forward(p, x, emb):
    """Pallas fused ResBlock forward.  x: (N, C, H, W) NCHW, emb: (N, D)."""
    n, cin, hh, ww = x.shape
    l = hh * ww
    cout = p["conv1_w"].shape[0]
    has_skip = "skip_w" in p
    assert ww + 1 <= GUARD

    x2 = x.reshape(n, cin, l).astype(jnp.float32)
    emb_f = emb.astype(jnp.float32)

    # Column-validity masks (left/right image edges after flat shifts), bf16.
    col = jnp.arange(l, dtype=jnp.int32) % ww
    m_left = (col >= 1).astype(jnp.bfloat16).reshape(1, l)
    m_right = (col <= ww - 2).astype(jnp.bfloat16).reshape(1, l)

    def group_mat(c):
        cg = c // GN_GROUPS
        gid = jnp.arange(c, dtype=jnp.int32) // cg
        return (gid[:, None] == gid[None, :]).astype(jnp.float32) / float(cg * l)

    def wmat(wconv):   # (Cout, Cin, 3, 3) -> (Cout, 9*Cin) bf16, tap-major, Cin-minor
        co, ci = wconv.shape[0], wconv.shape[1]
        return wconv.transpose(0, 2, 3, 1).reshape(co, 9 * ci).astype(jnp.bfloat16)

    col_ = lambda v: v.reshape(-1, 1).astype(jnp.float32)

    operands = [
        x2, emb_f, m_left, m_right,
        col_(p["gn1_w"]), col_(p["gn1_b"]), group_mat(cin),
        wmat(p["conv1_w"]), col_(p["conv1_b"]),
        p["emb_w"].astype(jnp.float32), col_(p["emb_b"]),
        col_(p["gn2_w"]), col_(p["gn2_b"]), group_mat(cout),
        wmat(p["conv2_w"]), col_(p["conv2_b"]),
    ]
    if has_skip:
        operands += [p["skip_w"][:, :, 0, 0].astype(jnp.bfloat16), col_(p["skip_b"])]

    def full(a):
        nd = a.ndim
        return pl.BlockSpec(a.shape, lambda i, _nd=nd: (0,) * _nd)

    in_specs = [pl.BlockSpec((1, cin, l), lambda i: (i, 0, 0))]
    in_specs += [full(a) for a in operands[1:]]

    kernel = _make_resblock_kernel(img_w=ww, has_skip=has_skip)
    out = pl.pallas_call(
        kernel,
        grid=(n,),
        in_specs=in_specs,
        out_specs=pl.BlockSpec((1, cout, l), lambda i: (i, 0, 0)),
        out_shape=jax.ShapeDtypeStruct((n, cout, l), jnp.float32),
        compiler_params=pltpu.CompilerParams(dimension_semantics=("parallel",)),
    )(*operands)
    return out.reshape(n, cout, hh, ww)


# ------------------------------ pure-JAX reference -----------------------------
def _ref_gn_silu(x, w, b):
    n, c, hh, ww = x.shape
    g = GN_GROUPS
    xr = x.reshape(n, g, c // g, hh, ww)
    mean = xr.mean(axis=(2, 3, 4), keepdims=True)
    var = jnp.square(xr - mean).mean(axis=(2, 3, 4), keepdims=True)
    y = ((xr - mean) / jnp.sqrt(var + GN_EPS)).reshape(n, c, hh, ww)
    y = y * w[None, :, None, None] + b[None, :, None, None]
    return y * jax.nn.sigmoid(y)


def _ref_conv(x, w, b, pad):
    y = lax.conv_general_dilated(x, w, (1, 1), ((pad, pad), (pad, pad)),
                                 dimension_numbers=("NCHW", "OIHW", "NCHW"))
    return y + b[None, :, None, None]


def resblock_forward_ref(p, x, emb):
    h = _ref_gn_silu(x, p["gn1_w"], p["gn1_b"])
    h = _ref_conv(h, p["conv1_w"], p["conv1_b"], 1)
    e = jax.nn.silu(emb) @ p["emb_w"].T + p["emb_b"]
    h = h + e[:, :, None, None]
    h = _ref_gn_silu(h, p["gn2_w"], p["gn2_b"])
    h = _ref_conv(h, p["conv2_w"], p["conv2_b"], 1)
    skip = _ref_conv(x, p["skip_w"], p["skip_b"], 0) if "skip_w" in p else x
    return skip + h


# ------------------------------ parameter builder ------------------------------
def init_resblock_params(key, channels, out_channels, emb_channels):
    ks = jax.random.split(key, 10)

    def conv_w(k, co, ci, ksz):
        w = 0.05 * jax.random.normal(k, (co, ci, ksz, ksz), jnp.float32)
        # round to bf16-representable so kernel (bf16) and reference (f32) share weights
        return w.astype(jnp.bfloat16).astype(jnp.float32)

    def vec(k, c, scale=0.02):
        return scale * jax.random.normal(k, (c,), jnp.float32)

    p = {
        "gn1_w": jnp.ones((channels,), jnp.float32),
        "gn1_b": jnp.zeros((channels,), jnp.float32),
        "conv1_w": conv_w(ks[0], out_channels, channels, 3),
        "conv1_b": vec(ks[1], out_channels),
        "emb_w": 0.05 * jax.random.normal(ks[2], (out_channels, emb_channels), jnp.float32),
        "emb_b": vec(ks[3], out_channels),
        "gn2_w": 1.0 + 0.1 * jax.random.normal(ks[4], (out_channels,), jnp.float32),
        "gn2_b": 0.1 * jax.random.normal(ks[5], (out_channels,), jnp.float32),
        # torch zero_module() zero-inits this conv; random here so the kernel does real work.
        "conv2_w": conv_w(ks[6], out_channels, out_channels, 3),
        "conv2_b": vec(ks[7], out_channels),
    }
    if out_channels != channels:
        p["skip_w"] = conv_w(ks[8], out_channels, channels, 1)
        p["skip_b"] = vec(ks[9], out_channels)
    return p


# ------------------------------------ main -------------------------------------
if __name__ == "__main__":
    key = jax.random.PRNGKey(0)
    kp1, kp2, kx, ke = jax.random.split(key, 4)

    N, C, H, W = 2, 32, 16, 16          # channels divisible by 32 (GroupNorm32)
    COUT, EMB = 64, 128

    x = jax.random.normal(kx, (N, C, H, W), jnp.float32)
    emb = jax.random.normal(ke, (N, EMB), jnp.float32)

    fwd = jax.jit(resblock_forward)
    ref = jax.jit(resblock_forward_ref)

    # channel-changing ResBlock (1x1 conv skip connection)
    p1 = init_resblock_params(kp1, C, COUT, EMB)
    out1 = jax.block_until_ready(fwd(p1, x, emb))
    assert out1.shape == (N, COUT, H, W), out1.shape
    assert bool(jnp.all(jnp.isfinite(out1)))
    r1 = ref(p1, x, emb)
    assert bool(jnp.allclose(out1, r1, atol=0.15, rtol=0.05)), \
        float(jnp.max(jnp.abs(out1 - r1)))

    # identity-skip ResBlock (out_channels == channels)
    p2 = init_resblock_params(kp2, C, C, EMB)
    out2 = jax.block_until_ready(fwd(p2, x, emb))
    r2 = ref(p2, x, emb)
    assert out2.shape == (N, C, H, W), out2.shape
    assert bool(jnp.allclose(out2, r2, atol=0.15, rtol=0.05)), \
        float(jnp.max(jnp.abs(out2 - r2)))

    print("KERNEL_OK")
</pallas_src>

<mosaic_0001>
module attributes {stable_mosaic.version = 11 : i64} {
  func.func @kernel(%arg0: i32, %arg1: memref<1x32x256xf32, #tpu.memory_space<vmem>>, %arg2: memref<2x128xf32, #tpu.memory_space<vmem>>, %arg3: memref<1x256xbf16, #tpu.memory_space<vmem>>, %arg4: memref<1x256xbf16, #tpu.memory_space<vmem>>, %arg5: memref<32x1xf32, #tpu.memory_space<vmem>>, %arg6: memref<32x1xf32, #tpu.memory_space<vmem>>, %arg7: memref<32x32xf32, #tpu.memory_space<vmem>>, %arg8: memref<64x288xbf16, #tpu.memory_space<vmem>>, %arg9: memref<64x1xf32, #tpu.memory_space<vmem>>, %arg10: memref<64x128xf32, #tpu.memory_space<vmem>>, %arg11: memref<64x1xf32, #tpu.memory_space<vmem>>, %arg12: memref<64x1xf32, #tpu.memory_space<vmem>>, %arg13: memref<64x1xf32, #tpu.memory_space<vmem>>, %arg14: memref<64x64xf32, #tpu.memory_space<vmem>>, %arg15: memref<64x576xbf16, #tpu.memory_space<vmem>>, %arg16: memref<64x1xf32, #tpu.memory_space<vmem>>, %arg17: memref<64x32xbf16, #tpu.memory_space<vmem>>, %arg18: memref<64x1xf32, #tpu.memory_space<vmem>>, %arg19: memref<1x64x256xf32, #tpu.memory_space<vmem>>) attributes {dimension_semantics = [#tpu.dimension_semantics<parallel>], iteration_bounds = array<i64: 2>, scalar_prefetch = 0 : i64, scratch_operands = 0 : i64, tpu.core_type = #tpu.core_type<tc>, window_params = [{transform_indices = @transform_0, window_bounds = array<i64: 1, 32, 256>}, {pipeline_mode = #tpu.pipeline_mode<synchronous>, transform_indices = @transform_1, window_bounds = array<i64: 2, 128>}, {pipeline_mode = #tpu.pipeline_mode<synchronous>, transform_indices = @transform_2, window_bounds = array<i64: 1, 256>}, {pipeline_mode = #tpu.pipeline_mode<synchronous>, transform_indices = @transform_3, window_bounds = array<i64: 1, 256>}, {pipeline_mode = #tpu.pipeline_mode<synchronous>, transform_indices = @transform_4, window_bounds = array<i64: 32, 1>}, {pipeline_mode = #tpu.pipeline_mode<synchronous>, transform_indices = @transform_5, window_bounds = array<i64: 32, 1>}, {pipeline_mode = #tpu.pipeline_mode<synchronous>, transform_indices = @transform_6, window_bounds = array<i64: 32, 32>}, {pipeline_mode = #tpu.pipeline_mode<synchronous>, transform_indices = @transform_7, window_bounds = array<i64: 64, 288>}, {pipeline_mode = #tpu.pipeline_mode<synchronous>, transform_indices = @transform_8, window_bounds = array<i64: 64, 1>}, {pipeline_mode = #tpu.pipeline_mode<synchronous>, transform_indices = @transform_9, window_bounds = array<i64: 64, 128>}, {pipeline_mode = #tpu.pipeline_mode<synchronous>, transform_indices = @transform_10, window_bounds = array<i64: 64, 1>}, {pipeline_mode = #tpu.pipeline_mode<synchronous>, transform_indices = @transform_11, window_bounds = array<i64: 64, 1>}, {pipeline_mode = #tpu.pipeline_mode<synchronous>, transform_indices = @transform_12, window_bounds = array<i64: 64, 1>}, {pipeline_mode = #tpu.pipeline_mode<synchronous>, transform_indices = @transform_13, window_bounds = array<i64: 64, 64>}, {pipeline_mode = #tpu.pipeline_mode<synchronous>, transform_indices = @transform_14, window_bounds = array<i64: 64, 576>}, {pipeline_mode = #tpu.pipeline_mode<synchronous>, transform_indices = @transform_15, window_bounds = array<i64: 64, 1>}, {pipeline_mode = #tpu.pipeline_mode<synchronous>, transform_indices = @transform_16, window_bounds = array<i64: 64, 32>}, {pipeline_mode = #tpu.pipeline_mode<synchronous>, transform_indices = @transform_17, window_bounds = array<i64: 64, 1>}, {transform_indices = @transform_18, window_bounds = array<i64: 1, 64, 256>}]} {
    %c0 = arith.constant 0 : index
    %c0_0 = arith.constant 0 : index
    %c0_1 = arith.constant 0 : index
    %0 = vector.load %arg1[%c0, %c0_0, %c0_1] : memref<1x32x256xf32, #tpu.memory_space<vmem>>, vector<1x32x256xf32>
    %1 = vector.shape_cast %0 : vector<1x32x256xf32> to vector<32x256xf32>
    %c0_2 = arith.constant 0 : index
    %c0_3 = arith.constant 0 : index
    %2 = vector.load %arg3[%c0_2, %c0_3] : memref<1x256xbf16, #tpu.memory_space<vmem>>, vector<1x256xbf16>
    %c0_4 = arith.constant 0 : index
    %c0_5 = arith.constant 0 : index
    %3 = vector.load %arg4[%c0_4, %c0_5] : memref<1x256xbf16, #tpu.memory_space<vmem>>, vector<1x256xbf16>
    %c0_6 = arith.constant 0 : index
    %c0_7 = arith.constant 0 : index
    %4 = vector.load %arg17[%c0_6, %c0_7] : memref<64x32xbf16, #tpu.memory_space<vmem>>, vector<64x32xbf16>
    %5 = arith.truncf %1 : vector<32x256xf32> to vector<32x256xbf16>
    %cst = arith.constant dense<0.000000e+00> : vector<64x256xf32>
    %6 = tpu.matmul %4, %5, %cst {dimension_numbers = #tpu.dot_dimension_numbers<[1], [0], [0], [1], [0, 0, 1, 1], [], []>} : vector<64x32xbf16>, vector<32x256xbf16>, vector<64x256xf32> -> vector<64x256xf32>
    %c0_8 = arith.constant 0 : index
    %c0_9 = arith.constant 0 : index
    %7 = vector.load %arg18[%c0_8, %c0_9] : memref<64x1xf32, #tpu.memory_space<vmem>>, vector<64x1xf32>
    %8 = vector.broadcast %7 : vector<64x1xf32> to vector<64x256xf32>
    %9 = arith.addf %6, %8 : vector<64x256xf32>
    %c0_10 = arith.constant 0 : index
    %c0_11 = arith.constant 0 : index
    %c0_12 = arith.constant 0 : index
    %10 = vector.load %arg19[%c0_10, %c0_11, %c0_12] : memref<1x64x256xf32, #tpu.memory_space<vmem>>, vector<1x64x256xf32>
    %11 = vector.shape_cast %10 : vector<1x64x256xf32> to vector<64x256xf32>
    %12 = vector.shape_cast %9 : vector<64x256xf32> to vector<1x64x256xf32>
    tpu.vector_store %arg19[%c0_10, %c0_11, %c0_12], %12 {strides = array<i32>} : memref<1x64x256xf32, #tpu.memory_space<vmem>>, vector<1x64x256xf32>,
    %13 = arith.index_cast %arg0 : i32 to index
    %c0_13 = arith.constant 0 : index
    %14 = vector.load %arg2[%13, %c0_13] : memref<2x128xf32, #tpu.memory_space<vmem>>, vector<1x128xf32>
    %15 = arith.negf %14 : vector<1x128xf32>
    %16 = math.exp %15 : vector<1x128xf32>
    %cst_14 = arith.constant 1.000000e+00 : f32
    %17 = vector.broadcast %cst_14 : f32 to vector<1x128xf32>
    %18 = arith.addf %17, %16 : vector<1x128xf32>
    %19 = arith.divf %17, %18 : vector<1x128xf32>
    %20 = arith.mulf %14, %19 : vector<1x128xf32>
    %c0_15 = arith.constant 0 : index
    %c0_16 = arith.constant 0 : index
    %21 = vector.load %arg10[%c0_15, %c0_16] : memref<64x128xf32, #tpu.memory_space<vmem>>, vector<64x128xf32>
    %22 = vector.broadcast %20 : vector<1x128xf32> to vector<64x128xf32>
    %23 = arith.mulf %21, %22 : vector<64x128xf32>
    %cst_17 = arith.constant dense<0.000000e+00> : vector<64xf32>
    %24 = vector.multi_reduction <add>, %23, %cst_17 [1] : vector<64x128xf32> to vector<64xf32>
    %25 = vector.shape_cast %24 : vector<64xf32> to vector<64x1xf32>
    %c0_18 = arith.constant 0 : index
    %c0_19 = arith.constant 0 : index
    %26 = vector.load %arg11[%c0_18, %c0_19] : memref<64x1xf32, #tpu.memory_space<vmem>>, vector<64x1xf32>
    %27 = arith.addf %25, %26 : vector<64x1xf32>
    %c0_20 = arith.constant 0 : index
    %c0_21 = arith.constant 0 : index
    %28 = vector.load %arg5[%c0_20, %c0_21] : memref<32x1xf32, #tpu.memory_space<vmem>>, vector<32x1xf32>
    %c0_22 = arith.constant 0 : index
    %c0_23 = arith.constant 0 : index
    %29 = vector.load %arg6[%c0_22, %c0_23] : memref<32x1xf32, #tpu.memory_space<vmem>>, vector<32x1xf32>
    %c0_24 = arith.constant 0 : index
    %c0_25 = arith.constant 0 : index
    %30 = vector.load %arg7[%c0_24, %c0_25] : memref<32x32xf32, #tpu.memory_space<vmem>>, vector<32x32xf32>
    %cst_26 = arith.constant dense<0.000000e+00> : vector<32xf32>
    %31 = vector.multi_reduction <add>, %1, %cst_26 [1] : vector<32x256xf32> to vector<32xf32>
    %32 = vector.shape_cast %31 : vector<32xf32> to vector<32x1xf32>
    %33 = arith.mulf %1, %1 : vector<32x256xf32>
    %cst_27 = arith.constant dense<0.000000e+00> : vector<32xf32>
    %34 = vector.multi_reduction <add>, %33, %cst_27 [1] : vector<32x256xf32> to vector<32xf32>
    %35 = vector.shape_cast %34 : vector<32xf32> to vector<32x1xf32>
    %36 = tpu.concatenate %32, %35 in 1 : vector<32x1xf32>, vector<32x1xf32> -> vector<32x2xf32>
    %cst_28 = arith.constant dense<0.000000e+00> : vector<32x2xf32>
    %37 = tpu.matmul %30, %36, %cst_28 {dimension_numbers = #tpu.dot_dimension_numbers<[1], [0], [0], [1], [0, 0, 1, 1], [], []>} : vector<32x32xf32>, vector<32x2xf32>, vector<32x2xf32> -> vector<32x2xf32>
    %38 = vector.extract_strided_slice %37 {offsets = [0, 0], sizes = [32, 1], strides = [1, 1]} : vector<32x2xf32> to vector<32x1xf32>
    %39 = vector.extract_strided_slice %37 {offsets = [0, 1], sizes = [32, 1], strides = [1, 1]} : vector<32x2xf32> to vector<32x1xf32>
    %40 = arith.mulf %38, %38 : vector<32x1xf32>
    %41 = arith.subf %39, %40 : vector<32x1xf32>
    %cst_29 = arith.constant 9.99999974E-6 : f32
    %42 = vector.broadcast %cst_29 : f32 to vector<32x1xf32>
    %43 = arith.addf %41, %42 : vector<32x1xf32>
    %44 = math.rsqrt %43 : vector<32x1xf32>
    %45 = arith.mulf %44, %28 : vector<32x1xf32>
    %46 = arith.mulf %38, %45 : vector<32x1xf32>
    %47 = arith.subf %29, %46 : vector<32x1xf32>
    %48 = vector.broadcast %45 : vector<32x1xf32> to vector<32x256xf32>
    %49 = arith.mulf %1, %48 : vector<32x256xf32>
    %50 = vector.broadcast %47 : vector<32x1xf32> to vector<32x256xf32>
    %51 = arith.addf %49, %50 : vector<32x256xf32>
    %52 = arith.negf %51 : vector<32x256xf32>
    %53 = math.exp %52 : vector<32x256xf32>
    %cst_30 = arith.constant 1.000000e+00 : f32
    %54 = vector.broadcast %cst_30 : f32 to vector<32x256xf32>
    %55 = arith.addf %54, %53 : vector<32x256xf32>
    %56 = arith.divf %54, %55 : vector<32x256xf32>
    %57 = arith.mulf %51, %56 : vector<32x256xf32>
    %c0_31 = arith.constant 0 : index
    %c0_32 = arith.constant 0 : index
    %58 = vector.load %arg9[%c0_31, %c0_32] : memref<64x1xf32, #tpu.memory_space<vmem>>, vector<64x1xf32>
    %59 = arith.addf %58, %27 : vector<64x1xf32>
    %60 = arith.truncf %57 : vector<32x256xf32> to vector<32x256xbf16>
    %cst_33 = arith.constant 0.000000e+00 : bf16
    %61 = vector.broadcast %cst_33 : bf16 to vector<32x128xbf16>
    %62 = tpu.concatenate %61, %60, %61 in 1 : vector<32x128xbf16>, vector<32x256xbf16>, vector<32x128xbf16> -> vector<32x512xbf16>
    %63 = vector.extract_strided_slice %62 {offsets = [0, 111], sizes = [32, 256], strides = [1, 1]} : vector<32x512xbf16> to vector<32x256xbf16>
    %64 = vector.broadcast %2 : vector<1x256xbf16> to vector<32x256xbf16>
    %65 = arith.mulf %63, %64 : vector<32x256xbf16>
    %66 = vector.extract_strided_slice %62 {offsets = [0, 112], sizes = [32, 256], strides = [1, 1]} : vector<32x512xbf16> to vector<32x256xbf16>
    %67 = vector.extract_strided_slice %62 {offsets = [0, 113], sizes = [32, 256], strides = [1, 1]} : vector<32x512xbf16> to vector<32x256xbf16>
    %68 = vector.broadcast %3 : vector<1x256xbf16> to vector<32x256xbf16>
    %69 = arith.mulf %67, %68 : vector<32x256xbf16>
    %70 = vector.extract_strided_slice %62 {offsets = [0, 127], sizes = [32, 256], strides = [1, 1]} : vector<32x512xbf16> to vector<32x256xbf16>
    %71 = vector.broadcast %2 : vector<1x256xbf16> to vector<32x256xbf16>
    %72 = arith.mulf %70, %71 : vector<32x256xbf16>
    %73 = vector.extract_strided_slice %62 {offsets = [0, 128], sizes = [32, 256], strides = [1, 1]} : vector<32x512xbf16> to vector<32x256xbf16>
    %74 = vector.extract_strided_slice %62 {offsets = [0, 129], sizes = [32, 256], strides = [1, 1]} : vector<32x512xbf16> to vector<32x256xbf16>
    %75 = vector.broadcast %3 : vector<1x256xbf16> to vector<32x256xbf16>
    %76 = arith.mulf %74, %75 : vector<32x256xbf16>
    %77 = vector.extract_strided_slice %62 {offsets = [0, 143], sizes = [32, 256], strides = [1, 1]} : vector<32x512xbf16> to vector<32x256xbf16>
    %78 = vector.broadcast %2 : vector<1x256xbf16> to vector<32x256xbf16>
    %79 = arith.mulf %77, %78 : vector<32x256xbf16>
    %80 = vector.extract_strided_slice %62 {offsets = [0, 144], sizes = [32, 256], strides = [1, 1]} : vector<32x512xbf16> to vector<32x256xbf16>
    %81 = vector.extract_strided_slice %62 {offsets = [0, 145], sizes = [32, 256], strides = [1, 1]} : vector<32x512xbf16> to vector<32x256xbf16>
    %82 = vector.broadcast %3 : vector<1x256xbf16> to vector<32x256xbf16>
    %83 = arith.mulf %81, %82 : vector<32x256xbf16>
    %84 = tpu.concatenate %65, %66, %69, %72, %73, %76, %79, %80, %83 in 0 : vector<32x256xbf16>, vector<32x256xbf16>, vector<32x256xbf16>, vector<32x256xbf16>, vector<32x256xbf16>, vector<32x256xbf16>, vector<32x256xbf16>, vector<32x256xbf16>, vector<32x256xbf16> -> vector<288x256xbf16>
    %c0_34 = arith.constant 0 : index
    %c0_35 = arith.constant 0 : index
    %85 = vector.load %arg8[%c0_34, %c0_35] : memref<64x288xbf16, #tpu.memory_space<vmem>>, vector<64x288xbf16>
    %cst_36 = arith.constant dense<0.000000e+00> : vector<64x256xf32>
    %86 = tpu.matmul %85, %84, %cst_36 {dimension_numbers = #tpu.dot_dimension_numbers<[1], [0], [0], [1], [0, 0, 1, 1], [], []>} : vector<64x288xbf16>, vector<288x256xbf16>, vector<64x256xf32> -> vector<64x256xf32>
    %87 = vector.broadcast %59 : vector<64x1xf32> to vector<64x256xf32>
    %88 = arith.addf %86, %87 : vector<64x256xf32>
    %c0_37 = arith.constant 0 : index
    %c0_38 = arith.constant 0 : index
    %89 = vector.load %arg12[%c0_37, %c0_38] : memref<64x1xf32, #tpu.memory_space<vmem>>, vector<64x1xf32>
    %c0_39 = arith.constant 0 : index
    %c0_40 = arith.constant 0 : index
    %90 = vector.load %arg13[%c0_39, %c0_40] : memref<64x1xf32, #tpu.memory_space<vmem>>, vector<64x1xf32>
    %c0_41 = arith.constant 0 : index
    %c0_42 = arith.constant 0 : index
    %91 = vector.load %arg14[%c0_41, %c0_42] : memref<64x64xf32, #tpu.memory_space<vmem>>, vector<64x64xf32>
    %cst_43 = arith.constant dense<0.000000e+00> : vector<64xf32>
    %92 = vector.multi_reduction <add>, %88, %cst_43 [1] : vector<64x256xf32> to vector<64xf32>
    %93 = vector.shape_cast %92 : vector<64xf32> to vector<64x1xf32>
    %94 = arith.mulf %88, %88 : vector<64x256xf32>
    %cst_44 = arith.constant dense<0.000000e+00> : vector<64xf32>
    %95 = vector.multi_reduction <add>, %94, %cst_44 [1] : vector<64x256xf32> to vector<64xf32>
    %96 = vector.shape_cast %95 : vector<64xf32> to vector<64x1xf32>
    %97 = tpu.concatenate %93, %96 in 1 : vector<64x1xf32>, vector<64x1xf32> -> vector<64x2xf32>
    %cst_45 = arith.constant dense<0.000000e+00> : vector<64x2xf32>
    %98 = tpu.matmul %91, %97, %cst_45 {dimension_numbers = #tpu.dot_dimension_numbers<[1], [0], [0], [1], [0, 0, 1, 1], [], []>} : vector<64x64xf32>, vector<64x2xf32>, vector<64x2xf32> -> vector<64x2xf32>
    %99 = vector.extract_strided_slice %98 {offsets = [0, 0], sizes = [64, 1], strides = [1, 1]} : vector<64x2xf32> to vector<64x1xf32>
    %100 = vector.extract_strided_slice %98 {offsets = [0, 1], sizes = [64, 1], strides = [1, 1]} : vector<64x2xf32> to vector<64x1xf32>
    %101 = arith.mulf %99, %99 : vector<64x1xf32>
    %102 = arith.subf %100, %101 : vector<64x1xf32>
    %cst_46 = arith.constant 9.99999974E-6 : f32
    %103 = vector.broadcast %cst_46 : f32 to vector<64x1xf32>
    %104 = arith.addf %102, %103 : vector<64x1xf32>
    %105 = math.rsqrt %104 : vector<64x1xf32>
    %106 = arith.mulf %105, %89 : vector<64x1xf32>
    %107 = arith.mulf %99, %106 : vector<64x1xf32>
    %108 = arith.subf %90, %107 : vector<64x1xf32>
    %109 = vector.broadcast %106 : vector<64x1xf32> to vector<64x256xf32>
    %110 = arith.mulf %88, %109 : vector<64x256xf32>
    %111 = vector.broadcast %108 : vector<64x1xf32> to vector<64x256xf32>
    %112 = arith.addf %110, %111 : vector<64x256xf32>
    %113 = arith.negf %112 : vector<64x256xf32>
    %114 = math.exp %113 : vector<64x256xf32>
    %cst_47 = arith.constant 1.000000e+00 : f32
    %115 = vector.broadcast %cst_47 : f32 to vector<64x256xf32>
    %116 = arith.addf %115, %114 : vector<64x256xf32>
    %117 = arith.divf %115, %116 : vector<64x256xf32>
    %118 = arith.mulf %112, %117 : vector<64x256xf32>
    %c0_48 = arith.constant 0 : index
    %c0_49 = arith.constant 0 : index
    %119 = vector.load %arg16[%c0_48, %c0_49] : memref<64x1xf32, #tpu.memory_space<vmem>>, vector<64x1xf32>
    %120 = arith.truncf %118 : vector<64x256xf32> to vector<64x256xbf16>
    %cst_50 = arith.constant 0.000000e+00 : bf16
    %121 = vector.broadcast %cst_50 : bf16 to vector<64x128xbf16>
    %122 = tpu.concatenate %121, %120, %121 in 1 : vector<64x128xbf16>, vector<64x256xbf16>, vector<64x128xbf16> -> vector<64x512xbf16>
    %123 = vector.extract_strided_slice %122 {offsets = [0, 111], sizes = [64, 256], strides = [1, 1]} : vector<64x512xbf16> to vector<64x256xbf16>
    %124 = vector.broadcast %2 : vector<1x256xbf16> to vector<64x256xbf16>
    %125 = arith.mulf %123, %124 : vector<64x256xbf16>
    %126 = vector.extract_strided_slice %122 {offsets = [0, 112], sizes = [64, 256], strides = [1, 1]} : vector<64x512xbf16> to vector<64x256xbf16>
    %127 = vector.extract_strided_slice %122 {offsets = [0, 113], sizes = [64, 256], strides = [1, 1]} : vector<64x512xbf16> to vector<64x256xbf16>
    %128 = vector.broadcast %3 : vector<1x256xbf16> to vector<64x256xbf16>
    %129 = arith.mulf %127, %128 : vector<64x256xbf16>
    %130 = vector.extract_strided_slice %122 {offsets = [0, 127], sizes = [64, 256], strides = [1, 1]} : vector<64x512xbf16> to vector<64x256xbf16>
    %131 = vector.broadcast %2 : vector<1x256xbf16> to vector<64x256xbf16>
    %132 = arith.mulf %130, %131 : vector<64x256xbf16>
    %133 = vector.extract_strided_slice %122 {offsets = [0, 128], sizes = [64, 256], strides = [1, 1]} : vector<64x512xbf16> to vector<64x256xbf16>
    %134 = vector.extract_strided_slice %122 {offsets = [0, 129], sizes = [64, 256], strides = [1, 1]} : vector<64x512xbf16> to vector<64x256xbf16>
    %135 = vector.broadcast %3 : vector<1x256xbf16> to vector<64x256xbf16>
    %136 = arith.mulf %134, %135 : vector<64x256xbf16>
    %137 = vector.extract_strided_slice %122 {offsets = [0, 143], sizes = [64, 256], strides = [1, 1]} : vector<64x512xbf16> to vector<64x256xbf16>
    %138 = vector.broadcast %2 : vector<1x256xbf16> to vector<64x256xbf16>
    %139 = arith.mulf %137, %138 : vector<64x256xbf16>
    %140 = vector.extract_strided_slice %122 {offsets = [0, 144], sizes = [64, 256], strides = [1, 1]} : vector<64x512xbf16> to vector<64x256xbf16>
    %141 = vector.extract_strided_slice %122 {offsets = [0, 145], sizes = [64, 256], strides = [1, 1]} : vector<64x512xbf16> to vector<64x256xbf16>
    %142 = vector.broadcast %3 : vector<1x256xbf16> to vector<64x256xbf16>
    %143 = arith.mulf %141, %142 : vector<64x256xbf16>
    %144 = tpu.concatenate %125, %126, %129, %132, %133, %136, %139, %140, %143 in 0 : vector<64x256xbf16>, vector<64x256xbf16>, vector<64x256xbf16>, vector<64x256xbf16>, vector<64x256xbf16>, vector<64x256xbf16>, vector<64x256xbf16>, vector<64x256xbf16>, vector<64x256xbf16> -> vector<576x256xbf16>
    %c0_51 = arith.constant 0 : index
    %c0_52 = arith.constant 0 : index
    %145 = vector.load %arg15[%c0_51, %c0_52] : memref<64x576xbf16, #tpu.memory_space<vmem>>, vector<64x576xbf16>
    %cst_53 = arith.constant dense<0.000000e+00> : vector<64x256xf32>
    %146 = tpu.matmul %145, %144, %cst_53 {dimension_numbers = #tpu.dot_dimension_numbers<[1], [0], [0], [1], [0, 0, 1, 1], [], []>} : vector<64x576xbf16>, vector<576x256xbf16>, vector<64x256xf32> -> vector<64x256xf32>
    %147 = vector.broadcast %119 : vector<64x1xf32> to vector<64x256xf32>
    %148 = arith.addf %146, %147 : vector<64x256xf32>
    %c0_54 = arith.constant 0 : index
    %c0_55 = arith.constant 0 : index
    %c0_56 = arith.constant 0 : index
    %149 = vector.load %arg19[%c0_54, %c0_55, %c0_56] : memref<1x64x256xf32, #tpu.memory_space<vmem>>, vector<1x64x256xf32>
    %150 = vector.shape_cast %149 : vector<1x64x256xf32> to vector<64x256xf32>
    %151 = arith.addf %150, %148 : vector<64x256xf32>
    %c0_57 = arith.constant 0 : index
    %c0_58 = arith.constant 0 : index
    %c0_59 = arith.constant 0 : index
    %152 = vector.load %arg19[%c0_57, %c0_58, %c0_59] : memref<1x64x256xf32, #tpu.memory_space<vmem>>, vector<1x64x256xf32>
    %153 = vector.shape_cast %152 : vector<1x64x256xf32> to vector<64x256xf32>
    %154 = vector.shape_cast %151 : vector<64x256xf32> to vector<1x64x256xf32>
    tpu.vector_store %arg19[%c0_57, %c0_58, %c0_59], %154 {strides = array<i32>} : memref<1x64x256xf32, #tpu.memory_space<vmem>>, vector<1x64x256xf32>,
    return
  }
  func.func @transform_0(%arg0: i32) -> (i32, i32, i32) {
    %c0_i32 = arith.constant 0 : i32
    %c0_i32_0 = arith.constant 0 : i32
    %c0_i32_1 = arith.constant 0 : i32
    return %arg0, %c0_i32, %c0_i32_0 : i32, i32, i32
  }
  func.func @transform_1(%arg0: i32) -> (i32, i32) {
    %c0_i32 = arith.constant 0 : i32
    %c0_i32_0 = arith.constant 0 : i32
    %c0_i32_1 = arith.constant 0 : i32
    return %c0_i32, %c0_i32_0 : i32, i32
  }
  func.func @transform_2(%arg0: i32) -> (i32, i32) {
    %c0_i32 = arith.constant 0 : i32
    %c0_i32_0 = arith.constant 0 : i32
    %c0_i32_1 = arith.constant 0 : i32
    return %c0_i32, %c0_i32_0 : i32, i32
  }
  func.func @transform_3(%arg0: i32) -> (i32, i32) {
    %c0_i32 = arith.constant 0 : i32
    %c0_i32_0 = arith.constant 0 : i32
    %c0_i32_1 = arith.constant 0 : i32
    return %c0_i32, %c0_i32_0 : i32, i32
  }
  func.func @transform_4(%arg0: i32) -> (i32, i32) {
    %c0_i32 = arith.constant 0 : i32
    %c0_i32_0 = arith.constant 0 : i32
    %c0_i32_1 = arith.constant 0 : i32
    return %c0_i32, %c0_i32_0 : i32, i32
  }
  func.func @transform_5(%arg0: i32) -> (i32, i32) {
    %c0_i32 = arith.constant 0 : i32
    %c0_i32_0 = arith.constant 0 : i32
    %c0_i32_1 = arith.constant 0 : i32
    return %c0_i32, %c0_i32_0 : i32, i32
  }
  func.func @transform_6(%arg0: i32) -> (i32, i32) {
    %c0_i32 = arith.constant 0 : i32
    %c0_i32_0 = arith.constant 0 : i32
    %c0_i32_1 = arith.constant 0 : i32
    return %c0_i32, %c0_i32_0 : i32, i32
  }
  func.func @transform_7(%arg0: i32) -> (i32, i32) {
    %c0_i32 = arith.constant 0 : i32
    %c0_i32_0 = arith.constant 0 : i32
    %c0_i32_1 = arith.constant 0 : i32
    return %c0_i32, %c0_i32_0 : i32, i32
  }
  func.func @transform_8(%arg0: i32) -> (i32, i32) {
    %c0_i32 = arith.constant 0 : i32
    %c0_i32_0 = arith.constant 0 : i32
    %c0_i32_1 = arith.constant 0 : i32
    return %c0_i32, %c0_i32_0 : i32, i32
  }
  func.func @transform_9(%arg0: i32) -> (i32, i32) {
    %c0_i32 = arith.constant 0 : i32
    %c0_i32_0 = arith.constant 0 : i32
    %c0_i32_1 = arith.constant 0 : i32
    return %c0_i32, %c0_i32_0 : i32, i32
  }
  func.func @transform_10(%arg0: i32) -> (i32, i32) {
    %c0_i32 = arith.constant 0 : i32
    %c0_i32_0 = arith.constant 0 : i32
    %c0_i32_1 = arith.constant 0 : i32
    return %c0_i32, %c0_i32_0 : i32, i32
  }
  func.func @transform_11(%arg0: i32) -> (i32, i32) {
    %c0_i32 = arith.constant 0 : i32
    %c0_i32_0 = arith.constant 0 : i32
    %c0_i32_1 = arith.constant 0 : i32
    return %c0_i32, %c0_i32_0 : i32, i32
  }
  func.func @transform_12(%arg0: i32) -> (i32, i32) {
    %c0_i32 = arith.constant 0 : i32
    %c0_i32_0 = arith.constant 0 : i32
    %c0_i32_1 = arith.constant 0 : i32
    return %c0_i32, %c0_i32_0 : i32, i32
  }
  func.func @transform_13(%arg0: i32) -> (i32, i32) {
    %c0_i32 = arith.constant 0 : i32
    %c0_i32_0 = arith.constant 0 : i32
    %c0_i32_1 = arith.constant 0 : i32
    return %c0_i32, %c0_i32_0 : i32, i32
  }
  func.func @transform_14(%arg0: i32) -> (i32, i32) {
    %c0_i32 = arith.constant 0 : i32
    %c0_i32_0 = arith.constant 0 : i32
    %c0_i32_1 = arith.constant 0 : i32
    return %c0_i32, %c0_i32_0 : i32, i32
  }
  func.func @transform_15(%arg0: i32) -> (i32, i32) {
    %c0_i32 = arith.constant 0 : i32
    %c0_i32_0 = arith.constant 0 : i32
    %c0_i32_1 = arith.constant 0 : i32
    return %c0_i32, %c0_i32_0 : i32, i32
  }
  func.func @transform_16(%arg0: i32) -> (i32, i32) {
    %c0_i32 = arith.constant 0 : i32
    %c0_i32_0 = arith.constant 0 : i32
    %c0_i32_1 = arith.constant 0 : i32
    return %c0_i32, %c0_i32_0 : i32, i32
  }
  func.func @transform_17(%arg0: i32) -> (i32, i32) {
    %c0_i32 = arith.constant 0 : i32
    %c0_i32_0 = arith.constant 0 : i32
    %c0_i32_1 = arith.constant 0 : i32
    return %c0_i32, %c0_i32_0 : i32, i32
  }
  func.func @transform_18(%arg0: i32) -> (i32, i32, i32) {
    %c0_i32 = arith.constant 0 : i32
    %c0_i32_0 = arith.constant 0 : i32
    %c0_i32_1 = arith.constant 0 : i32
    return %arg0, %c0_i32, %c0_i32_0 : i32, i32, i32
  }
}

</mosaic_0001>

<llo_original>
// kernel: resblock_forward.1
$region0: #{resblock_forward.1}
  #allocation0 [shape = 'u32[]', space=smem, size = 0x4, offset = 0x4, fixed_abs, tag = 'smem constant byte address 0x4 - core index']
  #allocation1 [shape = 'u32[72,128]{1,0:T(1,128)}', space=vmem, size = 0x9000, scoped, tag = 'internal scratch']
  %s0 = inlined_call_operand.vmem [shape: f32[2,32,256], index: 0, kind: input, shape index: {}]
  %s1 = inlined_call_operand.vmem [shape: f32[2,128], index: 1, kind: input, shape index: {}]
  %s2 = inlined_call_operand.vmem [shape: bf16[1,256], index: 2, kind: input, shape index: {}]
  %s3 = inlined_call_operand.vmem [shape: bf16[1,256], index: 3, kind: input, shape index: {}]
  %s4 = inlined_call_operand.vmem [shape: f32[32,1], index: 4, kind: input, shape index: {}]
  %s5 = inlined_call_operand.vmem [shape: f32[32,1], index: 5, kind: input, shape index: {}]
  %s6 = inlined_call_operand.vmem [shape: f32[32,32], index: 6, kind: input, shape index: {}]
  %s7 = inlined_call_operand.vmem [shape: bf16[64,288], index: 7, kind: input, shape index: {}]
  %s8 = inlined_call_operand.vmem [shape: f32[64,1], index: 8, kind: input, shape index: {}]
  %s9 = inlined_call_operand.vmem [shape: f32[64,128], index: 9, kind: input, shape index: {}]
  %s10 = inlined_call_operand.vmem [shape: f32[64,1], index: 10, kind: input, shape index: {}]
  %s11 = inlined_call_operand.vmem [shape: f32[64,1], index: 11, kind: input, shape index: {}]
  %s12 = inlined_call_operand.vmem [shape: f32[64,1], index: 12, kind: input, shape index: {}]
  %s13 = inlined_call_operand.vmem [shape: f32[64,64], index: 13, kind: input, shape index: {}]
  %s14 = inlined_call_operand.vmem [shape: bf16[64,576], index: 14, kind: input, shape index: {}]
  %s15 = inlined_call_operand.vmem [shape: f32[64,1], index: 15, kind: input, shape index: {}]
  %s16 = inlined_call_operand.vmem [shape: bf16[64,32], index: 16, kind: input, shape index: {}]
  %s17 = inlined_call_operand.vmem [shape: f32[64,1], index: 17, kind: input, shape index: {}]
  %s18 = inlined_call_operand.vmem [shape: f32[2,64,256], index: 18, kind: output, shape index: {}]
  %s19 = sld [smem:[#allocation0]]
  $region105: #{resblock_forward.1} parent=0
    _
  %s21 = ssub.s32 1, %s19
  %s22 = scalar_select 0, %s21, %s19
  loop: start=0, step=1, limit=4
  $region2: #{resblock_forward.1} parent=0 // loop_pre_header
    _
  $region3: #{resblock_forward.1} parent=0 // loop_header
    %s24 = sphi 0, %s28
    %p25 = scmp.ge.s32.totalorder %s24, 4
    %s34 = sphi 0, %s36
    %s37 = sphi 0, %s34
    %s38 = sphi 0, %s37
    %s54 = sphi 0, %s38
    %s58 = sphi 0, %s58
    %s60 = sphi 0, %s58
    %s61 = sphi 0, %s60
    %s75 = sphi 0, %s61
    %s79 = sphi 0, %s79
    %s81 = sphi 0, %s79
    %s82 = sphi 0, %s81
    %s96 = sphi 0, %s82
    %s100 = sphi 0, %s100
    %s102 = sphi 0, %s100
    %s103 = sphi 0, %s102
    %s117 = sphi 0, %s103
    %s121 = sphi 0, %s121
    %s123 = sphi 0, %s121
    %s124 = sphi 0, %s123
    %s138 = sphi 0, %s124
    %s142 = sphi 0, %s142
    %s144 = sphi 0, %s142
    %s145 = sphi 0, %s144
    %s159 = sphi 0, %s145
    %s163 = sphi 0, %s163
    %s165 = sphi 0, %s163
    %s166 = sphi 0, %s165
    %s180 = sphi 0, %s166
    %s184 = sphi 0, %s184
    %s186 = sphi 0, %s184
    %s187 = sphi 0, %s186
    %s201 = sphi 0, %s187
    %s205 = sphi 0, %s205
    %s207 = sphi 0, %s205
    %s208 = sphi 0, %s207
    %s222 = sphi 0, %s208
    %s226 = sphi 0, %s226
    %s228 = sphi 0, %s226
    %s229 = sphi 0, %s228
    %s243 = sphi 0, %s229
    %s247 = sphi 0, %s247
    %s249 = sphi 0, %s247
    %s250 = sphi 0, %s249
    %s264 = sphi 0, %s250
    %s268 = sphi 0, %s268
    %s270 = sphi 0, %s268
    %s271 = sphi 0, %s270
    %s285 = sphi 0, %s271
    %s289 = sphi 0, %s289
    %s291 = sphi 0, %s289
    %s292 = sphi 0, %s291
    %s306 = sphi 0, %s292
    %s310 = sphi 0, %s310
    %s312 = sphi 0, %s310
    %s313 = sphi 0, %s312
    %s327 = sphi 0, %s313
    %s331 = sphi 0, %s331
    %s333 = sphi 0, %s331
    %s334 = sphi 0, %s333
    %s348 = sphi 0, %s334
    %s352 = sphi 0, %s352
    %s354 = sphi 0, %s352
    %s355 = sphi 0, %s354
    %s369 = sphi 0, %s355
    %s373 = sphi 0, %s373
    %s375 = sphi 0, %s373
    %s376 = sphi 0, %s375
    %s390 = sphi 0, %s376
    %s394 = sphi 0, %s394
    %s396 = sphi 0, %s394
    %s397 = sphi 0, %s396
    %s411 = sphi 0, %s397
    %s417 = sphi 0, %s419
    %s420 = sphi 0, %s417
    %s421 = sphi 0, %s420
    %s437 = sphi 0, %s421
  $region4: #{resblock_forward.1} parent=0 // loop_header_branch
    %27 = sbr.rel (%p25) target = $region8
  $region5: #{resblock_forward.1} parent=0 // loop_body
    %s29 = ssub.s32 %s24, 1
    %s30 = ssub.s32 %s24, 2
    %s31 = sadd.s32 %s24, 1
    %s32 = ssub.s32 %s24, %s31
    %p33 = scmp.eq.s32.totalorder %s32, 0
    %s35 = sadd.s32 %s34, 1
    %s36 = scalar_select %p33, %s34, %s35
    %p39 = pneg %p33
    %p40 = scmp.eq.s32.totalorder %s24, 1
    %p41 = por %p39, %p40
    %p42 = scmp.ne.s32.totalorder %s34, %s37
    %p43 = scmp.eq.s32.totalorder %s24, 0
    %p44 = por %p42, %p43
    %p45 = scmp.ne.s32.totalorder %s34, %s37
    %p46 = scmp.eq.s32.totalorder %s29, 1
    %p47 = por %p45, %p46
    %p48 = scmp.ne.s32.totalorder %s37, %s38
    %p49 = scmp.eq.s32.totalorder %s29, 0
    %p50 = por %p48, %p49
    %p51 = scmp.ne.s32.totalorder %s37, %s38
    %p52 = scmp.eq.s32.totalorder %s30, 1
    %p53 = por %p51, %p52
    %p55 = scmp.ne.s32.totalorder %s38, %s54
    %p56 = scmp.eq.s32.totalorder %s30, 0
    %p57 = por %p55, %p56
    %s59 = sadd.s32 %s58, 1
    %p62 = scmp.eq.s32.totalorder %s24, 1
    %p63 = scmp.ne.s32.totalorder %s58, %s60
    %p64 = scmp.eq.s32.totalorder %s24, 0
    %p65 = por %p63, %p64
    %p66 = scmp.ne.s32.totalorder %s58, %s60
    %p67 = scmp.eq.s32.totalorder %s29, 1
    %p68 = por %p66, %p67
    %p69 = scmp.ne.s32.totalorder %s60, %s61
    %p70 = scmp.eq.s32.totalorder %s29, 0
    %p71 = por %p69, %p70
    %p72 = scmp.ne.s32.totalorder %s60, %s61
    %p73 = scmp.eq.s32.totalorder %s30, 1
    %p74 = por %p72, %p73
    %p76 = scmp.ne.s32.totalorder %s61, %s75
    %p77 = scmp.eq.s32.totalorder %s30, 0
    %p78 = por %p76, %p77
    %s80 = sadd.s32 %s79, 1
    %p83 = scmp.eq.s32.totalorder %s24, 1
    %p84 = scmp.ne.s32.totalorder %s79, %s81
    %p85 = scmp.eq.s32.totalorder %s24, 0
    %p86 = por %p84, %p85
    %p87 = scmp.ne.s32.totalorder %s79, %s81
    %p88 = scmp.eq.s32.totalorder %s29, 1
    %p89 = por %p87, %p88
    %p90 = scmp.ne.s32.totalorder %s81, %s82
    %p91 = scmp.eq.s32.totalorder %s29, 0
    %p92 = por %p90, %p91
    %p93 = scmp.ne.s32.totalorder %s81, %s82
    %p94 = scmp.eq.s32.totalorder %s30, 1
    %p95 = por %p93, %p94
    %p97 = scmp.ne.s32.totalorder %s82, %s96
    %p98 = scmp.eq.s32.totalorder %s30, 0
    %p99 = por %p97, %p98
    %s101 = sadd.s32 %s100, 1
    %p104 = scmp.eq.s32.totalorder %s24, 1
    %p105 = scmp.ne.s32.totalorder %s100, %s102
    %p106 = scmp.eq.s32.totalorder %s24, 0
    %p107 = por %p105, %p106
    %p108 = scmp.ne.s32.totalorder %s100, %s102
    %p109 = scmp.eq.s32.totalorder %s29, 1
    %p110 = por %p108, %p109
    %p111 = scmp.ne.s32.totalorder %s102, %s103
    %p112 = scmp.eq.s32.totalorder %s29, 0
    %p113 = por %p111, %p112
    %p114 = scmp.ne.s32.totalorder %s102, %s103
    %p115 = scmp.eq.s32.totalorder %s30, 1
    %p116 = por %p114, %p115
    %p118 = scmp.ne.s32.totalorder %s103, %s117
    %p119 = scmp.eq.s32.totalorder %s30, 0
    %p120 = por %p118, %p119
    %s122 = sadd.s32 %s121, 1
    %p125 = scmp.eq.s32.totalorder %s24, 1
    %p126 = scmp.ne.s32.totalorder %s121, %s123
    %p127 = scmp.eq.s32.totalorder %s24, 0
    %p128 = por %p126, %p127
    %p129 = scmp.ne.s32.totalorder %s121, %s123
    %p130 = scmp.eq.s32.totalorder %s29, 1
    %p131 = por %p129, %p130
    %p132 = scmp.ne.s32.totalorder %s123, %s124
    %p133 = scmp.eq.s32.totalorder %s29, 0
    %p134 = por %p132, %p133
    %p135 = scmp.ne.s32.totalorder %s123, %s124
    %p136 = scmp.eq.s32.totalorder %s30, 1
    %p137 = por %p135, %p136
    %p139 = scmp.ne.s32.totalorder %s124, %s138
    %p140 = scmp.eq.s32.totalorder %s30, 0
    %p141 = por %p139, %p140
    %s143 = sadd.s32 %s142, 1
    %p146 = scmp.eq.s32.totalorder %s24, 1
    %p147 = scmp.ne.s32.totalorder %s142, %s144
    %p148 = scmp.eq.s32.totalorder %s24, 0
    %p149 = por %p147, %p148
    %p150 = scmp.ne.s32.totalorder %s142, %s144
    %p151 = scmp.eq.s32.totalorder %s29, 1
    %p152 = por %p150, %p151
    %p153 = scmp.ne.s32.totalorder %s144, %s145
    %p154 = scmp.eq.s32.totalorder %s29, 0
    %p155 = por %p153, %p154
    %p156 = scmp.ne.s32.totalorder %s144, %s145
    %p157 = scmp.eq.s32.totalorder %s30, 1
    %p158 = por %p156, %p157
    %p160 = scmp.ne.s32.totalorder %s145, %s159
    %p161 = scmp.eq.s32.totalorder %s30, 0
    %p162 = por %p160, %p161
    %s164 = sadd.s32 %s163, 1
    %p167 = scmp.eq.s32.totalorder %s24, 1
    %p168 = scmp.ne.s32.totalorder %s163, %s165
    %p169 = scmp.eq.s32.totalorder %s24, 0
    %p170 = por %p168, %p169
    %p171 = scmp.ne.s32.totalorder %s163, %s165
    %p172 = scmp.eq.s32.totalorder %s29, 1
    %p173 = por %p171, %p172
    %p174 = scmp.ne.s32.totalorder %s165, %s166
    %p175 = scmp.eq.s32.totalorder %s29, 0
    %p176 = por %p174, %p175
    %p177 = scmp.ne.s32.totalorder %s165, %s166
    %p178 = scmp.eq.s32.totalorder %s30, 1
    %p179 = por %p177, %p178
    %p181 = scmp.ne.s32.totalorder %s166, %s180
    %p182 = scmp.eq.s32.totalorder %s30, 0
    %p183 = por %p181, %p182
    %s185 = sadd.s32 %s184, 1
    %p188 = scmp.eq.s32.totalorder %s24, 1
    %p189 = scmp.ne.s32.totalorder %s184, %s186
    %p190 = scmp.eq.s32.totalorder %s24, 0
    %p191 = por %p189, %p190
    %p192 = scmp.ne.s32.totalorder %s184, %s186
    %p193 = scmp.eq.s32.totalorder %s29, 1
    %p194 = por %p192, %p193
    %p195 = scmp.ne.s32.totalorder %s186, %s187
    %p196 = scmp.eq.s32.totalorder %s29, 0
    %p197 = por %p195, %p196
    %p198 = scmp.ne.s32.totalorder %s186, %s187
    %p199 = scmp.eq.s32.totalorder %s30, 1
    %p200 = por %p198, %p199
    %p202 = scmp.ne.s32.totalorder %s187, %s201
    %p203 = scmp.eq.s32.totalorder %s30, 0
    %p204 = por %p202, %p203
    %s206 = sadd.s32 %s205, 1
    %p209 = scmp.eq.s32.totalorder %s24, 1
    %p210 = scmp.ne.s32.totalorder %s205, %s207
    %p211 = scmp.eq.s32.totalorder %s24, 0
    %p212 = por %p210, %p211
    %p213 = scmp.ne.s32.totalorder %s205, %s207
    %p214 = scmp.eq.s32.totalorder %s29, 1
    %p215 = por %p213, %p214
    %p216 = scmp.ne.s32.totalorder %s207, %s208
    %p217 = scmp.eq.s32.totalorder %s29, 0
    %p218 = por %p216, %p217
    %p219 = scmp.ne.s32.totalorder %s207, %s208
    %p220 = scmp.eq.s32.totalorder %s30, 1
    %p221 = por %p219, %p220
    %p223 = scmp.ne.s32.totalorder %s208, %s222
    %p224 = scmp.eq.s32.totalorder %s30, 0
    %p225 = por %p223, %p224
    %s227 = sadd.s32 %s226, 1
    %p230 = scmp.eq.s32.totalorder %s24, 1
    %p231 = scmp.ne.s32.totalorder %s226, %s228
    %p232 = scmp.eq.s32.totalorder %s24, 0
    %p233 = por %p231, %p232
    %p234 = scmp.ne.s32.totalorder %s226, %s228
    %p235 = scmp.eq.s32.totalorder %s29, 1
    %p236 = por %p234, %p235
    %p237 = scmp.ne.s32.totalorder %s228, %s229
    %p238 = scmp.eq.s32.totalorder %s29, 0
    %p239 = por %p237, %p238
    %p240 = scmp.ne.s32.totalorder %s228, %s229
    %p241 = scmp.eq.s32.totalorder %s30, 1
    %p242 = por %p240, %p241
    %p244 = scmp.ne.s32.totalorder %s229, %s243
    %p245 = scmp.eq.s32.totalorder %s30, 0
    %p246 = por %p244, %p245
    %s248 = sadd.s32 %s247, 1
    %p251 = scmp.eq.s32.totalorder %s24, 1
    %p252 = scmp.ne.s32.totalorder %s247, %s249
    %p253 = scmp.eq.s32.totalorder %s24, 0
    %p254 = por %p252, %p253
    %p255 = scmp.ne.s32.totalorder %s247, %s249
    %p256 = scmp.eq.s32.totalorder %s29, 1
    %p257 = por %p255, %p256
    %p258 = scmp.ne.s32.totalorder %s249, %s250
    %p259 = scmp.eq.s32.totalorder %s29, 0
    %p260 = por %p258, %p259
    %p261 = scmp.ne.s32.totalorder %s249, %s250
    %p262 = scmp.eq.s32.totalorder %s30, 1
    %p263 = por %p261, %p262
    %p265 = scmp.ne.s32.totalorder %s250, %s264
    %p266 = scmp.eq.s32.totalorder %s30, 0
    %p267 = por %p265, %p266
    %s269 = sadd.s32 %s268, 1
    %p272 = scmp.eq.s32.totalorder %s24, 1
    %p273 = scmp.ne.s32.totalorder %s268, %s270
    %p274 = scmp.eq.s32.totalorder %s24, 0
    %p275 = por %p273, %p274
    %p276 = scmp.ne.s32.totalorder %s268, %s270
    %p277 = scmp.eq.s32.totalorder %s29, 1
    %p278 = por %p276, %p277
    %p279 = scmp.ne.s32.totalorder %s270, %s271
    %p280 = scmp.eq.s32.totalorder %s29, 0
    %p281 = por %p279, %p280
    %p282 = scmp.ne.s32.totalorder %s270, %s271
    %p283 = scmp.eq.s32.totalorder %s30, 1
    %p284 = por %p282, %p283
    %p286 = scmp.ne.s32.totalorder %s271, %s285
    %p287 = scmp.eq.s32.totalorder %s30, 0
    %p288 = por %p286, %p287
    %s290 = sadd.s32 %s289, 1
    %p293 = scmp.eq.s32.totalorder %s24, 1
    %p294 = scmp.ne.s32.totalorder %s289, %s291
    %p295 = scmp.eq.s32.totalorder %s24, 0
    %p296 = por %p294, %p295
    %p297 = scmp.ne.s32.totalorder %s289, %s291
    %p298 = scmp.eq.s32.totalorder %s29, 1
    %p299 = por %p297, %p298
    %p300 = scmp.ne.s32.totalorder %s291, %s292
    %p301 = scmp.eq.s32.totalorder %s29, 0
    %p302 = por %p300, %p301
    %p303 = scmp.ne.s32.totalorder %s291, %s292
    %p304 = scmp.eq.s32.totalorder %s30, 1
    %p305 = por %p303, %p304
    %p307 = scmp.ne.s32.totalorder %s292, %s306
    %p308 = scmp.eq.s32.totalorder %s30, 0
    %p309 = por %p307, %p308
    %s311 = sadd.s32 %s310, 1
    %p314 = scmp.eq.s32.totalorder %s24, 1
    %p315 = scmp.ne.s32.totalorder %s310, %s312
    %p316 = scmp.eq.s32.totalorder %s24, 0
    %p317 = por %p315, %p316
    %p318 = scmp.ne.s32.totalorder %s310, %s312
    %p319 = scmp.eq.s32.totalorder %s29, 1
    %p320 = por %p318, %p319
    %p321 = scmp.ne.s32.totalorder %s312, %s313
    %p322 = scmp.eq.s32.totalorder %s29, 0
    %p323 = por %p321, %p322
    %p324 = scmp.ne.s32.totalorder %s312, %s313
    %p325 = scmp.eq.s32.totalorder %s30, 1
    %p326 = por %p324, %p325
    %p328 = scmp.ne.s32.totalorder %s313, %s327
    %p329 = scmp.eq.s32.totalorder %s30, 0
    %p330 = por %p328, %p329
    %s332 = sadd.s32 %s331, 1
    %p335 = scmp.eq.s32.totalorder %s24, 1
    %p336 = scmp.ne.s32.totalorder %s331, %s333
    %p337 = scmp.eq.s32.totalorder %s24, 0
    %p338 = por %p336, %p337
    %p339 = scmp.ne.s32.totalorder %s331, %s333
    %p340 = scmp.eq.s32.totalorder %s29, 1
    %p341 = por %p339, %p340
    %p342 = scmp.ne.s32.totalorder %s333, %s334
    %p343 = scmp.eq.s32.totalorder %s29, 0
    %p344 = por %p342, %p343
    %p345 = scmp.ne.s32.totalorder %s333, %s334
    %p346 = scmp.eq.s32.totalorder %s30, 1
    %p347 = por %p345, %p346
    %p349 = scmp.ne.s32.totalorder %s334, %s348
    %p350 = scmp.eq.s32.totalorder %s30, 0
    %p351 = por %p349, %p350
    %s353 = sadd.s32 %s352, 1
    %p356 = scmp.eq.s32.totalorder %s24, 1
    %p357 = scmp.ne.s32.totalorder %s352, %s354
    %p358 = scmp.eq.s32.totalorder %s24, 0
    %p359 = por %p357, %p358
    %p360 = scmp.ne.s32.totalorder %s352, %s354
    %p361 = scmp.eq.s32.totalorder %s29, 1
    %p362 = por %p360, %p361
    %p363 = scmp.ne.s32.totalorder %s354, %s355
    %p364 = scmp.eq.s32.totalorder %s29, 0
    %p365 = por %p363, %p364
    %p366 = scmp.ne.s32.totalorder %s354, %s355
    %p367 = scmp.eq.s32.totalorder %s30, 1
    %p368 = por %p366, %p367
    %p370 = scmp.ne.s32.totalorder %s355, %s369
    %p371 = scmp.eq.s32.totalorder %s30, 0
    %p372 = por %p370, %p371
    %s374 = sadd.s32 %s373, 1
    %p377 = scmp.eq.s32.totalorder %s24, 1
    %p378 = scmp.ne.s32.totalorder %s373, %s375
    %p379 = scmp.eq.s32.totalorder %s24, 0
    %p380 = por %p378, %p379
    %p381 = scmp.ne.s32.totalorder %s373, %s375
    %p382 = scmp.eq.s32.totalorder %s29, 1
    %p383 = por %p381, %p382
    %p384 = scmp.ne.s32.totalorder %s375, %s376
    %p385 = scmp.eq.s32.totalorder %s29, 0
    %p386 = por %p384, %p385
    %p387 = scmp.ne.s32.totalorder %s375, %s376
    %p388 = scmp.eq.s32.totalorder %s30, 1
    %p389 = por %p387, %p388
    %p391 = scmp.ne.s32.totalorder %s376, %s390
    %p392 = scmp.eq.s32.totalorder %s30, 0
    %p393 = por %p391, %p392
    %s395 = sadd.s32 %s394, 1
    %p398 = scmp.eq.s32.totalorder %s24, 1
    %p399 = scmp.ne.s32.totalorder %s394, %s396
    %p400 = scmp.eq.s32.totalorder %s24, 0
    %p401 = por %p399, %p400
    %p402 = scmp.ne.s32.totalorder %s394, %s396
    %p403 = scmp.eq.s32.totalorder %s29, 1
    %p404 = por %p402, %p403
    %p405 = scmp.ne.s32.totalorder %s396, %s397
    %p406 = scmp.eq.s32.totalorder %s29, 0
    %p407 = por %p405, %p406
    %p408 = scmp.ne.s32.totalorder %s396, %s397
    %p409 = scmp.eq.s32.totalorder %s30, 1
    %p410 = por %p408, %p409
    %p412 = scmp.ne.s32.totalorder %s397, %s411
    %p413 = scmp.eq.s32.totalorder %s30, 0
    %p414 = por %p412, %p413
    %s415 = ssub.s32 %s24, %s31
    %p416 = scmp.eq.s32.totalorder %s415, 0
    %s418 = sadd.s32 %s417, 1
    %s419 = scalar_select %p416, %s417, %s418
    %p422 = pneg %p416
    %p423 = scmp.eq.s32.totalorder %s24, 1
    %p424 = por %p422, %p423
    %p425 = scmp.ne.s32.totalorder %s417, %s420
    %p426 = scmp.eq.s32.totalorder %s24, 0
    %p427 = por %p425, %p426
    %p428 = scmp.ne.s32.totalorder %s417, %s420
    %p429 = scmp.eq.s32.totalorder %s29, 1
    %p430 = por %p428, %p429
    %p431 = scmp.ne.s32.totalorder %s420, %s421
    %p432 = scmp.eq.s32.totalorder %s29, 0
    %p433 = por %p431, %p432
    %p434 = scmp.ne.s32.totalorder %s420, %s421
    %p435 = scmp.eq.s32.totalorder %s30, 1
    %p436 = por %p434, %p435
    %p438 = scmp.ne.s32.totalorder %s421, %s437
    %p439 = scmp.eq.s32.totalorder %s30, 0
    %p440 = por %p438, %p439
    %p441 = scmp.le.s32.totalorder 1, %s24
    %p442 = scmp.lt.s32.totalorder %s24, 3
    %p443 = pnand %p441, %p442
    %p444 = pneg %p443
    // Predicated region
    $region9: #{resblock_forward.1} parent=5 // pred_check
      _
    $region10: #{resblock_forward.1} parent=5 // pred_check_branch
      %446 = sbr.rel (%p443) target = $region12
    $region11: #{resblock_forward.1} parent=5 // pred_region
      %s447 = ssub.s32 %s24, 1
      // Predicated region
      $region13: #{resblock_forward.1} parent=11 // pred_check
        %p448 = pneg %p71
      $region14: #{resblock_forward.1} parent=11 // pred_check_branch
        %450 = sbr.rel (%p448) target = $region16
      $region15: #{resblock_forward.1} parent=11 // pred_region
        _
      $region16: #{resblock_forward.1} parent=11 // pred_fallthru
        _
      // Predicated region
      $region17: #{resblock_forward.1} parent=11 // pred_check
        %p451 = pneg %p92
      $region18: #{resblock_forward.1} parent=11 // pred_check_branch
        %453 = sbr.rel (%p451) target = $region20
      $region19: #{resblock_forward.1} parent=11 // pred_region
        _
      $region20: #{resblock_forward.1} parent=11 // pred_fallthru
        _
      // Predicated region
      $region21: #{resblock_forward.1} parent=11 // pred_check
        %p454 = pneg %p113
      $region22: #{resblock_forward.1} parent=11 // pred_check_branch
        %456 = sbr.rel (%p454) target = $region24
      $region23: #{resblock_forward.1} parent=11 // pred_region
        _
      $region24: #{resblock_forward.1} parent=11 // pred_fallthru
        _
      // Predicated region
      $region25: #{resblock_forward.1} parent=11 // pred_check
        %p457 = pneg %p134
      $region26: #{resblock_forward.1} parent=11 // pred_check_branch
        %459 = sbr.rel (%p457) target = $region28
      $region27: #{resblock_forward.1} parent=11 // pred_region
        _
      $region28: #{resblock_forward.1} parent=11 // pred_fallthru
        _
      // Predicated region
      $region29: #{resblock_forward.1} parent=11 // pred_check
        %p460 = pneg %p155
      $region30: #{resblock_forward.1} parent=11 // pred_check_branch
        %462 = sbr.rel (%p460) target = $region32
      $region31: #{resblock_forward.1} parent=11 // pred_region
        _
      $region32: #{resblock_forward.1} parent=11 // pred_fallthru
        _
      // Predicated region
      $region33: #{resblock_forward.1} parent=11 // pred_check
        %p463 = pneg %p176
      $region34: #{resblock_forward.1} parent=11 // pred_check_branch
        %465 = sbr.rel (%p463) target = $region36
      $region35: #{resblock_forward.1} parent=11 // pred_region
        _
      $region36: #{resblock_forward.1} parent=11 // pred_fallthru
        _
      // Predicated region
      $region37: #{resblock_forward.1} parent=11 // pred_check
        %p466 = pneg %p197
      $region38: #{resblock_forward.1} parent=11 // pred_check_branch
        %468 = sbr.rel (%p466) target = $region40
      $region39: #{resblock_forward.1} parent=11 // pred_region
        _
      $region40: #{resblock_forward.1} parent=11 // pred_fallthru
        _
      // Predicated region
      $region41: #{resblock_forward.1} parent=11 // pred_check
        %p469 = pneg %p218
      $region42: #{resblock_forward.1} parent=11 // pred_check_branch
        %471 = sbr.rel (%p469) target = $region44
      $region43: #{resblock_forward.1} parent=11 // pred_region
        _
      $region44: #{resblock_forward.1} parent=11 // pred_fallthru
        _
      // Predicated region
      $region45: #{resblock_forward.1} parent=11 // pred_check
        %p472 = pneg %p239
      $region46: #{resblock_forward.1} parent=11 // pred_check_branch
        %474 = sbr.rel (%p472) target = $region48
      $region47: #{resblock_forward.1} parent=11 // pred_region
        _
      $region48: #{resblock_forward.1} parent=11 // pred_fallthru
        _
      // Predicated region
      $region49: #{resblock_forward.1} parent=11 // pred_check
        %p475 = pneg %p260
      $region50: #{resblock_forward.1} parent=11 // pred_check_branch
        %477 = sbr.rel (%p475) target = $region52
      $region51: #{resblock_forward.1} parent=11 // pred_region
        _
      $region52: #{resblock_forward.1} parent=11 // pred_fallthru
        _
      // Predicated region
      $region53: #{resblock_forward.1} parent=11 // pred_check
        %p478 = pneg %p281
      $region54: #{resblock_forward.1} parent=11 // pred_check_branch
        %480 = sbr.rel (%p478) target = $region56
      $region55: #{resblock_forward.1} parent=11 // pred_region
        _
      $region56: #{resblock_forward.1} parent=11 // pred_fallthru
        _
      // Predicated region
      $region57: #{resblock_forward.1} parent=11 // pred_check
        %p481 = pneg %p302
      $region58: #{resblock_forward.1} parent=11 // pred_check_branch
        %483 = sbr.rel (%p481) target = $region60
      $region59: #{resblock_forward.1} parent=11 // pred_region
        _
      $region60: #{resblock_forward.1} parent=11 // pred_fallthru
        _
      // Predicated region
      $region61: #{resblock_forward.1} parent=11 // pred_check
        %p484 = pneg %p323
      $region62: #{resblock_forward.1} parent=11 // pred_check_branch
        %486 = sbr.rel (%p484) target = $region64
      $region63: #{resblock_forward.1} parent=11 // pred_region
        _
      $region64: #{resblock_forward.1} parent=11 // pred_fallthru
        _
      // Predicated region
      $region65: #{resblock_forward.1} parent=11 // pred_check
        %p487 = pneg %p344
      $region66: #{resblock_forward.1} parent=11 // pred_check_branch
        %489 = sbr.rel (%p487) target = $region68
      $region67: #{resblock_forward.1} parent=11 // pred_region
        _
      $region68: #{resblock_forward.1} parent=11 // pred_fallthru
        _
      // Predicated region
      $region69: #{resblock_forward.1} parent=11 // pred_check
        %p490 = pneg %p365
      $region70: #{resblock_forward.1} parent=11 // pred_check_branch
        %492 = sbr.rel (%p490) target = $region72
      $region71: #{resblock_forward.1} parent=11 // pred_region
        _
      $region72: #{resblock_forward.1} parent=11 // pred_fallthru
        _
      // Predicated region
      $region73: #{resblock_forward.1} parent=11 // pred_check
        %p493 = pneg %p386
      $region74: #{resblock_forward.1} parent=11 // pred_check_branch
        %495 = sbr.rel (%p493) target = $region76
      $region75: #{resblock_forward.1} parent=11 // pred_region
        _
      $region76: #{resblock_forward.1} parent=11 // pred_fallthru
        _
      // Predicated region
      $region77: #{resblock_forward.1} parent=11 // pred_check
        %p496 = pneg %p407
      $region78: #{resblock_forward.1} parent=11 // pred_check_branch
        %498 = sbr.rel (%p496) target = $region80
      $region79: #{resblock_forward.1} parent=11 // pred_region
        _
      $region80: #{resblock_forward.1} parent=11 // pred_fallthru
        _
    $region12: #{resblock_forward.1} parent=5 // pred_fallthru
      _
    %p499 = scmp.lt.s32.totalorder %s24, 2
    // Predicated region
    $region81: #{resblock_forward.1} parent=5 // pred_check
      %p500 = pneg %p499
    $region82: #{resblock_forward.1} parent=5 // pred_check_branch
      %502 = sbr.rel (%p500) target = $region84
    $region83: #{resblock_forward.1} parent=5 // pred_region
      // Predicated region
      $region85: #{resblock_forward.1} parent=83 // pred_check
        %p503 = pneg %p44
      $region86: #{resblock_forward.1} parent=83 // pred_check_branch
        %505 = sbr.rel (%p503) target = $region88
      $region87: #{resblock_forward.1} parent=83 // pred_region
        %p506 = scmp.lt.s32.totalorder %s24, 1
        %s507 = scalar_select %p506, %s24, 1
        %s508 = smul.addr %s507, 8
        %s509 = smul.addr %s508, 8
        %s510 = scalar_lea.vmem %s0, %s509
      $region88: #{resblock_forward.1} parent=83 // pred_fallthru
        _
    $region84: #{resblock_forward.1} parent=5 // pred_fallthru
      _
    %p511 = scmp.le.s32.totalorder 1, %s24
    %p512 = scmp.lt.s32.totalorder %s24, 3
    %p513 = pnand %p511, %p512
    %p514 = pneg %p513
    // Predicated region
    $region89: #{resblock_forward.1} parent=5 // pred_check
      _
    $region90: #{resblock_forward.1} parent=5 // pred_check_branch
      %516 = sbr.rel (%p513) target = $region92
    $region91: #{resblock_forward.1} parent=5 // pred_region
      %s517 = ssub.s32 %s24, 1
      %p518 = scmp.lt.s32.totalorder %s29, 1
      %s519 = scalar_select %p518, %s29, 1
      %s520 = smul.addr %s519, 8
      %s521 = smul.addr %s520, 8
      %s522 = scalar_lea.vmem %s0, %s521
      %p523 = pneg %p50
      %p524 = pneg %p47
      %p525 = pneg %p71
      %p526 = pneg %p68
      %p527 = pneg %p92
      %p528 = pneg %p89
      %p529 = pneg %p113
      %p530 = pneg %p110
      %p531 = pneg %p134
      %p532 = pneg %p131
      %p533 = pneg %p155
      %p534 = pneg %p152
      %p535 = pneg %p176
      %p536 = pneg %p173
      %p537 = pneg %p197
      %p538 = pneg %p194
      %p539 = pneg %p218
      %p540 = pneg %p215
      %p541 = pneg %p239
      %p542 = pneg %p236
      %p543 = pneg %p260
      %p544 = pneg %p257
      %p545 = pneg %p281
      %p546 = pneg %p278
      %p547 = pneg %p302
      %p548 = pneg %p299
      %p549 = pneg %p323
      %p550 = pneg %p320
      %p551 = pneg %p344
      %p552 = pneg %p341
      %p553 = pneg %p365
      %p554 = pneg %p362
      %p555 = pneg %p386
      %p556 = pneg %p383
      %p557 = pneg %p407
      %p558 = pneg %p404
      %p559 = pneg %p433
      %p560 = pneg %p430
      %p561 = scmp.lt.s32.totalorder %s29, 1
      %s562 = scalar_select %p561, %s29, 1
      %s563 = smul.addr %s562, 16
      %s564 = smul.addr %s563, 8
      %s565 = scalar_lea.vmem %s18, %s564
      %p566 = scmp.lt.s32.totalorder %s29, 1
      %s567 = scalar_select %p566, %s29, 1
      %s568 = smul.addr %s567, 8
      %s569 = smul.addr %s568, 8
      %s570 = scalar_lea.vmem %s0, %s569
      %p571 = scmp.lt.s32.totalorder %s29, 1
      %s572 = scalar_select %p571, %s29, 1
      %s573 = smul.addr %s572, 16
      %s574 = smul.addr %s573, 8
      %s575 = scalar_lea.vmem %s18, %s574
      %v577 = vld [vmem:[%s570] sm:$0xff]
      %v578 = vld [vmem:[%s570 + $0x8] sm:$0xff]
      %v579 = vld [vmem:[%s570 + $0x10] sm:$0xff]
      %v580 = vld [vmem:[%s570 + $0x18] sm:$0xff]
      %v581 = vld [vmem:[%s570 + $0x20] sm:$0xff]
      %v582 = vld [vmem:[%s570 + $0x28] sm:$0xff]
      %v583 = vld [vmem:[%s570 + $0x30] sm:$0xff]
      %v584 = vld [vmem:[%s570 + $0x38] sm:$0xff]
      %v585 = vld [vmem:[%s2] sm:$0x3]
      %v586 = vld [vmem:[%s3] sm:$0x3]
      %v587 = vld [vmem:[%s16] sm:$0xf]
      %v588 = vld [vmem:[%s16 + $0x4] sm:$0xf]
      %v589 = vld [vmem:[%s16 + $0x8] sm:$0xf]
      %v590 = vld [vmem:[%s16 + $0xc] sm:$0xf]
      %v591 = vld [vmem:[%s16 + $0x10] sm:$0xf]
      %v592 = vld [vmem:[%s16 + $0x14] sm:$0xf]
      %v593 = vld [vmem:[%s16 + $0x18] sm:$0xf]
      %v594 = vld [vmem:[%s16 + $0x1c] sm:$0xf]
      %v595 = vpack.c.bf16 %v579, %v577
      %v596 = vpack.c.bf16 %v580, %v578
      %v597 = vpack.c.bf16 %v583, %v581
      %v598 = vpack.c.bf16 %v584, %v582
      %v599 = vld [vmem:[%s17] sm:$0xff]
      %v600 = vld [vmem:[%s17 + $0x8] sm:$0xff]
      %v601 = vld [vmem:[%s17 + $0x10] sm:$0xff]
      %v602 = vld [vmem:[%s17 + $0x18] sm:$0xff]
      %v603 = vld [vmem:[%s17 + $0x20] sm:$0xff]
      %v604 = vld [vmem:[%s17 + $0x28] sm:$0xff]
      %v605 = vld [vmem:[%s17 + $0x30] sm:$0xff]
      %v606 = vld [vmem:[%s17 + $0x38] sm:$0xff]
      %608 = vset.pattern.permute.xlu0 0
      %609 = vperm.xlu0 %608, %v599
      %v610 = vpop.permute.xlu0 %609
      %613 = vset.pattern.permute.xlu0 0
      %614 = vperm.xlu0 %613, %v600
      %v615 = vpop.permute.xlu0 %614
      %618 = vset.pattern.permute.xlu0 0
      %619 = vperm.xlu0 %618, %v601
      %v620 = vpop.permute.xlu0 %619
      %623 = vset.pattern.permute.xlu0 0
      %624 = vperm.xlu0 %623, %v602
      %v625 = vpop.permute.xlu0 %624
      %628 = vset.pattern.permute.xlu0 0
      %629 = vperm.xlu0 %628, %v603
      %v630 = vpop.permute.xlu0 %629
      %633 = vset.pattern.permute.xlu0 0
      %634 = vperm.xlu0 %633, %v604
      %v635 = vpop.permute.xlu0 %634
      %638 = vset.pattern.permute.xlu0 0
      %639 = vperm.xlu0 %638, %v605
      %v640 = vpop.permute.xlu0 %639
      %643 = vset.pattern.permute.xlu0 0
      %644 = vperm.xlu0 %643, %v606
      %v645 = vpop.permute.xlu0 %644
      %v655 = vunpack.c.l.b16 %v587
      %v656 = vunpack.c.l.b16 %v588
      %v657 = vunpack.c.l.b16 %v589
      %v658 = vunpack.c.l.b16 %v590
      %v659 = vunpack.c.l.b16 %v591
      %v660 = vunpack.c.l.b16 %v592
      %v661 = vunpack.c.l.b16 %v593
      %v662 = vunpack.c.l.b16 %v594
      %v663 = vpack.c.b16 %v656, %v655
      %v664 = vpack.c.b16 %v658, %v657
      %v665 = vpack.c.b16 %v660, %v659
      %v666 = vpack.c.b16 %v662, %v661
      %vm667 = vcmask 261120
      %v669 = vsel %vm667, %v663, 0
      %v672 = vsel %vm667, %v664, 0
      %v675 = vsel %vm667, %v665, 0
      %v678 = vsel %vm667, %v666, 0
      %680 = vmatpush.bf16.msra.mxu0 0
      %681 = vmatpush.bf16.msra.mxu0 0
      %682 = vmatpush.bf16.msra.mxu0 0
      %683 = vmatpush.bf16.msra.mxu0 0
      %684 = vmatpush.bf16.msra.mxu0 0
      %685 = vmatpush.bf16.msra.mxu0 0
      %686 = vmatpush.bf16.msra.mxu0 %v597
      %687 = vmatpush.bf16.msra.mxu0 %v595
      %688 = vmatmul.bf16.gmra.mxu0 %v669
      %v689 = vpop.f32.mrf.mxu0
      %v690 = vadd.f32 %v610, %v689
      %v691 = vpop.f32.mrf.mxu0
      %v692 = vadd.f32 %v615, %v691
      %693 = vmatmul.bf16.gmra.mxu0 %v672
      %v694 = vpop.f32.mrf.mxu0
      %v695 = vadd.f32 %v620, %v694
      %v696 = vpop.f32.mrf.mxu0
      %v697 = vadd.f32 %v625, %v696
      %698 = vmatmul.bf16.gmra.mxu0 %v675
      %v699 = vpop.f32.mrf.mxu0
      %v700 = vadd.f32 %v630, %v699
      %v701 = vpop.f32.mrf.mxu0
      %v702 = vadd.f32 %v635, %v701
      %703 = vmatmul.bf16.gmra.mxu0 %v678
      %v704 = vpop.f32.mrf.mxu0
      %v705 = vadd.f32 %v640, %v704
      %v706 = vpop.f32.mrf.mxu0
      %v707 = vadd.f32 %v645, %v706
      %708 = vdwg.mxu0
      %709 = vmatpush.bf16.msra.mxu0 0
      %710 = vmatpush.bf16.msra.mxu0 0
      %711 = vmatpush.bf16.msra.mxu0 0
      %712 = vmatpush.bf16.msra.mxu0 0
      %713 = vmatpush.bf16.msra.mxu0 0
      %714 = vmatpush.bf16.msra.mxu0 0
      %715 = vmatpush.bf16.msra.mxu0 %v598
      %716 = vmatpush.bf16.msra.mxu0 %v596
      %717 = vmatmul.bf16.gmra.mxu0 %v669
      %v718 = vpop.f32.mrf.mxu0
      %v719 = vadd.f32 %v610, %v718
      %v720 = vpop.f32.mrf.mxu0
      %v721 = vadd.f32 %v615, %v720
      %722 = vmatmul.bf16.gmra.mxu0 %v672
      %v723 = vpop.f32.mrf.mxu0
      %v724 = vadd.f32 %v620, %v723
      %v725 = vpop.f32.mrf.mxu0
      %v726 = vadd.f32 %v625, %v725
      %727 = vmatmul.bf16.gmra.mxu0 %v675
      %v728 = vpop.f32.mrf.mxu0
      %v729 = vadd.f32 %v630, %v728
      %v730 = vpop.f32.mrf.mxu0
      %v731 = vadd.f32 %v635, %v730
      %732 = vmatmul.bf16.gmra.mxu0 %v678
      %v733 = vpop.f32.mrf.mxu0
      %v734 = vadd.f32 %v640, %v733
      %v735 = vpop.f32.mrf.mxu0
      %v736 = vadd.f32 %v645, %v735
      %737 = vdwg.mxu0
      %738 = vst [vmem:[%s575] sm:$0xff] %v690
      %739 = vst [vmem:[%s575 + $0x8] sm:$0xff] %v719
      %740 = vst [vmem:[%s575 + $0x10] sm:$0xff] %v692
      %741 = vst [vmem:[%s575 + $0x18] sm:$0xff] %v721
      %742 = vst [vmem:[%s575 + $0x20] sm:$0xff] %v695
      %743 = vst [vmem:[%s575 + $0x28] sm:$0xff] %v724
      %744 = vst [vmem:[%s575 + $0x30] sm:$0xff] %v697
      %745 = vst [vmem:[%s575 + $0x38] sm:$0xff] %v726
      %746 = vst [vmem:[%s575 + $0x40] sm:$0xff] %v700
      %747 = vst [vmem:[%s575 + $0x48] sm:$0xff] %v729
      %748 = vst [vmem:[%s575 + $0x50] sm:$0xff] %v702
      %749 = vst [vmem:[%s575 + $0x58] sm:$0xff] %v731
      %750 = vst [vmem:[%s575 + $0x60] sm:$0xff] %v705
      %751 = vst [vmem:[%s575 + $0x68] sm:$0xff] %v734
      %752 = vst [vmem:[%s575 + $0x70] sm:$0xff] %v707
      %753 = vst [vmem:[%s575 + $0x78] sm:$0xff] %v736
      %s754 = scalar_lea.vmem %s1, %s29
      %v755 = vld [vmem:[%s754] sm:$0x1]
      %v756 = vxor.u32 %v755, 2147483648
      %v757 = vmul.f32 %v756, 1.442695
      %v758 = vpow.pop %v757
      %v759 = vadd.f32 %v758, 1.0
      %v760 = vrcp.pop %v759
      %v761 = vmul.f32 %v759, %v760
      %v762 = vsub.f32 1.0, %v761
      %v763 = vmul.f32 %v760, %v762
      %v764 = vadd.f32 %v760, %v763
      %vm765 = vweird.f32 %v759
      %vm766 = vweird.f32 %v760
      %vm767 = vmor %vm765, %vm766
      %v768 = vsel %vm767, %v760, %v764
      %v769 = vand.u32 2147483647, %v759
      %vm770 = vcmp.eq.f32.partialorder %v769, 8.507059e+37
      %v771 = vand.u32 %v759, 2147483648
      %v772 = vor.u32 1.1754944e-38, %v771
      %v773 = vsel %vm770, %v772, %v768
      %v774 = vmul.f32 1.0, %v773
      %v775 = vmul.f32 %v755, %v774
      %v776 = vld [vmem:[%s9] sm:$0xff]
      %v777 = vld [vmem:[%s9 + $0x8] sm:$0xff]
      %v778 = vld [vmem:[%s9 + $0x10] sm:$0xff]
      %v779 = vld [vmem:[%s9 + $0x18] sm:$0xff]
      %v780 = vld [vmem:[%s9 + $0x20] sm:$0xff]
      %v781 = vld [vmem:[%s9 + $0x28] sm:$0xff]
      %v782 = vld [vmem:[%s9 + $0x30] sm:$0xff]
      %v783 = vld [vmem:[%s9 + $0x38] sm:$0xff]
      %v784 = vperm.slane %v775, 0
      %v785 = vmul.f32 %v776, %v784
      %v786 = vmul.f32 %v777, %v784
      %v787 = vmul.f32 %v778, %v784
      %v788 = vmul.f32 %v779, %v784
      %v789 = vmul.f32 %v780, %v784
      %v790 = vmul.f32 %v781, %v784
      %v791 = vmul.f32 %v782, %v784
      %v792 = vmul.f32 %v783, %v784
      %793 = vadd.xlane.f32.xlu0 %v785
      %v794 = vpop.xlane.xlu0 %793
      %795 = vadd.xlane.f32.xlu0 %v786
      %v796 = vpop.xlane.xlu0 %795
      %797 = vadd.xlane.f32.xlu0 %v787
      %v798 = vpop.xlane.xlu0 %797
      %799 = vadd.xlane.f32.xlu0 %v788
      %v800 = vpop.xlane.xlu0 %799
      %801 = vadd.xlane.f32.xlu0 %v789
      %v802 = vpop.xlane.xlu0 %801
      %803 = vadd.xlane.f32.xlu0 %v790
      %v804 = vpop.xlane.xlu0 %803
      %805 = vadd.xlane.f32.xlu0 %v791
      %v806 = vpop.xlane.xlu0 %805
      %807 = vadd.xlane.f32.xlu0 %v792
      %v808 = vpop.xlane.xlu0 %807
      %v809 = vld [vmem:[%s10] sm:$0xff]
      %v810 = vld [vmem:[%s10 + $0x8] sm:$0xff]
      %v811 = vld [vmem:[%s10 + $0x10] sm:$0xff]
      %v812 = vld [vmem:[%s10 + $0x18] sm:$0xff]
      %v813 = vld [vmem:[%s10 + $0x20] sm:$0xff]
      %v814 = vld [vmem:[%s10 + $0x28] sm:$0xff]
      %v815 = vld [vmem:[%s10 + $0x30] sm:$0xff]
      %v816 = vld [vmem:[%s10 + $0x38] sm:$0xff]
      %v817 = vadd.f32 %v794, %v809
      %v818 = vadd.f32 %v796, %v810
      %v819 = vadd.f32 %v798, %v811
      %v820 = vadd.f32 %v800, %v812
      %v821 = vadd.f32 %v802, %v813
      %v822 = vadd.f32 %v804, %v814
      %v823 = vadd.f32 %v806, %v815
      %v824 = vadd.f32 %v808, %v816
      %v825 = vld [vmem:[%s4] sm:$0xff]
      %v826 = vld [vmem:[%s4 + $0x8] sm:$0xff]
      %v827 = vld [vmem:[%s4 + $0x10] sm:$0xff]
      %v828 = vld [vmem:[%s4 + $0x18] sm:$0xff]
      %v829 = vld [vmem:[%s5] sm:$0xff]
      %v830 = vld [vmem:[%s5 + $0x8] sm:$0xff]
      %v831 = vld [vmem:[%s5 + $0x10] sm:$0xff]
      %v832 = vld [vmem:[%s5 + $0x18] sm:$0xff]
      %v833 = vld [vmem:[%s6] sm:$0xff]
      %v834 = vld [vmem:[%s6 + $0x8] sm:$0xff]
      %v835 = vld [vmem:[%s6 + $0x10] sm:$0xff]
      %v836 = vld [vmem:[%s6 + $0x18] sm:$0xff]
      %v837 = vadd.f32 %v577, %v578
      %838 = vadd.xlane.f32.xlu0 %v837
      %v839 = vpop.xlane.xlu0 %838
      %v840 = vadd.f32 %v579, %v580
      %841 = vadd.xlane.f32.xlu0 %v840
      %v842 = vpop.xlane.xlu0 %841
      %v843 = vadd.f32 %v581, %v582
      %844 = vadd.xlane.f32.xlu0 %v843
      %v845 = vpop.xlane.xlu0 %844
      %v846 = vadd.f32 %v583, %v584
      %847 = vadd.xlane.f32.xlu0 %v846
      %v848 = vpop.xlane.xlu0 %847
      %v849 = vmul.f32 %v577, %v577
      %v850 = vmul.f32 %v578, %v578
      %v851 = vmul.f32 %v579, %v579
      %v852 = vmul.f32 %v580, %v580
      %v853 = vmul.f32 %v581, %v581
      %v854 = vmul.f32 %v582, %v582
      %v855 = vmul.f32 %v583, %v583
      %v856 = vmul.f32 %v584, %v584
      %v857 = vadd.f32 %v849, %v850
      %858 = vadd.xlane.f32.xlu0 %v857
      %v859 = vpop.xlane.xlu0 %858
      %v860 = vadd.f32 %v851, %v852
      %861 = vadd.xlane.f32.xlu0 %v860
      %v862 = vpop.xlane.xlu0 %861
      %v863 = vadd.f32 %v853, %v854
      %864 = vadd.xlane.f32.xlu0 %v863
      %v865 = vpop.xlane.xlu0 %864
      %v866 = vadd.f32 %v855, %v856
      %867 = vadd.xlane.f32.xlu0 %v866
      %v868 = vpop.xlane.xlu0 %867
      %vm869 = vcmask 7168
      %v870 = vsel %vm869, %v839, %v859
      %v871 = vsel %vm869, %v842, %v862
      %v872 = vsel %vm869, %v845, %v865
      %v873 = vsel %vm869, %v848, %v868
      %v875 = vsel %vm667, %v833, 0
      %v878 = vsel %vm667, %v834, 0
      %v881 = vsel %vm667, %v835, 0
      %v884 = vsel %vm667, %v836, 0
      %886 = vmatpush.msra.mxu0 0.0
      %887 = vmatpush.msra.mxu0 0.0
      %888 = vmatpush.msra.mxu0 0.0
      %889 = vmatpush.msra.mxu0 0.0
      %890 = vmatpush.msra.mxu0 0.0
      %891 = vmatpush.msra.mxu0 0.0
      %892 = vmatpush.msra.mxu0 0.0
      %893 = vmatpush.msra.mxu0 0.0
      %894 = vmatpush.msra.mxu0 0.0
      %895 = vmatpush.msra.mxu0 0.0
      %896 = vmatpush.msra.mxu0 0.0
      %897 = vmatpush.msra.mxu0 0.0
      %898 = vmatpush.msra.mxu0 %v873
      %899 = vmatpush.msra.mxu0 %v872
      %900 = vmatpush.msra.mxu0 %v871
      %901 = vmatpush.msra.mxu0 %v870
      %902 = vmatmul.f32.gmra.mxu0 %v875
      %v903 = vpop.f32.mrf.mxu0
      %v904 = vadd.f32 0.0, %v903
      %905 = vmatmul.f32.gmra.mxu0 %v878
      %v906 = vpop.f32.mrf.mxu0
      %v907 = vadd.f32 0.0, %v906
      %908 = vmatmul.f32.gmra.mxu0 %v881
      %v909 = vpop.f32.mrf.mxu0
      %v910 = vadd.f32 0.0, %v909
      %911 = vmatmul.f32.gmra.mxu0 %v884
      %v912 = vpop.f32.mrf.mxu0
      %v913 = vadd.f32 0.0, %v912
      %914 = vdwg.mxu0
      %v915 = vmul.f32 %v904, %v904
      %v916 = vmul.f32 %v907, %v907
      %v917 = vmul.f32 %v910, %v910
      %v918 = vmul.f32 %v913, %v913
      %923 = vrot.lane.b32.xlu0 %v915, 1
      %v924 = vpop.permute.xlu0 %923
      %925 = vrot.lane.b32.xlu0 %v916, 1
      %v926 = vpop.permute.xlu0 %925
      %927 = vrot.lane.b32.xlu0 %v917, 1
      %v928 = vpop.permute.xlu0 %927
      %929 = vrot.lane.b32.xlu0 %v918, 1
      %v930 = vpop.permute.xlu0 %929
      %v935 = vsub.f32 %v904, %v924
      %v936 = vsub.f32 %v907, %v926
      %v937 = vsub.f32 %v910, %v928
      %v938 = vsub.f32 %v913, %v930
      %v939 = vadd.f32 %v935, 1e-05
      %v940 = vadd.f32 %v936, 1e-05
      %v941 = vadd.f32 %v937, 1e-05
      %v942 = vadd.f32 %v938, 1e-05
      %v943 = vrsqrt.pop %v939
      %v944 = vmul.f32 %v943, %v939
      %v945 = vmul.f32 %v944, %v943
      %v946 = vmul.f32 0.5, %v945
      %v947 = vsub.f32 1.5, %v946
      %v948 = vmul.f32 %v943, %v947
      %vm949 = vweird.f32 %v939
      %vm950 = vweird.f32 %v943
      %vm951 = vmor %vm949, %vm950
      %v952 = vsel %vm951, %v943, %v948
      %v953 = vrsqrt.pop %v940
      %v954 = vmul.f32 %v953, %v940
      %v955 = vmul.f32 %v954, %v953
      %v956 = vmul.f32 0.5, %v955
      %v957 = vsub.f32 1.5, %v956
      %v958 = vmul.f32 %v953, %v957
      %vm959 = vweird.f32 %v940
      %vm960 = vweird.f32 %v953
      %vm961 = vmor %vm959, %vm960
      %v962 = vsel %vm961, %v953, %v958
      %v963 = vrsqrt.pop %v941
      %v964 = vmul.f32 %v963, %v941
      %v965 = vmul.f32 %v964, %v963
      %v966 = vmul.f32 0.5, %v965
      %v967 = vsub.f32 1.5, %v966
      %v968 = vmul.f32 %v963, %v967
      %vm969 = vweird.f32 %v941
      %vm970 = vweird.f32 %v963
      %vm971 = vmor %vm969, %vm970
      %v972 = vsel %vm971, %v963, %v968
      %v973 = vrsqrt.pop %v942
      %v974 = vmul.f32 %v973, %v942
      %v975 = vmul.f32 %v974, %v973
      %v976 = vmul.f32 0.5, %v975
      %v977 = vsub.f32 1.5, %v976
      %v978 = vmul.f32 %v973, %v977
      %vm979 = vweird.f32 %v942
      %vm980 = vweird.f32 %v973
      %vm981 = vmor %vm979, %vm980
      %v982 = vsel %vm981, %v973, %v978
      %987 = vrot.lane.b32.xlu0 %v825, 1
      %v988 = vpop.permute.xlu0 %987
      %989 = vrot.lane.b32.xlu0 %v826, 1
      %v990 = vpop.permute.xlu0 %989
      %991 = vrot.lane.b32.xlu0 %v827, 1
      %v992 = vpop.permute.xlu0 %991
      %993 = vrot.lane.b32.xlu0 %v828, 1
      %v994 = vpop.permute.xlu0 %993
      %v999 = vmul.f32 %v952, %v988
      %v1000 = vmul.f32 %v962, %v990
      %v1001 = vmul.f32 %v972, %v992
      %v1002 = vmul.f32 %v982, %v994
      %1007 = vrot.lane.b32.xlu0 %v999, 127
      %v1008 = vpop.permute.xlu0 %1007
      %1009 = vrot.lane.b32.xlu0 %v1000, 127
      %v1010 = vpop.permute.xlu0 %1009
      %1011 = vrot.lane.b32.xlu0 %v1001, 127
      %v1012 = vpop.permute.xlu0 %1011
      %1013 = vrot.lane.b32.xlu0 %v1002, 127
      %v1014 = vpop.permute.xlu0 %1013
      %v1019 = vmul.f32 %v904, %v1008
      %v1020 = vmul.f32 %v907, %v1010
      %v1021 = vmul.f32 %v910, %v1012
      %v1022 = vmul.f32 %v913, %v1014
      %v1023 = vsub.f32 %v829, %v1019
      %v1024 = vsub.f32 %v830, %v1020
      %v1025 = vsub.f32 %v831, %v1021
      %v1026 = vsub.f32 %v832, %v1022
      %1027 = vset.pattern.permute.xlu0 1
      %1028 = vperm.xlu0 %1027, %v999
      %v1029 = vpop.permute.xlu0 %1028
      %1031 = vset.pattern.permute.xlu0 1
      %1032 = vperm.xlu0 %1031, %v1000
      %v1033 = vpop.permute.xlu0 %1032
      %1035 = vset.pattern.permute.xlu0 1
      %1036 = vperm.xlu0 %1035, %v1001
      %v1037 = vpop.permute.xlu0 %1036
      %1039 = vset.pattern.permute.xlu0 1
      %1040 = vperm.xlu0 %1039, %v1002
      %v1041 = vpop.permute.xlu0 %1040
      %v1043 = vmul.f32 %v577, %v1029
      %v1044 = vmul.f32 %v578, %v1029
      %v1045 = vmul.f32 %v579, %v1033
      %v1046 = vmul.f32 %v580, %v1033
      %v1047 = vmul.f32 %v581, %v1037
      %v1048 = vmul.f32 %v582, %v1037
      %v1049 = vmul.f32 %v583, %v1041
      %v1050 = vmul.f32 %v584, %v1041
      %1052 = vset.pattern.permute.xlu0 0
      %1053 = vperm.xlu0 %1052, %v1023
      %v1054 = vpop.permute.xlu0 %1053
      %1057 = vset.pattern.permute.xlu0 0
      %1058 = vperm.xlu0 %1057, %v1024
      %v1059 = vpop.permute.xlu0 %1058
      %1062 = vset.pattern.permute.xlu0 0
      %1063 = vperm.xlu0 %1062, %v1025
      %v1064 = vpop.permute.xlu0 %1063
      %1067 = vset.pattern.permute.xlu0 0
      %1068 = vperm.xlu0 %1067, %v1026
      %v1069 = vpop.permute.xlu0 %1068
      %v1071 = vadd.f32 %v1043, %v1054
      %v1072 = vadd.f32 %v1044, %v1054
      %v1073 = vadd.f32 %v1045, %v1059
      %v1074 = vadd.f32 %v1046, %v1059
      %v1075 = vadd.f32 %v1047, %v1064
      %v1076 = vadd.f32 %v1048, %v1064
      %v1077 = vadd.f32 %v1049, %v1069
      %v1078 = vadd.f32 %v1050, %v1069
      %v1079 = vxor.u32 %v1071, 2147483648
      %v1080 = vxor.u32 %v1072, 2147483648
      %v1081 = vxor.u32 %v1073, 2147483648
      %v1082 = vxor.u32 %v1074, 2147483648
      %v1083 = vxor.u32 %v1075, 2147483648
      %v1084 = vxor.u32 %v1076, 2147483648
      %v1085 = vxor.u32 %v1077, 2147483648
      %v1086 = vxor.u32 %v1078, 2147483648
      %v1087 = vmul.f32 %v1079, 1.442695
      %v1088 = vpow.pop %v1087
      %v1089 = vmul.f32 %v1080, 1.442695
      %v1090 = vpow.pop %v1089
      %v1091 = vmul.f32 %v1081, 1.442695
      %v1092 = vpow.pop %v1091
      %v1093 = vmul.f32 %v1082, 1.442695
      %v1094 = vpow.pop %v1093
      %v1095 = vmul.f32 %v1083, 1.442695
      %v1096 = vpow.pop %v1095
      %v1097 = vmul.f32 %v1084, 1.442695
      %v1098 = vpow.pop %v1097
      %v1099 = vmul.f32 %v1085, 1.442695
      %v1100 = vpow.pop %v1099
      %v1101 = vmul.f32 %v1086, 1.442695
      %v1102 = vpow.pop %v1101
      %v1103 = vadd.f32 %v1088, 1.0
      %v1104 = vadd.f32 %v1090, 1.0
      %v1105 = vadd.f32 %v1092, 1.0
      %v1106 = vadd.f32 %v1094, 1.0
      %v1107 = vadd.f32 %v1096, 1.0
      %v1108 = vadd.f32 %v1098, 1.0
      %v1109 = vadd.f32 %v1100, 1.0
      %v1110 = vadd.f32 %v1102, 1.0
      %v1111 = vrcp.pop %v1103
      %v1112 = vmul.f32 %v1103, %v1111
      %v1113 = vsub.f32 1.0, %v1112
      %v1114 = vmul.f32 %v1111, %v1113
      %v1115 = vadd.f32 %v1111, %v1114
      %vm1116 = vweird.f32 %v1103
      %vm1117 = vweird.f32 %v1111
      %vm1118 = vmor %vm1116, %vm1117
      %v1119 = vsel %vm1118, %v1111, %v1115
      %v1120 = vand.u32 2147483647, %v1103
      %vm1121 = vcmp.eq.f32.partialorder %v1120, 8.507059e+37
      %v1122 = vand.u32 %v1103, 2147483648
      %v1123 = vor.u32 1.1754944e-38, %v1122
      %v1124 = vsel %vm1121, %v1123, %v1119
      %v1125 = vmul.f32 1.0, %v1124
      %v1126 = vrcp.pop %v1104
      %v1127 = vmul.f32 %v1104, %v1126
      %v1128 = vsub.f32 1.0, %v1127
      %v1129 = vmul.f32 %v1126, %v1128
      %v1130 = vadd.f32 %v1126, %v1129
      %vm1131 = vweird.f32 %v1104
      %vm1132 = vweird.f32 %v1126
      %vm1133 = vmor %vm1131, %vm1132
      %v1134 = vsel %vm1133, %v1126, %v1130
      %v1135 = vand.u32 2147483647, %v1104
      %vm1136 = vcmp.eq.f32.partialorder %v1135, 8.507059e+37
      %v1137 = vand.u32 %v1104, 2147483648
      %v1138 = vor.u32 1.1754944e-38, %v1137
      %v1139 = vsel %vm1136, %v1138, %v1134
      %v1140 = vmul.f32 1.0, %v1139
      %v1141 = vrcp.pop %v1105
      %v1142 = vmul.f32 %v1105, %v1141
      %v1143 = vsub.f32 1.0, %v1142
      %v1144 = vmul.f32 %v1141, %v1143
      %v1145 = vadd.f32 %v1141, %v1144
      %vm1146 = vweird.f32 %v1105
      %vm1147 = vweird.f32 %v1141
      %vm1148 = vmor %vm1146, %vm1147
      %v1149 = vsel %vm1148, %v1141, %v1145
      %v1150 = vand.u32 2147483647, %v1105
      %vm1151 = vcmp.eq.f32.partialorder %v1150, 8.507059e+37
      %v1152 = vand.u32 %v1105, 2147483648
      %v1153 = vor.u32 1.1754944e-38, %v1152
      %v1154 = vsel %vm1151, %v1153, %v1149
      %v1155 = vmul.f32 1.0, %v1154
      %v1156 = vrcp.pop %v1106
      %v1157 = vmul.f32 %v1106, %v1156
      %v1158 = vsub.f32 1.0, %v1157
      %v1159 = vmul.f32 %v1156, %v1158
      %v1160 = vadd.f32 %v1156, %v1159
      %vm1161 = vweird.f32 %v1106
      %vm1162 = vweird.f32 %v1156
      %vm1163 = vmor %vm1161, %vm1162
      %v1164 = vsel %vm1163, %v1156, %v1160
      %v1165 = vand.u32 2147483647, %v1106
      %vm1166 = vcmp.eq.f32.partialorder %v1165, 8.507059e+37
      %v1167 = vand.u32 %v1106, 2147483648
      %v1168 = vor.u32 1.1754944e-38, %v1167
      %v1169 = vsel %vm1166, %v1168, %v1164
      %v1170 = vmul.f32 1.0, %v1169
      %v1171 = vrcp.pop %v1107
      %v1172 = vmul.f32 %v1107, %v1171
      %v1173 = vsub.f32 1.0, %v1172
      %v1174 = vmul.f32 %v1171, %v1173
      %v1175 = vadd.f32 %v1171, %v1174
      %vm1176 = vweird.f32 %v1107
      %vm1177 = vweird.f32 %v1171
      %vm1178 = vmor %vm1176, %vm1177
      %v1179 = vsel %vm1178, %v1171, %v1175
      %v1180 = vand.u32 2147483647, %v1107
      %vm1181 = vcmp.eq.f32.partialorder %v1180, 8.507059e+37
      %v1182 = vand.u32 %v1107, 2147483648
      %v1183 = vor.u32 1.1754944e-38, %v1182
      %v1184 = vsel %vm1181, %v1183, %v1179
      %v1185 = vmul.f32 1.0, %v1184
      %v1186 = vrcp.pop %v1108
      %v1187 = vmul.f32 %v1108, %v1186
      %v1188 = vsub.f32 1.0, %v1187
      %v1189 = vmul.f32 %v1186, %v1188
      %v1190 = vadd.f32 %v1186, %v1189
      %vm1191 = vweird.f32 %v1108
      %vm1192 = vweird.f32 %v1186
      %vm1193 = vmor %vm1191, %vm1192
      %v1194 = vsel %vm1193, %v1186, %v1190
      %v1195 = vand.u32 2147483647, %v1108
      %vm1196 = vcmp.eq.f32.partialorder %v1195, 8.507059e+37
      %v1197 = vand.u32 %v1108, 2147483648
      %v1198 = vor.u32 1.1754944e-38, %v1197
      %v1199 = vsel %vm1196, %v1198, %v1194
      %v1200 = vmul.f32 1.0, %v1199
      %v1201 = vrcp.pop %v1109
      %v1202 = vmul.f32 %v1109, %v1201
      %v1203 = vsub.f32 1.0, %v1202
      %v1204 = vmul.f32 %v1201, %v1203
      %v1205 = vadd.f32 %v1201, %v1204
      %vm1206 = vweird.f32 %v1109
      %vm1207 = vweird.f32 %v1201
      %vm1208 = vmor %vm1206, %vm1207
      %v1209 = vsel %vm1208, %v1201, %v1205
      %v1210 = vand.u32 2147483647, %v1109
      %vm1211 = vcmp.eq.f32.partialorder %v1210, 8.507059e+37
      %v1212 = vand.u32 %v1109, 2147483648
      %v1213 = vor.u32 1.1754944e-38, %v1212
      %v1214 = vsel %vm1211, %v1213, %v1209
      %v1215 = vmul.f32 1.0, %v1214
      %v1216 = vrcp.pop %v1110
      %v1217 = vmul.f32 %v1110, %v1216
      %v1218 = vsub.f32 1.0, %v1217
      %v1219 = vmul.f32 %v1216, %v1218
      %v1220 = vadd.f32 %v1216, %v1219
      %vm1221 = vweird.f32 %v1110
      %vm1222 = vweird.f32 %v1216
      %vm1223 = vmor %vm1221, %vm1222
      %v1224 = vsel %vm1223, %v1216, %v1220
      %v1225 = vand.u32 2147483647, %v1110
      %vm1226 = vcmp.eq.f32.partialorder %v1225, 8.507059e+37
      %v1227 = vand.u32 %v1110, 2147483648
      %v1228 = vor.u32 1.1754944e-38, %v1227
      %v1229 = vsel %vm1226, %v1228, %v1224
      %v1230 = vmul.f32 1.0, %v1229
      %v1231 = vmul.f32 %v1071, %v1125
      %v1232 = vmul.f32 %v1072, %v1140
      %v1233 = vmul.f32 %v1073, %v1155
      %v1234 = vmul.f32 %v1074, %v1170
      %v1235 = vmul.f32 %v1075, %v1185
      %v1236 = vmul.f32 %v1076, %v1200
      %v1237 = vmul.f32 %v1077, %v1215
      %v1238 = vmul.f32 %v1078, %v1230
      %v1239 = vld [vmem:[%s8] sm:$0xff]
      %v1240 = vld [vmem:[%s8 + $0x8] sm:$0xff]
      %v1241 = vld [vmem:[%s8 + $0x10] sm:$0xff]
      %v1242 = vld [vmem:[%s8 + $0x18] sm:$0xff]
      %v1243 = vld [vmem:[%s8 + $0x20] sm:$0xff]
      %v1244 = vld [vmem:[%s8 + $0x28] sm:$0xff]
      %v1245 = vld [vmem:[%s8 + $0x30] sm:$0xff]
      %v1246 = vld [vmem:[%s8 + $0x38] sm:$0xff]
      %v1247 = vadd.f32 %v1239, %v817
      %v1248 = vadd.f32 %v1240, %v818
      %v1249 = vadd.f32 %v1241, %v819
      %v1250 = vadd.f32 %v1242, %v820
      %v1251 = vadd.f32 %v1243, %v821
      %v1252 = vadd.f32 %v1244, %v822
      %v1253 = vadd.f32 %v1245, %v823
      %v1254 = vadd.f32 %v1246, %v824
      %v1255 = vpack.c.bf16 %v1232, %v1231
      %v1256 = vpack.c.bf16 %v1234, %v1233
      %v1257 = vpack.c.bf16 %v1236, %v1235
      %v1258 = vpack.c.bf16 %v1238, %v1237
      %v1263 = vunpack.c.l.b16 %v1255
      %v1264 = vunpack.c.h.b16 %v1255
      %v1265 = vunpack.c.l.b16 %v1256
      %v1266 = vunpack.c.h.b16 %v1256
      %v1267 = vunpack.c.l.b16 %v1257
      %v1268 = vunpack.c.h.b16 %v1257
      %v1269 = vunpack.c.l.b16 %v1258
      %v1270 = vunpack.c.h.b16 %v1258
      %v1271 = vpack.c.b16 %v1265, %v1263
      %v1272 = vpack.c.b16 %v1266, %v1264
      %v1273 = vpack.c.b16 %v1269, %v1267
      %v1274 = vpack.c.b16 %v1270, %v1268
      %1280 = vst [vmem:[#allocation1] ss:$9 sm:$0xff] %v585
      %v1281 = vld [vmem:[#allocation1] sm:$0xff]
      %v1282 = vld [vmem:[#allocation1 + $0x9] sm:$0xff]
      %v1283 = vpack.i.b16 %v1281, %v1281
      %v1285 = vperm.slane %v1283, 0
      %v1286 = vpack.i.b16 %v1282, %v1282
      %v1288 = vperm.slane %v1286, 0
      %v1289 = vunpack.c.l.bf16 0
      %v1290 = vunpack.c.l.bf16 %v1271
      %v1291 = vunpack.c.l.bf16 %v1272
      %v1292 = vunpack.c.h.bf16 0
      %v1293 = vunpack.c.h.bf16 %v1271
      %v1294 = vunpack.c.h.bf16 %v1272
      %v1295 = vunpack.c.l.bf16 %v1273
      %v1296 = vunpack.c.l.bf16 %v1274
      %v1297 = vunpack.c.h.bf16 %v1273
      %v1298 = vunpack.c.h.bf16 %v1274
      %v1299 = vunpack.c.l.bf16 %v1285
      %v1300 = vunpack.c.l.bf16 %v1288
      %1303 = vrot.lane.b32.xlu0 %v1299, 111
      %v1304 = vpop.permute.xlu0 %1303
      %1305 = vrot.lane.b32.xlu0 %v1300, 111
      %v1306 = vpop.permute.xlu0 %1305
      %vm1307 = vcmask 908288
      %v1308 = vsel %vm1307, %v1304, %v1306
      %v1312 = vmul.f32 %v1289, %v1304
      %v1313 = vmul.f32 %v1290, %v1308
      %v1314 = vmul.f32 %v1291, %v1306
      %v1315 = vmul.f32 %v1292, %v1304
      %v1316 = vmul.f32 %v1293, %v1308
      %v1317 = vmul.f32 %v1294, %v1306
      %v1318 = vmul.f32 %v1295, %v1308
      %v1319 = vmul.f32 %v1296, %v1306
      %v1320 = vmul.f32 %v1297, %v1308
      %v1321 = vmul.f32 %v1298, %v1306
      %v1322 = vpack.c.bf16 %v1313, %v1312
      %v1323 = vpack.c.bf16 %v1314, %v1314
      %v1324 = vpack.c.bf16 %v1316, %v1315
      %v1325 = vpack.c.bf16 %v1317, %v1317
      %v1326 = vpack.c.bf16 %v1318, %v1312
      %v1327 = vpack.c.bf16 %v1319, %v1319
      %v1328 = vpack.c.bf16 %v1320, %v1315
      %v1329 = vpack.c.bf16 %v1321, %v1321
      %1331 = vst [vmem:[#allocation1] ss:$9 sm:$0xff] %v586
      %v1332 = vld [vmem:[#allocation1] sm:$0xff]
      %v1333 = vld [vmem:[#allocation1 + $0x9] sm:$0xff]
      %v1334 = vpack.i.b16 %v1332, %v1332
      %v1336 = vperm.slane %v1334, 0
      %v1337 = vpack.i.b16 %v1333, %v1333
      %v1339 = vperm.slane %v1337, 0
      %v1340 = vunpack.c.l.bf16 %v1336
      %v1341 = vunpack.c.l.bf16 %v1339
      %1344 = vrot.lane.b32.xlu0 %v1340, 113
      %v1345 = vpop.permute.xlu0 %1344
      %1346 = vrot.lane.b32.xlu0 %v1341, 113
      %v1347 = vpop.permute.xlu0 %1346
      %vm1348 = vcmask 924672
      %v1349 = vsel %vm1348, %v1345, %v1347
      %v1353 = vmul.f32 %v1289, %v1345
      %v1354 = vmul.f32 %v1290, %v1349
      %v1355 = vmul.f32 %v1291, %v1347
      %v1356 = vmul.f32 %v1292, %v1345
      %v1357 = vmul.f32 %v1293, %v1349
      %v1358 = vmul.f32 %v1294, %v1347
      %v1359 = vmul.f32 %v1295, %v1349
      %v1360 = vmul.f32 %v1296, %v1347
      %v1361 = vmul.f32 %v1297, %v1349
      %v1362 = vmul.f32 %v1298, %v1347
      %v1363 = vpack.c.bf16 %v1354, %v1353
      %v1364 = vpack.c.bf16 %v1355, %v1355
      %v1365 = vpack.c.bf16 %v1357, %v1356
      %v1366 = vpack.c.bf16 %v1358, %v1358
      %v1367 = vpack.c.bf16 %v1359, %v1353
      %v1368 = vpack.c.bf16 %v1360, %v1360
      %v1369 = vpack.c.bf16 %v1361, %v1356
      %v1370 = vpack.c.bf16 %v1362, %v1362
      %1371 = vrot.lane.b32.xlu0 %v1299, 127
      %v1372 = vpop.permute.xlu0 %1371
      %1373 = vrot.lane.b32.xlu0 %v1300, 127
      %v1374 = vpop.permute.xlu0 %1373
      %vm1375 = vcmask 1039360
      %v1376 = vsel %vm1375, %v1372, %v1374
      %v1380 = vmul.f32 %v1289, %v1372
      %v1381 = vmul.f32 %v1290, %v1376
      %v1382 = vmul.f32 %v1291, %v1374
      %v1383 = vmul.f32 %v1292, %v1372
      %v1384 = vmul.f32 %v1293, %v1376
      %v1385 = vmul.f32 %v1294, %v1374
      %v1386 = vmul.f32 %v1295, %v1376
      %v1387 = vmul.f32 %v1296, %v1374
      %v1388 = vmul.f32 %v1297, %v1376
      %v1389 = vmul.f32 %v1298, %v1374
      %v1390 = vpack.c.bf16 %v1381, %v1380
      %v1391 = vpack.c.bf16 %v1382, %v1382
      %v1392 = vpack.c.bf16 %v1384, %v1383
      %v1393 = vpack.c.bf16 %v1385, %v1385
      %v1394 = vpack.c.bf16 %v1386, %v1380
      %v1395 = vpack.c.bf16 %v1387, %v1387
      %v1396 = vpack.c.bf16 %v1388, %v1383
      %v1397 = vpack.c.bf16 %v1389, %v1389
      %1398 = vrot.lane.b32.xlu0 %v1340, 1
      %v1399 = vpop.permute.xlu0 %1398
      %1400 = vrot.lane.b32.xlu0 %v1341, 1
      %v1401 = vpop.permute.xlu0 %1400
      %v1402 = vsel %vm869, %v1399, %v1401
      %v1406 = vmul.f32 %v1290, %v1399
      %v1407 = vmul.f32 %v1291, %v1402
      %v1408 = vmul.f32 %v1289, %v1401
      %v1409 = vmul.f32 %v1293, %v1399
      %v1410 = vmul.f32 %v1294, %v1402
      %v1411 = vmul.f32 %v1292, %v1401
      %v1412 = vmul.f32 %v1295, %v1399
      %v1413 = vmul.f32 %v1296, %v1402
      %v1414 = vmul.f32 %v1297, %v1399
      %v1415 = vmul.f32 %v1298, %v1402
      %v1416 = vpack.c.bf16 %v1407, %v1406
      %v1417 = vpack.c.bf16 %v1408, %v1408
      %v1418 = vpack.c.bf16 %v1410, %v1409
      %v1419 = vpack.c.bf16 %v1411, %v1411
      %v1420 = vpack.c.bf16 %v1413, %v1412
      %v1421 = vpack.c.bf16 %v1415, %v1414
      %1422 = vrot.lane.b32.xlu0 %v1299, 15
      %v1423 = vpop.permute.xlu0 %1422
      %1424 = vrot.lane.b32.xlu0 %v1300, 15
      %v1425 = vpop.permute.xlu0 %1424
      %vm1426 = vcmask 121856
      %v1427 = vsel %vm1426, %v1423, %v1425
      %v1431 = vmul.f32 %v1290, %v1423
      %v1432 = vmul.f32 %v1291, %v1427
      %v1433 = vmul.f32 %v1289, %v1425
      %v1434 = vmul.f32 %v1293, %v1423
      %v1435 = vmul.f32 %v1294, %v1427
      %v1436 = vmul.f32 %v1292, %v1425
      %v1437 = vmul.f32 %v1295, %v1423
      %v1438 = vmul.f32 %v1296, %v1427
      %v1439 = vmul.f32 %v1297, %v1423
      %v1440 = vmul.f32 %v1298, %v1427
      %v1441 = vpack.c.bf16 %v1432, %v1431
      %v1442 = vpack.c.bf16 %v1433, %v1433
      %v1443 = vpack.c.bf16 %v1435, %v1434
      %v1444 = vpack.c.bf16 %v1436, %v1436
      %v1445 = vpack.c.bf16 %v1438, %v1437
      %v1446 = vpack.c.bf16 %v1440, %v1439
      %1447 = vrot.lane.b32.xlu0 %v1340, 17
      %v1448 = vpop.permute.xlu0 %1447
      %1449 = vrot.lane.b32.xlu0 %v1341, 17
      %v1450 = vpop.permute.xlu0 %1449
      %vm1451 = vcmask 138240
      %v1452 = vsel %vm1451, %v1448, %v1450
      %v1456 = vmul.f32 %v1290, %v1448
      %v1457 = vmul.f32 %v1291, %v1452
      %v1458 = vmul.f32 %v1289, %v1450
      %v1459 = vmul.f32 %v1293, %v1448
      %v1460 = vmul.f32 %v1294, %v1452
      %v1461 = vmul.f32 %v1292, %v1450
      %v1462 = vmul.f32 %v1295, %v1448
      %v1463 = vmul.f32 %v1296, %v1452
      %v1464 = vmul.f32 %v1297, %v1448
      %v1465 = vmul.f32 %v1298, %v1452
      %v1466 = vpack.c.bf16 %v1457, %v1456
      %v1467 = vpack.c.bf16 %v1458, %v1458
      %v1468 = vpack.c.bf16 %v1460, %v1459
      %v1469 = vpack.c.bf16 %v1461, %v1461
      %v1470 = vpack.c.bf16 %v1463, %v1462
      %v1471 = vpack.c.bf16 %v1465, %v1464
      %v1480 = vunpack.c.l.b16 %v1322
      %v1481 = vunpack.c.h.b16 %v1322
      %v1482 = vunpack.c.l.b16 %v1323
      %v1483 = vunpack.c.l.b16 %v1324
      %v1484 = vunpack.c.h.b16 %v1324
      %v1485 = vunpack.c.l.b16 %v1325
      %v1486 = vunpack.c.l.b16 %v1326
      %v1487 = vunpack.c.h.b16 %v1326
      %v1488 = vunpack.c.l.b16 %v1327
      %v1489 = vunpack.c.l.b16 %v1328
      %v1490 = vunpack.c.h.b16 %v1328
      %v1491 = vunpack.c.l.b16 %v1329
      %v1492 = vpack.c.b16 %v1483, %v1480
      %v1493 = vpack.c.b16 %v1484, %v1481
      %v1494 = vpack.c.b16 %v1485, %v1482
      %v1495 = vpack.c.b16 %v1489, %v1486
      %v1496 = vpack.c.b16 %v1490, %v1487
      %v1497 = vpack.c.b16 %v1491, %v1488
      %1499 = vrot.lane.b32.xlu0 0, 127
      %v1500 = vpop.permute.xlu0 %1499
      %1501 = vrot.lane.b32.xlu0 %v1271, 127
      %v1502 = vpop.permute.xlu0 %1501
      %1503 = vrot.lane.b32.xlu0 %v1272, 127
      %v1504 = vpop.permute.xlu0 %1503
      %1505 = vrot.lane.b32.xlu0 %v1273, 127
      %v1506 = vpop.permute.xlu0 %1505
      %1507 = vrot.lane.b32.xlu0 %v1274, 127
      %v1508 = vpop.permute.xlu0 %1507
      %vm1509 = vcmask 1039360
      %v1510 = vsel %vm1509, %v1500, %v1502
      %v1511 = vsel %vm1509, %v1502, %v1504
      %v1512 = vsel %vm1509, %v1500, %v1506
      %v1513 = vsel %vm1509, %v1506, %v1508
      %v1522 = vunpack.c.l.b16 %v1363
      %v1523 = vunpack.c.h.b16 %v1363
      %v1524 = vunpack.c.l.b16 %v1364
      %v1525 = vunpack.c.l.b16 %v1365
      %v1526 = vunpack.c.h.b16 %v1365
      %v1527 = vunpack.c.l.b16 %v1366
      %v1528 = vunpack.c.l.b16 %v1367
      %v1529 = vunpack.c.h.b16 %v1367
      %v1530 = vunpack.c.l.b16 %v1368
      %v1531 = vunpack.c.l.b16 %v1369
      %v1532 = vunpack.c.h.b16 %v1369
      %v1533 = vunpack.c.l.b16 %v1370
      %v1534 = vpack.c.b16 %v1525, %v1522
      %v1535 = vpack.c.b16 %v1526, %v1523
      %v1536 = vpack.c.b16 %v1527, %v1524
      %v1537 = vpack.c.b16 %v1531, %v1528
      %v1538 = vpack.c.b16 %v1532, %v1529
      %v1539 = vpack.c.b16 %v1533, %v1530
      %1540 = vrot.lane.b32.xlu0 %v1534, 126
      %v1541 = vpop.permute.xlu0 %1540
      %1542 = vrot.lane.b32.xlu0 %v1535, 126
      %v1543 = vpop.permute.xlu0 %1542
      %1544 = vrot.lane.b32.xlu0 %v1536, 126
      %v1545 = vpop.permute.xlu0 %1544
      %1546 = vrot.lane.b32.xlu0 %v1537, 126
      %v1547 = vpop.permute.xlu0 %1546
      %1548 = vrot.lane.b32.xlu0 %v1538, 126
      %v1549 = vpop.permute.xlu0 %1548
      %1550 = vrot.lane.b32.xlu0 %v1539, 126
      %v1551 = vpop.permute.xlu0 %1550
      %vm1552 = vcmask 1031168
      %v1553 = vsel %vm1552, %v1541, %v1543
      %v1554 = vsel %vm1552, %v1543, %v1545
      %v1555 = vsel %vm1552, %v1547, %v1549
      %v1556 = vsel %vm1552, %v1549, %v1551
      %v1565 = vunpack.c.l.b16 %v1390
      %v1566 = vunpack.c.h.b16 %v1390
      %v1567 = vunpack.c.l.b16 %v1391
      %v1568 = vunpack.c.l.b16 %v1392
      %v1569 = vunpack.c.h.b16 %v1392
      %v1570 = vunpack.c.l.b16 %v1393
      %v1571 = vunpack.c.l.b16 %v1394
      %v1572 = vunpack.c.h.b16 %v1394
      %v1573 = vunpack.c.l.b16 %v1395
      %v1574 = vunpack.c.l.b16 %v1396
      %v1575 = vunpack.c.h.b16 %v1396
      %v1576 = vunpack.c.l.b16 %v1397
      %v1577 = vpack.c.b16 %v1568, %v1565
      %v1578 = vpack.c.b16 %v1569, %v1566
      %v1579 = vpack.c.b16 %v1570, %v1567
      %v1580 = vpack.c.b16 %v1574, %v1571
      %v1581 = vpack.c.b16 %v1575, %v1572
      %v1582 = vpack.c.b16 %v1576, %v1573
      %1583 = vrot.lane.b32.xlu0 %v1577, 112
      %v1584 = vpop.permute.xlu0 %1583
      %1585 = vrot.lane.b32.xlu0 %v1578, 112
      %v1586 = vpop.permute.xlu0 %1585
      %1587 = vrot.lane.b32.xlu0 %v1579, 112
      %v1588 = vpop.permute.xlu0 %1587
      %1589 = vrot.lane.b32.xlu0 %v1580, 112
      %v1590 = vpop.permute.xlu0 %1589
      %1591 = vrot.lane.b32.xlu0 %v1581, 112
      %v1592 = vpop.permute.xlu0 %1591
      %1593 = vrot.lane.b32.xlu0 %v1582, 112
      %v1594 = vpop.permute.xlu0 %1593
      %vm1595 = vcmask 916480
      %v1596 = vsel %vm1595, %v1584, %v1586
      %v1597 = vsel %vm1595, %v1586, %v1588
      %v1598 = vsel %vm1595, %v1590, %v1592
      %v1599 = vsel %vm1595, %v1592, %v1594
      %1600 = vrot.lane.b32.xlu0 %v1271, 111
      %v1601 = vpop.permute.xlu0 %1600
      %1602 = vrot.lane.b32.xlu0 %v1272, 111
      %v1603 = vpop.permute.xlu0 %1602
      %1604 = vrot.lane.b32.xlu0 %v1273, 111
      %v1605 = vpop.permute.xlu0 %1604
      %1606 = vrot.lane.b32.xlu0 %v1274, 111
      %v1607 = vpop.permute.xlu0 %1606
      %vm1608 = vcmask 908288
      %v1609 = vsel %vm1608, %v1601, %v1603
      %v1610 = vsel %vm1608, %v1605, %v1607
      %v1617 = vunpack.c.l.b16 %v1416
      %v1618 = vunpack.c.h.b16 %v1416
      %v1619 = vunpack.c.l.b16 %v1417
      %v1620 = vunpack.c.l.b16 %v1418
      %v1621 = vunpack.c.h.b16 %v1418
      %v1622 = vunpack.c.l.b16 %v1419
      %v1623 = vunpack.c.l.b16 %v1420
      %v1624 = vunpack.c.h.b16 %v1420
      %v1625 = vunpack.c.l.b16 %v1421
      %v1626 = vunpack.c.h.b16 %v1421
      %v1627 = vpack.c.b16 %v1620, %v1617
      %v1628 = vpack.c.b16 %v1621, %v1618
      %v1629 = vpack.c.b16 %v1622, %v1619
      %v1630 = vpack.c.b16 %v1625, %v1623
      %v1631 = vpack.c.b16 %v1626, %v1624
      %1632 = vrot.lane.b32.xlu0 %v1627, 110
      %v1633 = vpop.permute.xlu0 %1632
      %1634 = vrot.lane.b32.xlu0 %v1628, 110
      %v1635 = vpop.permute.xlu0 %1634
      %1636 = vrot.lane.b32.xlu0 %v1629, 110
      %v1637 = vpop.permute.xlu0 %1636
      %1638 = vrot.lane.b32.xlu0 %v1630, 110
      %v1639 = vpop.permute.xlu0 %1638
      %1640 = vrot.lane.b32.xlu0 %v1631, 110
      %v1641 = vpop.permute.xlu0 %1640
      %vm1642 = vcmask 900096
      %v1643 = vsel %vm1642, %v1633, %v1635
      %v1644 = vsel %vm1642, %v1635, %v1637
      %v1645 = vsel %vm1642, %v1639, %v1641
      %v1646 = vsel %vm1642, %v1641, %v1637
      %v1653 = vunpack.c.l.b16 %v1441
      %v1654 = vunpack.c.h.b16 %v1441
      %v1655 = vunpack.c.l.b16 %v1442
      %v1656 = vunpack.c.l.b16 %v1443
      %v1657 = vunpack.c.h.b16 %v1443
      %v1658 = vunpack.c.l.b16 %v1444
      %v1659 = vunpack.c.l.b16 %v1445
      %v1660 = vunpack.c.h.b16 %v1445
      %v1661 = vunpack.c.l.b16 %v1446
      %v1662 = vunpack.c.h.b16 %v1446
      %v1663 = vpack.c.b16 %v1656, %v1653
      %v1664 = vpack.c.b16 %v1657, %v1654
      %v1665 = vpack.c.b16 %v1658, %v1655
      %v1666 = vpack.c.b16 %v1661, %v1659
      %v1667 = vpack.c.b16 %v1662, %v1660
      %1668 = vrot.lane.b32.xlu0 %v1663, 96
      %v1669 = vpop.permute.xlu0 %1668
      %1670 = vrot.lane.b32.xlu0 %v1664, 96
      %v1671 = vpop.permute.xlu0 %1670
      %1672 = vrot.lane.b32.xlu0 %v1665, 96
      %v1673 = vpop.permute.xlu0 %1672
      %1674 = vrot.lane.b32.xlu0 %v1666, 96
      %v1675 = vpop.permute.xlu0 %1674
      %1676 = vrot.lane.b32.xlu0 %v1667, 96
      %v1677 = vpop.permute.xlu0 %1676
      %vm1678 = vcmask 785408
      %v1679 = vsel %vm1678, %v1669, %v1671
      %v1680 = vsel %vm1678, %v1671, %v1673
      %v1681 = vsel %vm1678, %v1675, %v1677
      %v1682 = vsel %vm1678, %v1677, %v1673
      %1683 = vrot.lane.b32.xlu0 %v1271, 95
      %v1684 = vpop.permute.xlu0 %1683
      %1685 = vrot.lane.b32.xlu0 %v1272, 95
      %v1686 = vpop.permute.xlu0 %1685
      %1687 = vrot.lane.b32.xlu0 0, 95
      %v1688 = vpop.permute.xlu0 %1687
      %1689 = vrot.lane.b32.xlu0 %v1273, 95
      %v1690 = vpop.permute.xlu0 %1689
      %1691 = vrot.lane.b32.xlu0 %v1274, 95
      %v1692 = vpop.permute.xlu0 %1691
      %vm1693 = vcmask 777216
      %v1694 = vsel %vm1693, %v1684, %v1686
      %v1695 = vsel %vm1693, %v1686, %v1688
      %v1696 = vsel %vm1693, %v1690, %v1692
      %v1697 = vsel %vm1693, %v1692, %v1688
      %v1704 = vunpack.c.l.b16 %v1466
      %v1705 = vunpack.c.h.b16 %v1466
      %v1706 = vunpack.c.l.b16 %v1467
      %v1707 = vunpack.c.l.b16 %v1468
      %v1708 = vunpack.c.h.b16 %v1468
      %v1709 = vunpack.c.l.b16 %v1469
      %v1710 = vunpack.c.l.b16 %v1470
      %v1711 = vunpack.c.h.b16 %v1470
      %v1712 = vunpack.c.l.b16 %v1471
      %v1713 = vunpack.c.h.b16 %v1471
      %v1714 = vpack.c.b16 %v1707, %v1704
      %v1715 = vpack.c.b16 %v1708, %v1705
      %v1716 = vpack.c.b16 %v1709, %v1706
      %v1717 = vpack.c.b16 %v1712, %v1710
      %v1718 = vpack.c.b16 %v1713, %v1711
      %1719 = vrot.lane.b32.xlu0 %v1714, 94
      %v1720 = vpop.permute.xlu0 %1719
      %1721 = vrot.lane.b32.xlu0 %v1715, 94
      %v1722 = vpop.permute.xlu0 %1721
      %1723 = vrot.lane.b32.xlu0 %v1716, 94
      %v1724 = vpop.permute.xlu0 %1723
      %1725 = vrot.lane.b32.xlu0 %v1717, 94
      %v1726 = vpop.permute.xlu0 %1725
      %1727 = vrot.lane.b32.xlu0 %v1718, 94
      %v1728 = vpop.permute.xlu0 %1727
      %vm1729 = vcmask 769024
      %v1730 = vsel %vm1729, %v1720, %v1722
      %v1731 = vsel %vm1729, %v1722, %v1724
      %v1732 = vsel %vm1729, %v1726, %v1728
      %v1733 = vsel %vm1729, %v1728, %v1724
      %v1734 = vld [vmem:[%s7] sm:$0xff]
      %v1735 = vld [vmem:[%s7 + $0x8] sm:$0xf]
      %v1736 = vld [vmem:[%s7 + $0xc] sm:$0xff]
      %v1737 = vld [vmem:[%s7 + $0x14] sm:$0xf]
      %v1738 = vld [vmem:[%s7 + $0x18] sm:$0xff]
      %v1739 = vld [vmem:[%s7 + $0x20] sm:$0xf]
      %v1740 = vld [vmem:[%s7 + $0x24] sm:$0xff]
      %v1741 = vld [vmem:[%s7 + $0x2c] sm:$0xf]
      %v1742 = vld [vmem:[%s7 + $0x30] sm:$0xff]
      %v1743 = vld [vmem:[%s7 + $0x38] sm:$0xf]
      %v1744 = vld [vmem:[%s7 + $0x3c] sm:$0xff]
      %v1745 = vld [vmem:[%s7 + $0x44] sm:$0xf]
      %v1746 = vld [vmem:[%s7 + $0x48] sm:$0xff]
      %v1747 = vld [vmem:[%s7 + $0x50] sm:$0xf]
      %v1748 = vld [vmem:[%s7 + $0x54] sm:$0xff]
      %v1749 = vld [vmem:[%s7 + $0x5c] sm:$0xf]
      %1751 = vset.pattern.permute.xlu0 0
      %1752 = vperm.xlu0 %1751, %v1247
      %v1753 = vpop.permute.xlu0 %1752
      %1756 = vset.pattern.permute.xlu0 0
      %1757 = vperm.xlu0 %1756, %v1248
      %v1758 = vpop.permute.xlu0 %1757
      %1761 = vset.pattern.permute.xlu0 0
      %1762 = vperm.xlu0 %1761, %v1249
      %v1763 = vpop.permute.xlu0 %1762
      %1766 = vset.pattern.permute.xlu0 0
      %1767 = vperm.xlu0 %1766, %v1250
      %v1768 = vpop.permute.xlu0 %1767
      %1771 = vset.pattern.permute.xlu0 0
      %1772 = vperm.xlu0 %1771, %v1251
      %v1773 = vpop.permute.xlu0 %1772
      %1776 = vset.pattern.permute.xlu0 0
      %1777 = vperm.xlu0 %1776, %v1252
      %v1778 = vpop.permute.xlu0 %1777
      %1781 = vset.pattern.permute.xlu0 0
      %1782 = vperm.xlu0 %1781, %v1253
      %v1783 = vpop.permute.xlu0 %1782
      %1786 = vset.pattern.permute.xlu0 0
      %1787 = vperm.xlu0 %1786, %v1254
      %v1788 = vpop.permute.xlu0 %1787
      %v1806 = vunpack.c.l.b16 %v1734
      %v1807 = vunpack.c.h.b16 %v1734
      %v1808 = vunpack.c.l.b16 %v1735
      %v1809 = vunpack.c.l.b16 %v1736
      %v1810 = vunpack.c.h.b16 %v1736
      %v1811 = vunpack.c.l.b16 %v1737
      %v1812 = vunpack.c.l.b16 %v1738
      %v1813 = vunpack.c.h.b16 %v1738
      %v1814 = vunpack.c.l.b16 %v1739
      %v1815 = vunpack.c.l.b16 %v1740
      %v1816 = vunpack.c.h.b16 %v1740
      %v1817 = vunpack.c.l.b16 %v1741
      %v1818 = vunpack.c.l.b16 %v1742
      %v1819 = vunpack.c.h.b16 %v1742
      %v1820 = vunpack.c.l.b16 %v1743
      %v1821 = vunpack.c.l.b16 %v1744
      %v1822 = vunpack.c.h.b16 %v1744
      %v1823 = vunpack.c.l.b16 %v1745
      %v1824 = vunpack.c.l.b16 %v1746
      %v1825 = vunpack.c.h.b16 %v1746
      %v1826 = vunpack.c.l.b16 %v1747
      %v1827 = vunpack.c.l.b16 %v1748
      %v1828 = vunpack.c.h.b16 %v1748
      %v1829 = vunpack.c.l.b16 %v1749
      %v1830 = vpack.c.b16 %v1809, %v1806
      %v1831 = vpack.c.b16 %v1810, %v1807
      %v1832 = vpack.c.b16 %v1811, %v1808
      %v1833 = vpack.c.b16 %v1815, %v1812
      %v1834 = vpack.c.b16 %v1816, %v1813
      %v1835 = vpack.c.b16 %v1817, %v1814
      %v1836 = vpack.c.b16 %v1821, %v1818
      %v1837 = vpack.c.b16 %v1822, %v1819
      %v1838 = vpack.c.b16 %v1823, %v1820
      %v1839 = vpack.c.b16 %v1827, %v1824
      %v1840 = vpack.c.b16 %v1828, %v1825
      %v1841 = vpack.c.b16 %v1829, %v1826
      %1850 = vrot.lane.b32.xlu0 %v1492, 17
      %v1851 = vpop.permute.xlu0 %1850
      %1852 = vrot.lane.b32.xlu0 %v1493, 17
      %v1853 = vpop.permute.xlu0 %1852
      %1854 = vrot.lane.b32.xlu0 %v1494, 17
      %v1855 = vpop.permute.xlu0 %1854
      %1856 = vrot.lane.b32.xlu0 %v1495, 17
      %v1857 = vpop.permute.xlu0 %1856
      %1858 = vrot.lane.b32.xlu0 %v1496, 17
      %v1859 = vpop.permute.xlu0 %1858
      %1860 = vrot.lane.b32.xlu0 %v1497, 17
      %v1861 = vpop.permute.xlu0 %1860
      %1862 = vrot.lane.b32.xlu0 %v1510, 17
      %v1863 = vpop.permute.xlu0 %1862
      %1864 = vrot.lane.b32.xlu0 %v1511, 17
      %v1865 = vpop.permute.xlu0 %1864
      %1866 = vrot.lane.b32.xlu0 %v1504, 17
      %v1867 = vpop.permute.xlu0 %1866
      %1868 = vrot.lane.b32.xlu0 %v1512, 17
      %v1869 = vpop.permute.xlu0 %1868
      %1870 = vrot.lane.b32.xlu0 %v1513, 17
      %v1871 = vpop.permute.xlu0 %1870
      %1872 = vrot.lane.b32.xlu0 %v1508, 17
      %v1873 = vpop.permute.xlu0 %1872
      %1874 = vrot.lane.b32.xlu0 %v1553, 17
      %v1875 = vpop.permute.xlu0 %1874
      %1876 = vrot.lane.b32.xlu0 %v1554, 17
      %v1877 = vpop.permute.xlu0 %1876
      %1878 = vrot.lane.b32.xlu0 %v1545, 17
      %v1879 = vpop.permute.xlu0 %1878
      %1880 = vrot.lane.b32.xlu0 %v1555, 17
      %v1881 = vpop.permute.xlu0 %1880
      %1882 = vrot.lane.b32.xlu0 %v1556, 17
      %v1883 = vpop.permute.xlu0 %1882
      %1884 = vrot.lane.b32.xlu0 %v1551, 17
      %v1885 = vpop.permute.xlu0 %1884
      %1886 = vrot.lane.b32.xlu0 %v1596, 17
      %v1887 = vpop.permute.xlu0 %1886
      %1888 = vrot.lane.b32.xlu0 %v1597, 17
      %v1889 = vpop.permute.xlu0 %1888
      %1890 = vrot.lane.b32.xlu0 %v1588, 17
      %v1891 = vpop.permute.xlu0 %1890
      %1892 = vrot.lane.b32.xlu0 %v1598, 17
      %v1893 = vpop.permute.xlu0 %1892
      %1894 = vrot.lane.b32.xlu0 %v1599, 17
      %v1895 = vpop.permute.xlu0 %1894
      %1896 = vrot.lane.b32.xlu0 %v1594, 17
      %v1897 = vpop.permute.xlu0 %1896
      %1898 = vrot.lane.b32.xlu0 %v1601, 17
      %v1899 = vpop.permute.xlu0 %1898
      %1900 = vrot.lane.b32.xlu0 %v1609, 17
      %v1901 = vpop.permute.xlu0 %1900
      %1902 = vrot.lane.b32.xlu0 %v1603, 17
      %v1903 = vpop.permute.xlu0 %1902
      %1904 = vrot.lane.b32.xlu0 %v1605, 17
      %v1905 = vpop.permute.xlu0 %1904
      %1906 = vrot.lane.b32.xlu0 %v1610, 17
      %v1907 = vpop.permute.xlu0 %1906
      %1908 = vrot.lane.b32.xlu0 %v1607, 17
      %v1909 = vpop.permute.xlu0 %1908
      %1910 = vrot.lane.b32.xlu0 %v1633, 17
      %v1911 = vpop.permute.xlu0 %1910
      %1912 = vrot.lane.b32.xlu0 %v1643, 17
      %v1913 = vpop.permute.xlu0 %1912
      %1914 = vrot.lane.b32.xlu0 %v1644, 17
      %v1915 = vpop.permute.xlu0 %1914
      %1916 = vrot.lane.b32.xlu0 %v1639, 17
      %v1917 = vpop.permute.xlu0 %1916
      %1918 = vrot.lane.b32.xlu0 %v1645, 17
      %v1919 = vpop.permute.xlu0 %1918
      %1920 = vrot.lane.b32.xlu0 %v1646, 17
      %v1921 = vpop.permute.xlu0 %1920
      %1922 = vrot.lane.b32.xlu0 %v1669, 17
      %v1923 = vpop.permute.xlu0 %1922
      %1924 = vrot.lane.b32.xlu0 %v1679, 17
      %v1925 = vpop.permute.xlu0 %1924
      %1926 = vrot.lane.b32.xlu0 %v1680, 17
      %v1927 = vpop.permute.xlu0 %1926
      %1928 = vrot.lane.b32.xlu0 %v1675, 17
      %v1929 = vpop.permute.xlu0 %1928
      %1930 = vrot.lane.b32.xlu0 %v1681, 17
      %v1931 = vpop.permute.xlu0 %1930
      %1932 = vrot.lane.b32.xlu0 %v1682, 17
      %v1933 = vpop.permute.xlu0 %1932
      %1934 = vrot.lane.b32.xlu0 %v1684, 17
      %v1935 = vpop.permute.xlu0 %1934
      %1936 = vrot.lane.b32.xlu0 %v1694, 17
      %v1937 = vpop.permute.xlu0 %1936
      %1938 = vrot.lane.b32.xlu0 %v1695, 17
      %v1939 = vpop.permute.xlu0 %1938
      %1940 = vrot.lane.b32.xlu0 %v1690, 17
      %v1941 = vpop.permute.xlu0 %1940
      %1942 = vrot.lane.b32.xlu0 %v1696, 17
      %v1943 = vpop.permute.xlu0 %1942
      %1944 = vrot.lane.b32.xlu0 %v1697, 17
      %v1945 = vpop.permute.xlu0 %1944
      %1946 = vrot.lane.b32.xlu0 %v1720, 17
      %v1947 = vpop.permute.xlu0 %1946
      %1948 = vrot.lane.b32.xlu0 %v1730, 17
      %v1949 = vpop.permute.xlu0 %1948
      %1950 = vrot.lane.b32.xlu0 %v1731, 17
      %v1951 = vpop.permute.xlu0 %1950
      %1952 = vrot.lane.b32.xlu0 %v1726, 17
      %v1953 = vpop.permute.xlu0 %1952
      %1954 = vrot.lane.b32.xlu0 %v1732, 17
      %v1955 = vpop.permute.xlu0 %1954
      %1956 = vrot.lane.b32.xlu0 %v1733, 17
      %v1957 = vpop.permute.xlu0 %1956
      %vm1958 = vcmask 138240
      %v1959 = vsel %vm1958, %v1851, %v1853
      %v1960 = vsel %vm1958, %v1853, %v1855
      %v1961 = vsel %vm1958, %v1857, %v1859
      %v1962 = vsel %vm1958, %v1859, %v1861
      %v1963 = vsel %vm1958, %v1863, %v1865
      %v1964 = vsel %vm1958, %v1865, %v1867
      %v1965 = vsel %vm1958, %v1869, %v1871
      %v1966 = vsel %vm1958, %v1871, %v1873
      %v1967 = vsel %vm1958, %v1875, %v1877
      %v1968 = vsel %vm1958, %v1877, %v1879
      %v1969 = vsel %vm1958, %v1881, %v1883
      %v1970 = vsel %vm1958, %v1883, %v1885
      %v1971 = vsel %vm1958, %v1887, %v1889
      %v1972 = vsel %vm1958, %v1889, %v1891
      %v1973 = vsel %vm1958, %v1893, %v1895
      %v1974 = vsel %vm1958, %v1895, %v1897
      %v1975 = vsel %vm1958, %v1899, %v1901
      %v1976 = vsel %vm1958, %v1901, %v1903
      %v1977 = vsel %vm1958, %v1905, %v1907
      %v1978 = vsel %vm1958, %v1907, %v1909
      %v1979 = vsel %vm1958, %v1911, %v1913
      %v1980 = vsel %vm1958, %v1913, %v1915
      %v1981 = vsel %vm1958, %v1917, %v1919
      %v1982 = vsel %vm1958, %v1919, %v1921
      %v1983 = vsel %vm1958, %v1923, %v1925
      %v1984 = vsel %vm1958, %v1925, %v1927
      %v1985 = vsel %vm1958, %v1929, %v1931
      %v1986 = vsel %vm1958, %v1931, %v1933
      %v1987 = vsel %vm1958, %v1935, %v1937
      %v1988 = vsel %vm1958, %v1937, %v1939
      %v1989 = vsel %vm1958, %v1941, %v1943
      %v1990 = vsel %vm1958, %v1943, %v1945
      %v1991 = vsel %vm1958, %v1947, %v1949
      %v1992 = vsel %vm1958, %v1949, %v1951
      %v1993 = vsel %vm1958, %v1953, %v1955
      %v1994 = vsel %vm1958, %v1955, %v1957
      %v2032 = vsel %vm667, %v1832, 0
      %v2035 = vsel %vm667, %v1835, 0
      %v2038 = vsel %vm667, %v1838, 0
      %v2041 = vsel %vm667, %v1841, 0
      %2043 = vmatpush.bf16.msra.mxu0 %v1973
      %2044 = vmatpush.bf16.msra.mxu0 %v1971
      %2045 = vmatpush.bf16.msra.mxu0 %v1969
      %2046 = vmatpush.bf16.msra.mxu0 %v1967
      %2047 = vmatpush.bf16.msra.mxu0 %v1965
      %2048 = vmatpush.bf16.msra.mxu0 %v1963
      %2049 = vmatpush.bf16.msra.mxu0 %v1961
      %2050 = vmatpush.bf16.msra.mxu0 %v1959
      %2051 = vmatmul.bf16.gmra.mxu0 %v1830
      %v2052 = vpop.f32.mrf.mxu0
      %v2053 = vadd.f32 %v1753, %v2052
      %v2054 = vpop.f32.mrf.mxu0
      %v2055 = vadd.f32 %v1758, %v2054
      %2056 = vmatmul.bf16.gmra.mxu0 %v1833
      %v2057 = vpop.f32.mrf.mxu0
      %v2058 = vadd.f32 %v1763, %v2057
      %v2059 = vpop.f32.mrf.mxu0
      %v2060 = vadd.f32 %v1768, %v2059
      %2061 = vmatmul.bf16.gmra.mxu0 %v1836
      %v2062 = vpop.f32.mrf.mxu0
      %v2063 = vadd.f32 %v1773, %v2062
      %v2064 = vpop.f32.mrf.mxu0
      %v2065 = vadd.f32 %v1778, %v2064
      %2066 = vmatmul.bf16.gmra.mxu0 %v1839
      %v2067 = vpop.f32.mrf.mxu0
      %v2068 = vadd.f32 %v1783, %v2067
      %v2069 = vpop.f32.mrf.mxu0
      %v2070 = vadd.f32 %v1788, %v2069
      %2071 = vdwg.mxu0
      %2072 = vmatpush.bf16.msra.mxu0 %v1989
      %2073 = vmatpush.bf16.msra.mxu0 %v1987
      %2074 = vmatpush.bf16.msra.mxu0 %v1985
      %2075 = vmatpush.bf16.msra.mxu0 %v1983
      %2076 = vmatpush.bf16.msra.mxu0 %v1981
      %2077 = vmatpush.bf16.msra.mxu0 %v1979
      %2078 = vmatpush.bf16.msra.mxu0 %v1977
      %2079 = vmatpush.bf16.msra.mxu0 %v1975
      %2080 = vmatmul.bf16.gmra.mxu0 %v1831
      %v2081 = vpop.f32.mrf.mxu0
      %v2082 = vadd.f32 %v2053, %v2081
      %v2083 = vpop.f32.mrf.mxu0
      %v2084 = vadd.f32 %v2055, %v2083
      %2085 = vmatmul.bf16.gmra.mxu0 %v1834
      %v2086 = vpop.f32.mrf.mxu0
      %v2087 = vadd.f32 %v2058, %v2086
      %v2088 = vpop.f32.mrf.mxu0
      %v2089 = vadd.f32 %v2060, %v2088
      %2090 = vmatmul.bf16.gmra.mxu0 %v1837
      %v2091 = vpop.f32.mrf.mxu0
      %v2092 = vadd.f32 %v2063, %v2091
      %v2093 = vpop.f32.mrf.mxu0
      %v2094 = vadd.f32 %v2065, %v2093
      %2095 = vmatmul.bf16.gmra.mxu0 %v1840
      %v2096 = vpop.f32.mrf.mxu0
      %v2097 = vadd.f32 %v2068, %v2096
      %v2098 = vpop.f32.mrf.mxu0
      %v2099 = vadd.f32 %v2070, %v2098
      %2100 = vdwg.mxu0
      %2101 = vmatpush.bf16.msra.mxu0 0
      %2102 = vmatpush.bf16.msra.mxu0 0
      %2103 = vmatpush.bf16.msra.mxu0 0
      %2104 = vmatpush.bf16.msra.mxu0 0
      %2105 = vmatpush.bf16.msra.mxu0 0
      %2106 = vmatpush.bf16.msra.mxu0 0
      %2107 = vmatpush.bf16.msra.mxu0 %v1993
      %2108 = vmatpush.bf16.msra.mxu0 %v1991
      %2109 = vmatmul.bf16.gmra.mxu0 %v2032
      %v2110 = vpop.f32.mrf.mxu0
      %v2111 = vadd.f32 %v2082, %v2110
      %v2112 = vpop.f32.mrf.mxu0
      %v2113 = vadd.f32 %v2084, %v2112
      %2114 = vmatmul.bf16.gmra.mxu0 %v2035
      %v2115 = vpop.f32.mrf.mxu0
      %v2116 = vadd.f32 %v2087, %v2115
      %v2117 = vpop.f32.mrf.mxu0
      %v2118 = vadd.f32 %v2089, %v2117
      %2119 = vmatmul.bf16.gmra.mxu0 %v2038
      %v2120 = vpop.f32.mrf.mxu0
      %v2121 = vadd.f32 %v2092, %v2120
      %v2122 = vpop.f32.mrf.mxu0
      %v2123 = vadd.f32 %v2094, %v2122
      %2124 = vmatmul.bf16.gmra.mxu0 %v2041
      %v2125 = vpop.f32.mrf.mxu0
      %v2126 = vadd.f32 %v2097, %v2125
      %v2127 = vpop.f32.mrf.mxu0
      %v2128 = vadd.f32 %v2099, %v2127
      %2129 = vdwg.mxu0
      %2130 = vmatpush.bf16.msra.mxu0 %v1974
      %2131 = vmatpush.bf16.msra.mxu0 %v1972
      %2132 = vmatpush.bf16.msra.mxu0 %v1970
      %2133 = vmatpush.bf16.msra.mxu0 %v1968
      %2134 = vmatpush.bf16.msra.mxu0 %v1966
      %2135 = vmatpush.bf16.msra.mxu0 %v1964
      %2136 = vmatpush.bf16.msra.mxu0 %v1962
      %2137 = vmatpush.bf16.msra.mxu0 %v1960
      %2138 = vmatmul.bf16.gmra.mxu0 %v1830
      %v2139 = vpop.f32.mrf.mxu0
      %v2140 = vadd.f32 %v1753, %v2139
      %v2141 = vpop.f32.mrf.mxu0
      %v2142 = vadd.f32 %v1758, %v2141
      %2143 = vmatmul.bf16.gmra.mxu0 %v1833
      %v2144 = vpop.f32.mrf.mxu0
      %v2145 = vadd.f32 %v1763, %v2144
      %v2146 = vpop.f32.mrf.mxu0
      %v2147 = vadd.f32 %v1768, %v2146
      %2148 = vmatmul.bf16.gmra.mxu0 %v1836
      %v2149 = vpop.f32.mrf.mxu0
      %v2150 = vadd.f32 %v1773, %v2149
      %v2151 = vpop.f32.mrf.mxu0
      %v2152 = vadd.f32 %v1778, %v2151
      %2153 = vmatmul.bf16.gmra.mxu0 %v1839
      %v2154 = vpop.f32.mrf.mxu0
      %v2155 = vadd.f32 %v1783, %v2154
      %v2156 = vpop.f32.mrf.mxu0
      %v2157 = vadd.f32 %v1788, %v2156
      %2158 = vdwg.mxu0
      %2159 = vmatpush.bf16.msra.mxu0 %v1990
      %2160 = vmatpush.bf16.msra.mxu0 %v1988
      %2161 = vmatpush.bf16.msra.mxu0 %v1986
      %2162 = vmatpush.bf16.msra.mxu0 %v1984
      %2163 = vmatpush.bf16.msra.mxu0 %v1982
      %2164 = vmatpush.bf16.msra.mxu0 %v1980
      %2165 = vmatpush.bf16.msra.mxu0 %v1978
      %2166 = vmatpush.bf16.msra.mxu0 %v1976
      %2167 = vmatmul.bf16.gmra.mxu0 %v1831
      %v2168 = vpop.f32.mrf.mxu0
      %v2169 = vadd.f32 %v2140, %v2168
      %v2170 = vpop.f32.mrf.mxu0
      %v2171 = vadd.f32 %v2142, %v2170
      %2172 = vmatmul.bf16.gmra.mxu0 %v1834
      %v2173 = vpop.f32.mrf.mxu0
      %v2174 = vadd.f32 %v2145, %v2173
      %v2175 = vpop.f32.mrf.mxu0
      %v2176 = vadd.f32 %v2147, %v2175
      %2177 = vmatmul.bf16.gmra.mxu0 %v1837
      %v2178 = vpop.f32.mrf.mxu0
      %v2179 = vadd.f32 %v2150, %v2178
      %v2180 = vpop.f32.mrf.mxu0
      %v2181 = vadd.f32 %v2152, %v2180
      %2182 = vmatmul.bf16.gmra.mxu0 %v1840
      %v2183 = vpop.f32.mrf.mxu0
      %v2184 = vadd.f32 %v2155, %v2183
      %v2185 = vpop.f32.mrf.mxu0
      %v2186 = vadd.f32 %v2157, %v2185
      %2187 = vdwg.mxu0
      %2188 = vmatpush.bf16.msra.mxu0 0
      %2189 = vmatpush.bf16.msra.mxu0 0
      %2190 = vmatpush.bf16.msra.mxu0 0
      %2191 = vmatpush.bf16.msra.mxu0 0
      %2192 = vmatpush.bf16.msra.mxu0 0
      %2193 = vmatpush.bf16.msra.mxu0 0
      %2194 = vmatpush.bf16.msra.mxu0 %v1994
      %2195 = vmatpush.bf16.msra.mxu0 %v1992
      %2196 = vmatmul.bf16.gmra.mxu0 %v2032
      %v2197 = vpop.f32.mrf.mxu0
      %v2198 = vadd.f32 %v2169, %v2197
      %v2199 = vpop.f32.mrf.mxu0
      %v2200 = vadd.f32 %v2171, %v2199
      %2201 = vmatmul.bf16.gmra.mxu0 %v2035
      %v2202 = vpop.f32.mrf.mxu0
      %v2203 = vadd.f32 %v2174, %v2202
      %v2204 = vpop.f32.mrf.mxu0
      %v2205 = vadd.f32 %v2176, %v2204
      %2206 = vmatmul.bf16.gmra.mxu0 %v2038
      %v2207 = vpop.f32.mrf.mxu0
      %v2208 = vadd.f32 %v2179, %v2207
      %v2209 = vpop.f32.mrf.mxu0
      %v2210 = vadd.f32 %v2181, %v2209
      %2211 = vmatmul.bf16.gmra.mxu0 %v2041
      %v2212 = vpop.f32.mrf.mxu0
      %v2213 = vadd.f32 %v2184, %v2212
      %v2214 = vpop.f32.mrf.mxu0
      %v2215 = vadd.f32 %v2186, %v2214
      %2216 = vdwg.mxu0
      %v2217 = vld [vmem:[%s11] sm:$0xff]
      %v2218 = vld [vmem:[%s11 + $0x8] sm:$0xff]
      %v2219 = vld [vmem:[%s11 + $0x10] sm:$0xff]
      %v2220 = vld [vmem:[%s11 + $0x18] sm:$0xff]
      %v2221 = vld [vmem:[%s11 + $0x20] sm:$0xff]
      %v2222 = vld [vmem:[%s11 + $0x28] sm:$0xff]
      %v2223 = vld [vmem:[%s11 + $0x30] sm:$0xff]
      %v2224 = vld [vmem:[%s11 + $0x38] sm:$0xff]
      %v2225 = vld [vmem:[%s12] sm:$0xff]
      %v2226 = vld [vmem:[%s12 + $0x8] sm:$0xff]
      %v2227 = vld [vmem:[%s12 + $0x10] sm:$0xff]
      %v2228 = vld [vmem:[%s12 + $0x18] sm:$0xff]
      %v2229 = vld [vmem:[%s12 + $0x20] sm:$0xff]
      %v2230 = vld [vmem:[%s12 + $0x28] sm:$0xff]
      %v2231 = vld [vmem:[%s12 + $0x30] sm:$0xff]
      %v2232 = vld [vmem:[%s12 + $0x38] sm:$0xff]
      %v2233 = vld [vmem:[%s13] sm:$0xff]
      %v2234 = vld [vmem:[%s13 + $0x8] sm:$0xff]
      %v2235 = vld [vmem:[%s13 + $0x10] sm:$0xff]
      %v2236 = vld [vmem:[%s13 + $0x18] sm:$0xff]
      %v2237 = vld [vmem:[%s13 + $0x20] sm:$0xff]
      %v2238 = vld [vmem:[%s13 + $0x28] sm:$0xff]
      %v2239 = vld [vmem:[%s13 + $0x30] sm:$0xff]
      %v2240 = vld [vmem:[%s13 + $0x38] sm:$0xff]
      %v2241 = vadd.f32 %v2111, %v2198
      %2242 = vadd.xlane.f32.xlu0 %v2241
      %v2243 = vpop.xlane.xlu0 %2242
      %v2244 = vadd.f32 %v2113, %v2200
      %2245 = vadd.xlane.f32.xlu0 %v2244
      %v2246 = vpop.xlane.xlu0 %2245
      %v2247 = vadd.f32 %v2116, %v2203
      %2248 = vadd.xlane.f32.xlu0 %v2247
      %v2249 = vpop.xlane.xlu0 %2248
      %v2250 = vadd.f32 %v2118, %v2205
      %2251 = vadd.xlane.f32.xlu0 %v2250
      %v2252 = vpop.xlane.xlu0 %2251
      %v2253 = vadd.f32 %v2121, %v2208
      %2254 = vadd.xlane.f32.xlu0 %v2253
      %v2255 = vpop.xlane.xlu0 %2254
      %v2256 = vadd.f32 %v2123, %v2210
      %2257 = vadd.xlane.f32.xlu0 %v2256
      %v2258 = vpop.xlane.xlu0 %2257
      %v2259 = vadd.f32 %v2126, %v2213
      %2260 = vadd.xlane.f32.xlu0 %v2259
      %v2261 = vpop.xlane.xlu0 %2260
      %v2262 = vadd.f32 %v2128, %v2215
      %2263 = vadd.xlane.f32.xlu0 %v2262
      %v2264 = vpop.xlane.xlu0 %2263
      %v2265 = vmul.f32 %v2111, %v2111
      %v2266 = vmul.f32 %v2198, %v2198
      %v2267 = vmul.f32 %v2113, %v2113
      %v2268 = vmul.f32 %v2200, %v2200
      %v2269 = vmul.f32 %v2116, %v2116
      %v2270 = vmul.f32 %v2203, %v2203
      %v2271 = vmul.f32 %v2118, %v2118
      %v2272 = vmul.f32 %v2205, %v2205
      %v2273 = vmul.f32 %v2121, %v2121
      %v2274 = vmul.f32 %v2208, %v2208
      %v2275 = vmul.f32 %v2123, %v2123
      %v2276 = vmul.f32 %v2210, %v2210
      %v2277 = vmul.f32 %v2126, %v2126
      %v2278 = vmul.f32 %v2213, %v2213
      %v2279 = vmul.f32 %v2128, %v2128
      %v2280 = vmul.f32 %v2215, %v2215
      %v2281 = vadd.f32 %v2265, %v2266
      %2282 = vadd.xlane.f32.xlu0 %v2281
      %v2283 = vpop.xlane.xlu0 %2282
      %v2284 = vadd.f32 %v2267, %v2268
      %2285 = vadd.xlane.f32.xlu0 %v2284
      %v2286 = vpop.xlane.xlu0 %2285
      %v2287 = vadd.f32 %v2269, %v2270
      %2288 = vadd.xlane.f32.xlu0 %v2287
      %v2289 = vpop.xlane.xlu0 %2288
      %v2290 = vadd.f32 %v2271, %v2272
      %2291 = vadd.xlane.f32.xlu0 %v2290
      %v2292 = vpop.xlane.xlu0 %2291
      %v2293 = vadd.f32 %v2273, %v2274
      %2294 = vadd.xlane.f32.xlu0 %v2293
      %v2295 = vpop.xlane.xlu0 %2294
      %v2296 = vadd.f32 %v2275, %v2276
      %2297 = vadd.xlane.f32.xlu0 %v2296
      %v2298 = vpop.xlane.xlu0 %2297
      %v2299 = vadd.f32 %v2277, %v2278
      %2300 = vadd.xlane.f32.xlu0 %v2299
      %v2301 = vpop.xlane.xlu0 %2300
      %v2302 = vadd.f32 %v2279, %v2280
      %2303 = vadd.xlane.f32.xlu0 %v2302
      %v2304 = vpop.xlane.xlu0 %2303
      %v2305 = vsel %vm869, %v2243, %v2283
      %v2306 = vsel %vm869, %v2246, %v2286
      %v2307 = vsel %vm869, %v2249, %v2289
      %v2308 = vsel %vm869, %v2252, %v2292
      %v2309 = vsel %vm869, %v2255, %v2295
      %v2310 = vsel %vm869, %v2258, %v2298
      %v2311 = vsel %vm869, %v2261, %v2301
      %v2312 = vsel %vm869, %v2264, %v2304
      %vm2313 = vcmask 523264
      %v2315 = vsel %vm2313, %v2233, 0
      %v2318 = vsel %vm2313, %v2234, 0
      %v2321 = vsel %vm2313, %v2235, 0
      %v2324 = vsel %vm2313, %v2236, 0
      %v2327 = vsel %vm2313, %v2237, 0
      %v2330 = vsel %vm2313, %v2238, 0
      %v2333 = vsel %vm2313, %v2239, 0
      %v2336 = vsel %vm2313, %v2240, 0
      %2338 = vmatpush.msra.mxu0 0.0
      %2339 = vmatpush.msra.mxu0 0.0
      %2340 = vmatpush.msra.mxu0 0.0
      %2341 = vmatpush.msra.mxu0 0.0
      %2342 = vmatpush.msra.mxu0 0.0
      %2343 = vmatpush.msra.mxu0 0.0
      %2344 = vmatpush.msra.mxu0 0.0
      %2345 = vmatpush.msra.mxu0 0.0
      %2346 = vmatpush.msra.mxu0 %v2312
      %2347 = vmatpush.msra.mxu0 %v2311
      %2348 = vmatpush.msra.mxu0 %v2310
      %2349 = vmatpush.msra.mxu0 %v2309
      %2350 = vmatpush.msra.mxu0 %v2308
      %2351 = vmatpush.msra.mxu0 %v2307
      %2352 = vmatpush.msra.mxu0 %v2306
      %2353 = vmatpush.msra.mxu0 %v2305
      %2354 = vmatmul.f32.gmra.mxu0 %v2315
      %v2355 = vpop.f32.mrf.mxu0
      %v2356 = vadd.f32 0.0, %v2355
      %2357 = vmatmul.f32.gmra.mxu0 %v2318
      %v2358 = vpop.f32.mrf.mxu0
      %v2359 = vadd.f32 0.0, %v2358
      %2360 = vmatmul.f32.gmra.mxu0 %v2321
      %v2361 = vpop.f32.mrf.mxu0
      %v2362 = vadd.f32 0.0, %v2361
      %2363 = vmatmul.f32.gmra.mxu0 %v2324
      %v2364 = vpop.f32.mrf.mxu0
      %v2365 = vadd.f32 0.0, %v2364
      %2366 = vmatmul.f32.gmra.mxu0 %v2327
      %v2367 = vpop.f32.mrf.mxu0
      %v2368 = vadd.f32 0.0, %v2367
      %2369 = vmatmul.f32.gmra.mxu0 %v2330
      %v2370 = vpop.f32.mrf.mxu0
      %v2371 = vadd.f32 0.0, %v2370
      %2372 = vmatmul.f32.gmra.mxu0 %v2333
      %v2373 = vpop.f32.mrf.mxu0
      %v2374 = vadd.f32 0.0, %v2373
      %2375 = vmatmul.f32.gmra.mxu0 %v2336
      %v2376 = vpop.f32.mrf.mxu0
      %v2377 = vadd.f32 0.0, %v2376
      %2378 = vdwg.mxu0
      %v2379 = vmul.f32 %v2356, %v2356
      %v2380 = vmul.f32 %v2359, %v2359
      %v2381 = vmul.f32 %v2362, %v2362
      %v2382 = vmul.f32 %v2365, %v2365
      %v2383 = vmul.f32 %v2368, %v2368
      %v2384 = vmul.f32 %v2371, %v2371
      %v2385 = vmul.f32 %v2374, %v2374
      %v2386 = vmul.f32 %v2377, %v2377
      %2395 = vrot.lane.b32.xlu0 %v2379, 1
      %v2396 = vpop.permute.xlu0 %2395
      %2397 = vrot.lane.b32.xlu0 %v2380, 1
      %v2398 = vpop.permute.xlu0 %2397
      %2399 = vrot.lane.b32.xlu0 %v2381, 1
      %v2400 = vpop.permute.xlu0 %2399
      %2401 = vrot.lane.b32.xlu0 %v2382, 1
      %v2402 = vpop.permute.xlu0 %2401
      %2403 = vrot.lane.b32.xlu0 %v2383, 1
      %v2404 = vpop.permute.xlu0 %2403
      %2405 = vrot.lane.b32.xlu0 %v2384, 1
      %v2406 = vpop.permute.xlu0 %2405
      %2407 = vrot.lane.b32.xlu0 %v2385, 1
      %v2408 = vpop.permute.xlu0 %2407
      %2409 = vrot.lane.b32.xlu0 %v2386, 1
      %v2410 = vpop.permute.xlu0 %2409
      %v2419 = vsub.f32 %v2356, %v2396
      %v2420 = vsub.f32 %v2359, %v2398
      %v2421 = vsub.f32 %v2362, %v2400
      %v2422 = vsub.f32 %v2365, %v2402
      %v2423 = vsub.f32 %v2368, %v2404
      %v2424 = vsub.f32 %v2371, %v2406
      %v2425 = vsub.f32 %v2374, %v2408
      %v2426 = vsub.f32 %v2377, %v2410
      %v2427 = vadd.f32 %v2419, 1e-05
      %v2428 = vadd.f32 %v2420, 1e-05
      %v2429 = vadd.f32 %v2421, 1e-05
      %v2430 = vadd.f32 %v2422, 1e-05
      %v2431 = vadd.f32 %v2423, 1e-05
      %v2432 = vadd.f32 %v2424, 1e-05
      %v2433 = vadd.f32 %v2425, 1e-05
      %v2434 = vadd.f32 %v2426, 1e-05
      %v2435 = vrsqrt.pop %v2427
      %v2436 = vmul.f32 %v2435, %v2427
      %v2437 = vmul.f32 %v2436, %v2435
      %v2438 = vmul.f32 0.5, %v2437
      %v2439 = vsub.f32 1.5, %v2438
      %v2440 = vmul.f32 %v2435, %v2439
      %vm2441 = vweird.f32 %v2427
      %vm2442 = vweird.f32 %v2435
      %vm2443 = vmor %vm2441, %vm2442
      %v2444 = vsel %vm2443, %v2435, %v2440
      %v2445 = vrsqrt.pop %v2428
      %v2446 = vmul.f32 %v2445, %v2428
      %v2447 = vmul.f32 %v2446, %v2445
      %v2448 = vmul.f32 0.5, %v2447
      %v2449 = vsub.f32 1.5, %v2448
      %v2450 = vmul.f32 %v2445, %v2449
      %vm2451 = vweird.f32 %v2428
      %vm2452 = vweird.f32 %v2445
      %vm2453 = vmor %vm2451, %vm2452
      %v2454 = vsel %vm2453, %v2445, %v2450
      %v2455 = vrsqrt.pop %v2429
      %v2456 = vmul.f32 %v2455, %v2429
      %v2457 = vmul.f32 %v2456, %v2455
      %v2458 = vmul.f32 0.5, %v2457
      %v2459 = vsub.f32 1.5, %v2458
      %v2460 = vmul.f32 %v2455, %v2459
      %vm2461 = vweird.f32 %v2429
      %vm2462 = vweird.f32 %v2455
      %vm2463 = vmor %vm2461, %vm2462
      %v2464 = vsel %vm2463, %v2455, %v2460
      %v2465 = vrsqrt.pop %v2430
      %v2466 = vmul.f32 %v2465, %v2430
      %v2467 = vmul.f32 %v2466, %v2465
      %v2468 = vmul.f32 0.5, %v2467
      %v2469 = vsub.f32 1.5, %v2468
      %v2470 = vmul.f32 %v2465, %v2469
      %vm2471 = vweird.f32 %v2430
      %vm2472 = vweird.f32 %v2465
      %vm2473 = vmor %vm2471, %vm2472
      %v2474 = vsel %vm2473, %v2465, %v2470
      %v2475 = vrsqrt.pop %v2431
      %v2476 = vmul.f32 %v2475, %v2431
      %v2477 = vmul.f32 %v2476, %v2475
      %v2478 = vmul.f32 0.5, %v2477
      %v2479 = vsub.f32 1.5, %v2478
      %v2480 = vmul.f32 %v2475, %v2479
      %vm2481 = vweird.f32 %v2431
      %vm2482 = vweird.f32 %v2475
      %vm2483 = vmor %vm2481, %vm2482
      %v2484 = vsel %vm2483, %v2475, %v2480
      %v2485 = vrsqrt.pop %v2432
      %v2486 = vmul.f32 %v2485, %v2432
      %v2487 = vmul.f32 %v2486, %v2485
      %v2488 = vmul.f32 0.5, %v2487
      %v2489 = vsub.f32 1.5, %v2488
      %v2490 = vmul.f32 %v2485, %v2489
      %vm2491 = vweird.f32 %v2432
      %vm2492 = vweird.f32 %v2485
      %vm2493 = vmor %vm2491, %vm2492
      %v2494 = vsel %vm2493, %v2485, %v2490
      %v2495 = vrsqrt.pop %v2433
      %v2496 = vmul.f32 %v2495, %v2433
      %v2497 = vmul.f32 %v2496, %v2495
      %v2498 = vmul.f32 0.5, %v2497
      %v2499 = vsub.f32 1.5, %v2498
      %v2500 = vmul.f32 %v2495, %v2499
      %vm2501 = vweird.f32 %v2433
      %vm2502 = vweird.f32 %v2495
      %vm2503 = vmor %vm2501, %vm2502
      %v2504 = vsel %vm2503, %v2495, %v2500
      %v2505 = vrsqrt.pop %v2434
      %v2506 = vmul.f32 %v2505, %v2434
      %v2507 = vmul.f32 %v2506, %v2505
      %v2508 = vmul.f32 0.5, %v2507
      %v2509 = vsub.f32 1.5, %v2508
      %v2510 = vmul.f32 %v2505, %v2509
      %vm2511 = vweird.f32 %v2434
      %vm2512 = vweird.f32 %v2505
      %vm2513 = vmor %vm2511, %vm2512
      %v2514 = vsel %vm2513, %v2505, %v2510
      %2523 = vrot.lane.b32.xlu0 %v2217, 1
      %v2524 = vpop.permute.xlu0 %2523
      %2525 = vrot.lane.b32.xlu0 %v2218, 1
      %v2526 = vpop.permute.xlu0 %2525
      %2527 = vrot.lane.b32.xlu0 %v2219, 1
      %v2528 = vpop.permute.xlu0 %2527
      %2529 = vrot.lane.b32.xlu0 %v2220, 1
      %v2530 = vpop.permute.xlu0 %2529
      %2531 = vrot.lane.b32.xlu0 %v2221, 1
      %v2532 = vpop.permute.xlu0 %2531
      %2533 = vrot.lane.b32.xlu0 %v2222, 1
      %v2534 = vpop.permute.xlu0 %2533
      %2535 = vrot.lane.b32.xlu0 %v2223, 1
      %v2536 = vpop.permute.xlu0 %2535
      %2537 = vrot.lane.b32.xlu0 %v2224, 1
      %v2538 = vpop.permute.xlu0 %2537
      %v2547 = vmul.f32 %v2444, %v2524
      %v2548 = vmul.f32 %v2454, %v2526
      %v2549 = vmul.f32 %v2464, %v2528
      %v2550 = vmul.f32 %v2474, %v2530
      %v2551 = vmul.f32 %v2484, %v2532
      %v2552 = vmul.f32 %v2494, %v2534
      %v2553 = vmul.f32 %v2504, %v2536
      %v2554 = vmul.f32 %v2514, %v2538
      %2563 = vrot.lane.b32.xlu0 %v2547, 127
      %v2564 = vpop.permute.xlu0 %2563
      %2565 = vrot.lane.b32.xlu0 %v2548, 127
      %v2566 = vpop.permute.xlu0 %2565
      %2567 = vrot.lane.b32.xlu0 %v2549, 127
      %v2568 = vpop.permute.xlu0 %2567
      %2569 = vrot.lane.b32.xlu0 %v2550, 127
      %v2570 = vpop.permute.xlu0 %2569
      %2571 = vrot.lane.b32.xlu0 %v2551, 127
      %v2572 = vpop.permute.xlu0 %2571
      %2573 = vrot.lane.b32.xlu0 %v2552, 127
      %v2574 = vpop.permute.xlu0 %2573
      %2575 = vrot.lane.b32.xlu0 %v2553, 127
      %v2576 = vpop.permute.xlu0 %2575
      %2577 = vrot.lane.b32.xlu0 %v2554, 127
      %v2578 = vpop.permute.xlu0 %2577
      %v2587 = vmul.f32 %v2356, %v2564
      %v2588 = vmul.f32 %v2359, %v2566
      %v2589 = vmul.f32 %v2362, %v2568
      %v2590 = vmul.f32 %v2365, %v2570
      %v2591 = vmul.f32 %v2368, %v2572
      %v2592 = vmul.f32 %v2371, %v2574
      %v2593 = vmul.f32 %v2374, %v2576
      %v2594 = vmul.f32 %v2377, %v2578
      %v2595 = vsub.f32 %v2225, %v2587
      %v2596 = vsub.f32 %v2226, %v2588
      %v2597 = vsub.f32 %v2227, %v2589
      %v2598 = vsub.f32 %v2228, %v2590
      %v2599 = vsub.f32 %v2229, %v2591
      %v2600 = vsub.f32 %v2230, %v2592
      %v2601 = vsub.f32 %v2231, %v2593
      %v2602 = vsub.f32 %v2232, %v2594
      %2603 = vset.pattern.permute.xlu0 1
      %2604 = vperm.xlu0 %2603, %v2547
      %v2605 = vpop.permute.xlu0 %2604
      %2607 = vset.pattern.permute.xlu0 1
      %2608 = vperm.xlu0 %2607, %v2548
      %v2609 = vpop.permute.xlu0 %2608
      %2611 = vset.pattern.permute.xlu0 1
      %2612 = vperm.xlu0 %2611, %v2549
      %v2613 = vpop.permute.xlu0 %2612
      %2615 = vset.pattern.permute.xlu0 1
      %2616 = vperm.xlu0 %2615, %v2550
      %v2617 = vpop.permute.xlu0 %2616
      %2619 = vset.pattern.permute.xlu0 1
      %2620 = vperm.xlu0 %2619, %v2551
      %v2621 = vpop.permute.xlu0 %2620
      %2623 = vset.pattern.permute.xlu0 1
      %2624 = vperm.xlu0 %2623, %v2552
      %v2625 = vpop.permute.xlu0 %2624
      %2627 = vset.pattern.permute.xlu0 1
      %2628 = vperm.xlu0 %2627, %v2553
      %v2629 = vpop.permute.xlu0 %2628
      %2631 = vset.pattern.permute.xlu0 1
      %2632 = vperm.xlu0 %2631, %v2554
      %v2633 = vpop.permute.xlu0 %2632
      %v2635 = vmul.f32 %v2111, %v2605
      %v2636 = vmul.f32 %v2198, %v2605
      %v2637 = vmul.f32 %v2113, %v2609
      %v2638 = vmul.f32 %v2200, %v2609
      %v2639 = vmul.f32 %v2116, %v2613
      %v2640 = vmul.f32 %v2203, %v2613
      %v2641 = vmul.f32 %v2118, %v2617
      %v2642 = vmul.f32 %v2205, %v2617
      %v2643 = vmul.f32 %v2121, %v2621
      %v2644 = vmul.f32 %v2208, %v2621
      %v2645 = vmul.f32 %v2123, %v2625
      %v2646 = vmul.f32 %v2210, %v2625
      %v2647 = vmul.f32 %v2126, %v2629
      %v2648 = vmul.f32 %v2213, %v2629
      %v2649 = vmul.f32 %v2128, %v2633
      %v2650 = vmul.f32 %v2215, %v2633
      %2652 = vset.pattern.permute.xlu0 0
      %2653 = vperm.xlu0 %2652, %v2595
      %v2654 = vpop.permute.xlu0 %2653
      %2657 = vset.pattern.permute.xlu0 0
      %2658 = vperm.xlu0 %2657, %v2596
      %v2659 = vpop.permute.xlu0 %2658
      %2662 = vset.pattern.permute.xlu0 0
      %2663 = vperm.xlu0 %2662, %v2597
      %v2664 = vpop.permute.xlu0 %2663
      %2667 = vset.pattern.permute.xlu0 0
      %2668 = vperm.xlu0 %2667, %v2598
      %v2669 = vpop.permute.xlu0 %2668
      %2672 = vset.pattern.permute.xlu0 0
      %2673 = vperm.xlu0 %2672, %v2599
      %v2674 = vpop.permute.xlu0 %2673
      %2677 = vset.pattern.permute.xlu0 0
      %2678 = vperm.xlu0 %2677, %v2600
      %v2679 = vpop.permute.xlu0 %2678
      %2682 = vset.pattern.permute.xlu0 0
      %2683 = vperm.xlu0 %2682, %v2601
      %v2684 = vpop.permute.xlu0 %2683
      %2687 = vset.pattern.permute.xlu0 0
      %2688 = vperm.xlu0 %2687, %v2602
      %v2689 = vpop.permute.xlu0 %2688
      %v2691 = vadd.f32 %v2635, %v2654
      %v2692 = vadd.f32 %v2636, %v2654
      %v2693 = vadd.f32 %v2637, %v2659
      %v2694 = vadd.f32 %v2638, %v2659
      %v2695 = vadd.f32 %v2639, %v2664
      %v2696 = vadd.f32 %v2640, %v2664
      %v2697 = vadd.f32 %v2641, %v2669
      %v2698 = vadd.f32 %v2642, %v2669
      %v2699 = vadd.f32 %v2643, %v2674
      %v2700 = vadd.f32 %v2644, %v2674
      %v2701 = vadd.f32 %v2645, %v2679
      %v2702 = vadd.f32 %v2646, %v2679
      %v2703 = vadd.f32 %v2647, %v2684
      %v2704 = vadd.f32 %v2648, %v2684
      %v2705 = vadd.f32 %v2649, %v2689
      %v2706 = vadd.f32 %v2650, %v2689
      %v2707 = vxor.u32 %v2691, 2147483648
      %v2708 = vxor.u32 %v2692, 2147483648
      %v2709 = vxor.u32 %v2693, 2147483648
      %v2710 = vxor.u32 %v2694, 2147483648
      %v2711 = vxor.u32 %v2695, 2147483648
      %v2712 = vxor.u32 %v2696, 2147483648
      %v2713 = vxor.u32 %v2697, 2147483648
      %v2714 = vxor.u32 %v2698, 2147483648
      %v2715 = vxor.u32 %v2699, 2147483648
      %v2716 = vxor.u32 %v2700, 2147483648
      %v2717 = vxor.u32 %v2701, 2147483648
      %v2718 = vxor.u32 %v2702, 2147483648
      %v2719 = vxor.u32 %v2703, 2147483648
      %v2720 = vxor.u32 %v2704, 2147483648
      %v2721 = vxor.u32 %v2705, 2147483648
      %v2722 = vxor.u32 %v2706, 2147483648
      %v2723 = vmul.f32 %v2707, 1.442695
      %v2724 = vpow.pop %v2723
      %v2725 = vmul.f32 %v2708, 1.442695
      %v2726 = vpow.pop %v2725
      %v2727 = vmul.f32 %v2709, 1.442695
      %v2728 = vpow.pop %v2727
      %v2729 = vmul.f32 %v2710, 1.442695
      %v2730 = vpow.pop %v2729
      %v2731 = vmul.f32 %v2711, 1.442695
      %v2732 = vpow.pop %v2731
      %v2733 = vmul.f32 %v2712, 1.442695
      %v2734 = vpow.pop %v2733
      %v2735 = vmul.f32 %v2713, 1.442695
      %v2736 = vpow.pop %v2735
      %v2737 = vmul.f32 %v2714, 1.442695
      %v2738 = vpow.pop %v2737
      %v2739 = vmul.f32 %v2715, 1.442695
      %v2740 = vpow.pop %v2739
      %v2741 = vmul.f32 %v2716, 1.442695
      %v2742 = vpow.pop %v2741
      %v2743 = vmul.f32 %v2717, 1.442695
      %v2744 = vpow.pop %v2743
      %v2745 = vmul.f32 %v2718, 1.442695
      %v2746 = vpow.pop %v2745
      %v2747 = vmul.f32 %v2719, 1.442695
      %v2748 = vpow.pop %v2747
      %v2749 = vmul.f32 %v2720, 1.442695
      %v2750 = vpow.pop %v2749
      %v2751 = vmul.f32 %v2721, 1.442695
      %v2752 = vpow.pop %v2751
      %v2753 = vmul.f32 %v2722, 1.442695
      %v2754 = vpow.pop %v2753
      %v2755 = vadd.f32 %v2724, 1.0
      %v2756 = vadd.f32 %v2726, 1.0
      %v2757 = vadd.f32 %v2728, 1.0
      %v2758 = vadd.f32 %v2730, 1.0
      %v2759 = vadd.f32 %v2732, 1.0
      %v2760 = vadd.f32 %v2734, 1.0
      %v2761 = vadd.f32 %v2736, 1.0
      %v2762 = vadd.f32 %v2738, 1.0
      %v2763 = vadd.f32 %v2740, 1.0
      %v2764 = vadd.f32 %v2742, 1.0
      %v2765 = vadd.f32 %v2744, 1.0
      %v2766 = vadd.f32 %v2746, 1.0
      %v2767 = vadd.f32 %v2748, 1.0
      %v2768 = vadd.f32 %v2750, 1.0
      %v2769 = vadd.f32 %v2752, 1.0
      %v2770 = vadd.f32 %v2754, 1.0
      %v2771 = vrcp.pop %v2755
      %v2772 = vmul.f32 %v2755, %v2771
      %v2773 = vsub.f32 1.0, %v2772
      %v2774 = vmul.f32 %v2771, %v2773
      %v2775 = vadd.f32 %v2771, %v2774
      %vm2776 = vweird.f32 %v2755
      %vm2777 = vweird.f32 %v2771
      %vm2778 = vmor %vm2776, %vm2777
      %v2779 = vsel %vm2778, %v2771, %v2775
      %v2780 = vand.u32 2147483647, %v2755
      %vm2781 = vcmp.eq.f32.partialorder %v2780, 8.507059e+37
      %v2782 = vand.u32 %v2755, 2147483648
      %v2783 = vor.u32 1.1754944e-38, %v2782
      %v2784 = vsel %vm2781, %v2783, %v2779
      %v2785 = vmul.f32 1.0, %v2784
      %v2786 = vrcp.pop %v2756
      %v2787 = vmul.f32 %v2756, %v2786
      %v2788 = vsub.f32 1.0, %v2787
      %v2789 = vmul.f32 %v2786, %v2788
      %v2790 = vadd.f32 %v2786, %v2789
      %vm2791 = vweird.f32 %v2756
      %vm2792 = vweird.f32 %v2786
      %vm2793 = vmor %vm2791, %vm2792
      %v2794 = vsel %vm2793, %v2786, %v2790
      %v2795 = vand.u32 2147483647, %v2756
      %vm2796 = vcmp.eq.f32.partialorder %v2795, 8.507059e+37
      %v2797 = vand.u32 %v2756, 2147483648
      %v2798 = vor.u32 1.1754944e-38, %v2797
      %v2799 = vsel %vm2796, %v2798, %v2794
      %v2800 = vmul.f32 1.0, %v2799
      %v2801 = vrcp.pop %v2757
      %v2802 = vmul.f32 %v2757, %v2801
      %v2803 = vsub.f32 1.0, %v2802
      %v2804 = vmul.f32 %v2801, %v2803
      %v2805 = vadd.f32 %v2801, %v2804
      %vm2806 = vweird.f32 %v2757
      %vm2807 = vweird.f32 %v2801
      %vm2808 = vmor %vm2806, %vm2807
      %v2809 = vsel %vm2808, %v2801, %v2805
      %v2810 = vand.u32 2147483647, %v2757
      %vm2811 = vcmp.eq.f32.partialorder %v2810, 8.507059e+37
      %v2812 = vand.u32 %v2757, 2147483648
      %v2813 = vor.u32 1.1754944e-38, %v2812
      %v2814 = vsel %vm2811, %v2813, %v2809
      %v2815 = vmul.f32 1.0, %v2814
      %v2816 = vrcp.pop %v2758
      %v2817 = vmul.f32 %v2758, %v2816
      %v2818 = vsub.f32 1.0, %v2817
      %v2819 = vmul.f32 %v2816, %v2818
      %v2820 = vadd.f32 %v2816, %v2819
      %vm2821 = vweird.f32 %v2758
      %vm2822 = vweird.f32 %v2816
      %vm2823 = vmor %vm2821, %vm2822
      %v2824 = vsel %vm2823, %v2816, %v2820
      %v2825 = vand.u32 2147483647, %v2758
      %vm2826 = vcmp.eq.f32.partialorder %v2825, 8.507059e+37
      %v2827 = vand.u32 %v2758, 2147483648
      %v2828 = vor.u32 1.1754944e-38, %v2827
      %v2829 = vsel %vm2826, %v2828, %v2824
      %v2830 = vmul.f32 1.0, %v2829
      %v2831 = vrcp.pop %v2759
      %v2832 = vmul.f32 %v2759, %v2831
      %v2833 = vsub.f32 1.0, %v2832
      %v2834 = vmul.f32 %v2831, %v2833
      %v2835 = vadd.f32 %v2831, %v2834
      %vm2836 = vweird.f32 %v2759
      %vm2837 = vweird.f32 %v2831
      %vm2838 = vmor %vm2836, %vm2837
      %v2839 = vsel %vm2838, %v2831, %v2835
      %v2840 = vand.u32 2147483647, %v2759
      %vm2841 = vcmp.eq.f32.partialorder %v2840, 8.507059e+37
      %v2842 = vand.u32 %v2759, 2147483648
      %v2843 = vor.u32 1.1754944e-38, %v2842
      %v2844 = vsel %vm2841, %v2843, %v2839
      %v2845 = vmul.f32 1.0, %v2844
      %v2846 = vrcp.pop %v2760
      %v2847 = vmul.f32 %v2760, %v2846
      %v2848 = vsub.f32 1.0, %v2847
      %v2849 = vmul.f32 %v2846, %v2848
      %v2850 = vadd.f32 %v2846, %v2849
      %vm2851 = vweird.f32 %v2760
      %vm2852 = vweird.f32 %v2846
      %vm2853 = vmor %vm2851, %vm2852
      %v2854 = vsel %vm2853, %v2846, %v2850
      %v2855 = vand.u32 2147483647, %v2760
      %vm2856 = vcmp.eq.f32.partialorder %v2855, 8.507059e+37
      %v2857 = vand.u32 %v2760, 2147483648
      %v2858 = vor.u32 1.1754944e-38, %v2857
      %v2859 = vsel %vm2856, %v2858, %v2854
      %v2860 = vmul.f32 1.0, %v2859
      %v2861 = vrcp.pop %v2761
      %v2862 = vmul.f32 %v2761, %v2861
      %v2863 = vsub.f32 1.0, %v2862
      %v2864 = vmul.f32 %v2861, %v2863
      %v2865 = vadd.f32 %v2861, %v2864
      %vm2866 = vweird.f32 %v2761
      %vm2867 = vweird.f32 %v2861
      %vm2868 = vmor %vm2866, %vm2867
      %v2869 = vsel %vm2868, %v2861, %v2865
      %v2870 = vand.u32 2147483647, %v2761
      %vm2871 = vcmp.eq.f32.partialorder %v2870, 8.507059e+37
      %v2872 = vand.u32 %v2761, 2147483648
      %v2873 = vor.u32 1.1754944e-38, %v2872
      %v2874 = vsel %vm2871, %v2873, %v2869
      %v2875 = vmul.f32 1.0, %v2874
      %v2876 = vrcp.pop %v2762
      %v2877 = vmul.f32 %v2762, %v2876
      %v2878 = vsub.f32 1.0, %v2877
      %v2879 = vmul.f32 %v2876, %v2878
      %v2880 = vadd.f32 %v2876, %v2879
      %vm2881 = vweird.f32 %v2762
      %vm2882 = vweird.f32 %v2876
      %vm2883 = vmor %vm2881, %vm2882
      %v2884 = vsel %vm2883, %v2876, %v2880
      %v2885 = vand.u32 2147483647, %v2762
      %vm2886 = vcmp.eq.f32.partialorder %v2885, 8.507059e+37
      %v2887 = vand.u32 %v2762, 2147483648
      %v2888 = vor.u32 1.1754944e-38, %v2887
      %v2889 = vsel %vm2886, %v2888, %v2884
      %v2890 = vmul.f32 1.0, %v2889
      %v2891 = vrcp.pop %v2763
      %v2892 = vmul.f32 %v2763, %v2891
      %v2893 = vsub.f32 1.0, %v2892
      %v2894 = vmul.f32 %v2891, %v2893
      %v2895 = vadd.f32 %v2891, %v2894
      %vm2896 = vweird.f32 %v2763
      %vm2897 = vweird.f32 %v2891
      %vm2898 = vmor %vm2896, %vm2897
      %v2899 = vsel %vm2898, %v2891, %v2895
      %v2900 = vand.u32 2147483647, %v2763
      %vm2901 = vcmp.eq.f32.partialorder %v2900, 8.507059e+37
      %v2902 = vand.u32 %v2763, 2147483648
      %v2903 = vor.u32 1.1754944e-38, %v2902
      %v2904 = vsel %vm2901, %v2903, %v2899
      %v2905 = vmul.f32 1.0, %v2904
      %v2906 = vrcp.pop %v2764
      %v2907 = vmul.f32 %v2764, %v2906
      %v2908 = vsub.f32 1.0, %v2907
      %v2909 = vmul.f32 %v2906, %v2908
      %v2910 = vadd.f32 %v2906, %v2909
      %vm2911 = vweird.f32 %v2764
      %vm2912 = vweird.f32 %v2906
      %vm2913 = vmor %vm2911, %vm2912
      %v2914 = vsel %vm2913, %v2906, %v2910
      %v2915 = vand.u32 2147483647, %v2764
      %vm2916 = vcmp.eq.f32.partialorder %v2915, 8.507059e+37
      %v2917 = vand.u32 %v2764, 2147483648
      %v2918 = vor.u32 1.1754944e-38, %v2917
      %v2919 = vsel %vm2916, %v2918, %v2914
      %v2920 = vmul.f32 1.0, %v2919
      %v2921 = vrcp.pop %v2765
      %v2922 = vmul.f32 %v2765, %v2921
      %v2923 = vsub.f32 1.0, %v2922
      %v2924 = vmul.f32 %v2921, %v2923
      %v2925 = vadd.f32 %v2921, %v2924
      %vm2926 = vweird.f32 %v2765
      %vm2927 = vweird.f32 %v2921
      %vm2928 = vmor %vm2926, %vm2927
      %v2929 = vsel %vm2928, %v2921, %v2925
      %v2930 = vand.u32 2147483647, %v2765
      %vm2931 = vcmp.eq.f32.partialorder %v2930, 8.507059e+37
      %v2932 = vand.u32 %v2765, 2147483648
      %v2933 = vor.u32 1.1754944e-38, %v2932
      %v2934 = vsel %vm2931, %v2933, %v2929
      %v2935 = vmul.f32 1.0, %v2934
      %v2936 = vrcp.pop %v2766
      %v2937 = vmul.f32 %v2766, %v2936
      %v2938 = vsub.f32 1.0, %v2937
      %v2939 = vmul.f32 %v2936, %v2938
      %v2940 = vadd.f32 %v2936, %v2939
      %vm2941 = vweird.f32 %v2766
      %vm2942 = vweird.f32 %v2936
      %vm2943 = vmor %vm2941, %vm2942
      %v2944 = vsel %vm2943, %v2936, %v2940
      %v2945 = vand.u32 2147483647, %v2766
      %vm2946 = vcmp.eq.f32.partialorder %v2945, 8.507059e+37
      %v2947 = vand.u32 %v2766, 2147483648
      %v2948 = vor.u32 1.1754944e-38, %v2947
      %v2949 = vsel %vm2946, %v2948, %v2944
      %v2950 = vmul.f32 1.0, %v2949
      %v2951 = vrcp.pop %v2767
      %v2952 = vmul.f32 %v2767, %v2951
      %v2953 = vsub.f32 1.0, %v2952
      %v2954 = vmul.f32 %v2951, %v2953
      %v2955 = vadd.f32 %v2951, %v2954
      %vm2956 = vweird.f32 %v2767
      %vm2957 = vweird.f32 %v2951
      %vm2958 = vmor %vm2956, %vm2957
      %v2959 = vsel %vm2958, %v2951, %v2955
      %v2960 = vand.u32 2147483647, %v2767
      %vm2961 = vcmp.eq.f32.partialorder %v2960, 8.507059e+37
      %v2962 = vand.u32 %v2767, 2147483648
      %v2963 = vor.u32 1.1754944e-38, %v2962
      %v2964 = vsel %vm2961, %v2963, %v2959
      %v2965 = vmul.f32 1.0, %v2964
      %v2966 = vrcp.pop %v2768
      %v2967 = vmul.f32 %v2768, %v2966
      %v2968 = vsub.f32 1.0, %v2967
      %v2969 = vmul.f32 %v2966, %v2968
      %v2970 = vadd.f32 %v2966, %v2969
      %vm2971 = vweird.f32 %v2768
      %vm2972 = vweird.f32 %v2966
      %vm2973 = vmor %vm2971, %vm2972
      %v2974 = vsel %vm2973, %v2966, %v2970
      %v2975 = vand.u32 2147483647, %v2768
      %vm2976 = vcmp.eq.f32.partialorder %v2975, 8.507059e+37
      %v2977 = vand.u32 %v2768, 2147483648
      %v2978 = vor.u32 1.1754944e-38, %v2977
      %v2979 = vsel %vm2976, %v2978, %v2974
      %v2980 = vmul.f32 1.0, %v2979
      %v2981 = vrcp.pop %v2769
      %v2982 = vmul.f32 %v2769, %v2981
      %v2983 = vsub.f32 1.0, %v2982
      %v2984 = vmul.f32 %v2981, %v2983
      %v2985 = vadd.f32 %v2981, %v2984
      %vm2986 = vweird.f32 %v2769
      %vm2987 = vweird.f32 %v2981
      %vm2988 = vmor %vm2986, %vm2987
      %v2989 = vsel %vm2988, %v2981, %v2985
      %v2990 = vand.u32 2147483647, %v2769
      %vm2991 = vcmp.eq.f32.partialorder %v2990, 8.507059e+37
      %v2992 = vand.u32 %v2769, 2147483648
      %v2993 = vor.u32 1.1754944e-38, %v2992
      %v2994 = vsel %vm2991, %v2993, %v2989
      %v2995 = vmul.f32 1.0, %v2994
      %v2996 = vrcp.pop %v2770
      %v2997 = vmul.f32 %v2770, %v2996
      %v2998 = vsub.f32 1.0, %v2997
      %v2999 = vmul.f32 %v2996, %v2998
      %v3000 = vadd.f32 %v2996, %v2999
      %vm3001 = vweird.f32 %v2770
      %vm3002 = vweird.f32 %v2996
      %vm3003 = vmor %vm3001, %vm3002
      %v3004 = vsel %vm3003, %v2996, %v3000
      %v3005 = vand.u32 2147483647, %v2770
      %vm3006 = vcmp.eq.f32.partialorder %v3005, 8.507059e+37
      %v3007 = vand.u32 %v2770, 2147483648
      %v3008 = vor.u32 1.1754944e-38, %v3007
      %v3009 = vsel %vm3006, %v3008, %v3004
      %v3010 = vmul.f32 1.0, %v3009
      %v3011 = vmul.f32 %v2691, %v2785
      %v3012 = vmul.f32 %v2692, %v2800
      %v3013 = vmul.f32 %v2693, %v2815
      %v3014 = vmul.f32 %v2694, %v2830
      %v3015 = vmul.f32 %v2695, %v2845
      %v3016 = vmul.f32 %v2696, %v2860
      %v3017 = vmul.f32 %v2697, %v2875
      %v3018 = vmul.f32 %v2698, %v2890
      %v3019 = vmul.f32 %v2699, %v2905
      %v3020 = vmul.f32 %v2700, %v2920
      %v3021 = vmul.f32 %v2701, %v2935
      %v3022 = vmul.f32 %v2702, %v2950
      %v3023 = vmul.f32 %v2703, %v2965
      %v3024 = vmul.f32 %v2704, %v2980
      %v3025 = vmul.f32 %v2705, %v2995
      %v3026 = vmul.f32 %v2706, %v3010
      %v3027 = vld [vmem:[%s15] sm:$0xff]
      %v3028 = vld [vmem:[%s15 + $0x8] sm:$0xff]
      %v3029 = vld [vmem:[%s15 + $0x10] sm:$0xff]
      %v3030 = vld [vmem:[%s15 + $0x18] sm:$0xff]
      %v3031 = vld [vmem:[%s15 + $0x20] sm:$0xff]
      %v3032 = vld [vmem:[%s15 + $0x28] sm:$0xff]
      %v3033 = vld [vmem:[%s15 + $0x30] sm:$0xff]
      %v3034 = vld [vmem:[%s15 + $0x38] sm:$0xff]
      %v3035 = vpack.c.bf16 %v3012, %v3011
      %v3036 = vpack.c.bf16 %v3014, %v3013
      %v3037 = vpack.c.bf16 %v3016, %v3015
      %v3038 = vpack.c.bf16 %v3018, %v3017
      %v3039 = vpack.c.bf16 %v3020, %v3019
      %v3040 = vpack.c.bf16 %v3022, %v3021
      %v3041 = vpack.c.bf16 %v3024, %v3023
      %v3042 = vpack.c.bf16 %v3026, %v3025
      %v3051 = vunpack.c.l.b16 %v3035
      %v3052 = vunpack.c.h.b16 %v3035
      %v3053 = vunpack.c.l.b16 %v3036
      %v3054 = vunpack.c.h.b16 %v3036
      %v3055 = vunpack.c.l.b16 %v3037
      %v3056 = vunpack.c.h.b16 %v3037
      %v3057 = vunpack.c.l.b16 %v3038
      %v3058 = vunpack.c.h.b16 %v3038
      %v3059 = vunpack.c.l.b16 %v3039
      %v3060 = vunpack.c.h.b16 %v3039
      %v3061 = vunpack.c.l.b16 %v3040
      %v3062 = vunpack.c.h.b16 %v3040
      %v3063 = vunpack.c.l.b16 %v3041
      %v3064 = vunpack.c.h.b16 %v3041
      %v3065 = vunpack.c.l.b16 %v3042
      %v3066 = vunpack.c.h.b16 %v3042
      %v3067 = vpack.c.b16 %v3053, %v3051
      %v3068 = vpack.c.b16 %v3054, %v3052
      %v3069 = vpack.c.b16 %v3057, %v3055
      %v3070 = vpack.c.b16 %v3058, %v3056
      %v3071 = vpack.c.b16 %v3061, %v3059
      %v3072 = vpack.c.b16 %v3062, %v3060
      %v3073 = vpack.c.b16 %v3065, %v3063
      %v3074 = vpack.c.b16 %v3066, %v3064
      %3083 = vst [vmem:[#allocation1] ss:$9 sm:$0xff] %v585
      %v3084 = vld [vmem:[#allocation1] sm:$0xff]
      %v3085 = vld [vmem:[#allocation1 + $0x9] sm:$0xff]
      %v3086 = vpack.i.b16 %v3084, %v3084
      %v3088 = vperm.slane %v3086, 0
      %v3089 = vpack.i.b16 %v3085, %v3085
      %v3091 = vperm.slane %v3089, 0
      %v3092 = vunpack.c.l.bf16 %v3067
      %v3093 = vunpack.c.l.bf16 %v3068
      %v3094 = vunpack.c.h.bf16 %v3067
      %v3095 = vunpack.c.h.bf16 %v3068
      %v3096 = vunpack.c.l.bf16 %v3069
      %v3097 = vunpack.c.l.bf16 %v3070
      %v3098 = vunpack.c.h.bf16 %v3069
      %v3099 = vunpack.c.h.bf16 %v3070
      %v3100 = vunpack.c.l.bf16 %v3071
      %v3101 = vunpack.c.l.bf16 %v3072
      %v3102 = vunpack.c.h.bf16 %v3071
      %v3103 = vunpack.c.h.bf16 %v3072
      %v3104 = vunpack.c.l.bf16 %v3073
      %v3105 = vunpack.c.l.bf16 %v3074
      %v3106 = vunpack.c.h.bf16 %v3073
      %v3107 = vunpack.c.h.bf16 %v3074
      %v3108 = vunpack.c.l.bf16 %v3088
      %v3109 = vunpack.c.l.bf16 %v3091
      %3112 = vrot.lane.b32.xlu0 %v3108, 111
      %v3113 = vpop.permute.xlu0 %3112
      %3114 = vrot.lane.b32.xlu0 %v3109, 111
      %v3115 = vpop.permute.xlu0 %3114
      %v3116 = vsel %vm1307, %v3113, %v3115
      %v3120 = vmul.f32 %v1289, %v3113
      %v3121 = vmul.f32 %v3092, %v3116
      %v3122 = vmul.f32 %v3093, %v3115
      %v3123 = vmul.f32 %v1292, %v3113
      %v3124 = vmul.f32 %v3094, %v3116
      %v3125 = vmul.f32 %v3095, %v3115
      %v3126 = vmul.f32 %v3096, %v3116
      %v3127 = vmul.f32 %v3097, %v3115
      %v3128 = vmul.f32 %v3098, %v3116
      %v3129 = vmul.f32 %v3099, %v3115
      %v3130 = vmul.f32 %v3100, %v3116
      %v3131 = vmul.f32 %v3101, %v3115
      %v3132 = vmul.f32 %v3102, %v3116
      %v3133 = vmul.f32 %v3103, %v3115
      %v3134 = vmul.f32 %v3104, %v3116
      %v3135 = vmul.f32 %v3105, %v3115
      %v3136 = vmul.f32 %v3106, %v3116
      %v3137 = vmul.f32 %v3107, %v3115
      %v3138 = vpack.c.bf16 %v3121, %v3120
      %v3139 = vpack.c.bf16 %v3122, %v3122
      %v3140 = vpack.c.bf16 %v3124, %v3123
      %v3141 = vpack.c.bf16 %v3125, %v3125
      %v3142 = vpack.c.bf16 %v3126, %v3120
      %v3143 = vpack.c.bf16 %v3127, %v3127
      %v3144 = vpack.c.bf16 %v3128, %v3123
      %v3145 = vpack.c.bf16 %v3129, %v3129
      %v3146 = vpack.c.bf16 %v3130, %v3120
      %v3147 = vpack.c.bf16 %v3131, %v3131
      %v3148 = vpack.c.bf16 %v3132, %v3123
      %v3149 = vpack.c.bf16 %v3133, %v3133
      %v3150 = vpack.c.bf16 %v3134, %v3120
      %v3151 = vpack.c.bf16 %v3135, %v3135
      %v3152 = vpack.c.bf16 %v3136, %v3123
      %v3153 = vpack.c.bf16 %v3137, %v3137
      %3154 = vst [vmem:[#allocation1] ss:$9 sm:$0xff] %v586
      %v3155 = vld [vmem:[#allocation1] sm:$0xff]
      %v3156 = vld [vmem:[#allocation1 + $0x9] sm:$0xff]
      %v3157 = vpack.i.b16 %v3155, %v3155
      %v3159 = vperm.slane %v3157, 0
      %v3160 = vpack.i.b16 %v3156, %v3156
      %v3162 = vperm.slane %v3160, 0
      %v3163 = vunpack.c.l.bf16 %v3159
      %v3164 = vunpack.c.l.bf16 %v3162
      %3167 = vrot.lane.b32.xlu0 %v3163, 113
      %v3168 = vpop.permute.xlu0 %3167
      %3169 = vrot.lane.b32.xlu0 %v3164, 113
      %v3170 = vpop.permute.xlu0 %3169
      %v3171 = vsel %vm1348, %v3168, %v3170
      %v3175 = vmul.f32 %v1289, %v3168
      %v3176 = vmul.f32 %v3092, %v3171
      %v3177 = vmul.f32 %v3093, %v3170
      %v3178 = vmul.f32 %v1292, %v3168
      %v3179 = vmul.f32 %v3094, %v3171
      %v3180 = vmul.f32 %v3095, %v3170
      %v3181 = vmul.f32 %v3096, %v3171
      %v3182 = vmul.f32 %v3097, %v3170
      %v3183 = vmul.f32 %v3098, %v3171
      %v3184 = vmul.f32 %v3099, %v3170
      %v3185 = vmul.f32 %v3100, %v3171
      %v3186 = vmul.f32 %v3101, %v3170
      %v3187 = vmul.f32 %v3102, %v3171
      %v3188 = vmul.f32 %v3103, %v3170
      %v3189 = vmul.f32 %v3104, %v3171
      %v3190 = vmul.f32 %v3105, %v3170
      %v3191 = vmul.f32 %v3106, %v3171
      %v3192 = vmul.f32 %v3107, %v3170
      %v3193 = vpack.c.bf16 %v3176, %v3175
      %v3194 = vpack.c.bf16 %v3177, %v3177
      %v3195 = vpack.c.bf16 %v3179, %v3178
      %v3196 = vpack.c.bf16 %v3180, %v3180
      %v3197 = vpack.c.bf16 %v3181, %v3175
      %v3198 = vpack.c.bf16 %v3182, %v3182
      %v3199 = vpack.c.bf16 %v3183, %v3178
      %v3200 = vpack.c.bf16 %v3184, %v3184
      %v3201 = vpack.c.bf16 %v3185, %v3175
      %v3202 = vpack.c.bf16 %v3186, %v3186
      %v3203 = vpack.c.bf16 %v3187, %v3178
      %v3204 = vpack.c.bf16 %v3188, %v3188
      %v3205 = vpack.c.bf16 %v3189, %v3175
      %v3206 = vpack.c.bf16 %v3190, %v3190
      %v3207 = vpack.c.bf16 %v3191, %v3178
      %v3208 = vpack.c.bf16 %v3192, %v3192
      %3209 = vrot.lane.b32.xlu0 %v3108, 127
      %v3210 = vpop.permute.xlu0 %3209
      %3211 = vrot.lane.b32.xlu0 %v3109, 127
      %v3212 = vpop.permute.xlu0 %3211
      %v3213 = vsel %vm1375, %v3210, %v3212
      %v3217 = vmul.f32 %v1289, %v3210
      %v3218 = vmul.f32 %v3092, %v3213
      %v3219 = vmul.f32 %v3093, %v3212
      %v3220 = vmul.f32 %v1292, %v3210
      %v3221 = vmul.f32 %v3094, %v3213
      %v3222 = vmul.f32 %v3095, %v3212
      %v3223 = vmul.f32 %v3096, %v3213
      %v3224 = vmul.f32 %v3097, %v3212
      %v3225 = vmul.f32 %v3098, %v3213
      %v3226 = vmul.f32 %v3099, %v3212
      %v3227 = vmul.f32 %v3100, %v3213
      %v3228 = vmul.f32 %v3101, %v3212
      %v3229 = vmul.f32 %v3102, %v3213
      %v3230 = vmul.f32 %v3103, %v3212
      %v3231 = vmul.f32 %v3104, %v3213
      %v3232 = vmul.f32 %v3105, %v3212
      %v3233 = vmul.f32 %v3106, %v3213
      %v3234 = vmul.f32 %v3107, %v3212
      %v3235 = vpack.c.bf16 %v3218, %v3217
      %v3236 = vpack.c.bf16 %v3219, %v3219
      %v3237 = vpack.c.bf16 %v3221, %v3220
      %v3238 = vpack.c.bf16 %v3222, %v3222
      %v3239 = vpack.c.bf16 %v3223, %v3217
      %v3240 = vpack.c.bf16 %v3224, %v3224
      %v3241 = vpack.c.bf16 %v3225, %v3220
      %v3242 = vpack.c.bf16 %v3226, %v3226
      %v3243 = vpack.c.bf16 %v3227, %v3217
      %v3244 = vpack.c.bf16 %v3228, %v3228
      %v3245 = vpack.c.bf16 %v3229, %v3220
      %v3246 = vpack.c.bf16 %v3230, %v3230
      %v3247 = vpack.c.bf16 %v3231, %v3217
      %v3248 = vpack.c.bf16 %v3232, %v3232
      %v3249 = vpack.c.bf16 %v3233, %v3220
      %v3250 = vpack.c.bf16 %v3234, %v3234
      %3251 = vrot.lane.b32.xlu0 %v3163, 1
      %v3252 = vpop.permute.xlu0 %3251
      %3253 = vrot.lane.b32.xlu0 %v3164, 1
      %v3254 = vpop.permute.xlu0 %3253
      %v3255 = vsel %vm869, %v3252, %v3254
      %v3259 = vmul.f32 %v3092, %v3252
      %v3260 = vmul.f32 %v3093, %v3255
      %v3261 = vmul.f32 %v1289, %v3254
      %v3262 = vmul.f32 %v3094, %v3252
      %v3263 = vmul.f32 %v3095, %v3255
      %v3264 = vmul.f32 %v1292, %v3254
      %v3265 = vmul.f32 %v3096, %v3252
      %v3266 = vmul.f32 %v3097, %v3255
      %v3267 = vmul.f32 %v3098, %v3252
      %v3268 = vmul.f32 %v3099, %v3255
      %v3269 = vmul.f32 %v3100, %v3252
      %v3270 = vmul.f32 %v3101, %v3255
      %v3271 = vmul.f32 %v3102, %v3252
      %v3272 = vmul.f32 %v3103, %v3255
      %v3273 = vmul.f32 %v3104, %v3252
      %v3274 = vmul.f32 %v3105, %v3255
      %v3275 = vmul.f32 %v3106, %v3252
      %v3276 = vmul.f32 %v3107, %v3255
      %v3277 = vpack.c.bf16 %v3260, %v3259
      %v3278 = vpack.c.bf16 %v3261, %v3261
      %v3279 = vpack.c.bf16 %v3263, %v3262
      %v3280 = vpack.c.bf16 %v3264, %v3264
      %v3281 = vpack.c.bf16 %v3266, %v3265
      %v3282 = vpack.c.bf16 %v3268, %v3267
      %v3283 = vpack.c.bf16 %v3270, %v3269
      %v3284 = vpack.c.bf16 %v3272, %v3271
      %v3285 = vpack.c.bf16 %v3274, %v3273
      %v3286 = vpack.c.bf16 %v3276, %v3275
      %3287 = vrot.lane.b32.xlu0 %v3108, 15
      %v3288 = vpop.permute.xlu0 %3287
      %3289 = vrot.lane.b32.xlu0 %v3109, 15
      %v3290 = vpop.permute.xlu0 %3289
      %v3291 = vsel %vm1426, %v3288, %v3290
      %v3295 = vmul.f32 %v3092, %v3288
      %v3296 = vmul.f32 %v3093, %v3291
      %v3297 = vmul.f32 %v1289, %v3290
      %v3298 = vmul.f32 %v3094, %v3288
      %v3299 = vmul.f32 %v3095, %v3291
      %v3300 = vmul.f32 %v1292, %v3290
      %v3301 = vmul.f32 %v3096, %v3288
      %v3302 = vmul.f32 %v3097, %v3291
      %v3303 = vmul.f32 %v3098, %v3288
      %v3304 = vmul.f32 %v3099, %v3291
      %v3305 = vmul.f32 %v3100, %v3288
      %v3306 = vmul.f32 %v3101, %v3291
      %v3307 = vmul.f32 %v3102, %v3288
      %v3308 = vmul.f32 %v3103, %v3291
      %v3309 = vmul.f32 %v3104, %v3288
      %v3310 = vmul.f32 %v3105, %v3291
      %v3311 = vmul.f32 %v3106, %v3288
      %v3312 = vmul.f32 %v3107, %v3291
      %v3313 = vpack.c.bf16 %v3296, %v3295
      %v3314 = vpack.c.bf16 %v3297, %v3297
      %v3315 = vpack.c.bf16 %v3299, %v3298
      %v3316 = vpack.c.bf16 %v3300, %v3300
      %v3317 = vpack.c.bf16 %v3302, %v3301
      %v3318 = vpack.c.bf16 %v3304, %v3303
      %v3319 = vpack.c.bf16 %v3306, %v3305
      %v3320 = vpack.c.bf16 %v3308, %v3307
      %v3321 = vpack.c.bf16 %v3310, %v3309
      %v3322 = vpack.c.bf16 %v3312, %v3311
      %3323 = vrot.lane.b32.xlu0 %v3163, 17
      %v3324 = vpop.permute.xlu0 %3323
      %3325 = vrot.lane.b32.xlu0 %v3164, 17
      %v3326 = vpop.permute.xlu0 %3325
      %v3327 = vsel %vm1451, %v3324, %v3326
      %v3331 = vmul.f32 %v3092, %v3324
      %v3332 = vmul.f32 %v3093, %v3327
      %v3333 = vmul.f32 %v1289, %v3326
      %v3334 = vmul.f32 %v3094, %v3324
      %v3335 = vmul.f32 %v3095, %v3327
      %v3336 = vmul.f32 %v1292, %v3326
      %v3337 = vmul.f32 %v3096, %v3324
      %v3338 = vmul.f32 %v3097, %v3327
      %v3339 = vmul.f32 %v3098, %v3324
      %v3340 = vmul.f32 %v3099, %v3327
      %v3341 = vmul.f32 %v3100, %v3324
      %v3342 = vmul.f32 %v3101, %v3327
      %v3343 = vmul.f32 %v3102, %v3324
      %v3344 = vmul.f32 %v3103, %v3327
      %v3345 = vmul.f32 %v3104, %v3324
      %v3346 = vmul.f32 %v3105, %v3327
      %v3347 = vmul.f32 %v3106, %v3324
      %v3348 = vmul.f32 %v3107, %v3327
      %v3349 = vpack.c.bf16 %v3332, %v3331
      %v3350 = vpack.c.bf16 %v3333, %v3333
      %v3351 = vpack.c.bf16 %v3335, %v3334
      %v3352 = vpack.c.bf16 %v3336, %v3336
      %v3353 = vpack.c.bf16 %v3338, %v3337
      %v3354 = vpack.c.bf16 %v3340, %v3339
      %v3355 = vpack.c.bf16 %v3342, %v3341
      %v3356 = vpack.c.bf16 %v3344, %v3343
      %v3357 = vpack.c.bf16 %v3346, %v3345
      %v3358 = vpack.c.bf16 %v3348, %v3347
      %v3375 = vunpack.c.l.b16 %v3138
      %v3376 = vunpack.c.h.b16 %v3138
      %v3377 = vunpack.c.l.b16 %v3139
      %v3378 = vunpack.c.l.b16 %v3140
      %v3379 = vunpack.c.h.b16 %v3140
      %v3380 = vunpack.c.l.b16 %v3141
      %v3381 = vunpack.c.l.b16 %v3142
      %v3382 = vunpack.c.h.b16 %v3142
      %v3383 = vunpack.c.l.b16 %v3143
      %v3384 = vunpack.c.l.b16 %v3144
      %v3385 = vunpack.c.h.b16 %v3144
      %v3386 = vunpack.c.l.b16 %v3145
      %v3387 = vunpack.c.l.b16 %v3146
      %v3388 = vunpack.c.h.b16 %v3146
      %v3389 = vunpack.c.l.b16 %v3147
      %v3390 = vunpack.c.l.b16 %v3148
      %v3391 = vunpack.c.h.b16 %v3148
      %v3392 = vunpack.c.l.b16 %v3149
      %v3393 = vunpack.c.l.b16 %v3150
      %v3394 = vunpack.c.h.b16 %v3150
      %v3395 = vunpack.c.l.b16 %v3151
      %v3396 = vunpack.c.l.b16 %v3152
      %v3397 = vunpack.c.h.b16 %v3152
      %v3398 = vunpack.c.l.b16 %v3153
      %v3399 = vpack.c.b16 %v3378, %v3375
      %v3400 = vpack.c.b16 %v3379, %v3376
      %v3401 = vpack.c.b16 %v3380, %v3377
      %v3402 = vpack.c.b16 %v3384, %v3381
      %v3403 = vpack.c.b16 %v3385, %v3382
      %v3404 = vpack.c.b16 %v3386, %v3383
      %v3405 = vpack.c.b16 %v3390, %v3387
      %v3406 = vpack.c.b16 %v3391, %v3388
      %v3407 = vpack.c.b16 %v3392, %v3389
      %v3408 = vpack.c.b16 %v3396, %v3393
      %v3409 = vpack.c.b16 %v3397, %v3394
      %v3410 = vpack.c.b16 %v3398, %v3395
      %3411 = vrot.lane.b32.xlu0 %v3067, 127
      %v3412 = vpop.permute.xlu0 %3411
      %3413 = vrot.lane.b32.xlu0 %v3068, 127
      %v3414 = vpop.permute.xlu0 %3413
      %3415 = vrot.lane.b32.xlu0 %v3069, 127
      %v3416 = vpop.permute.xlu0 %3415
      %3417 = vrot.lane.b32.xlu0 %v3070, 127
      %v3418 = vpop.permute.xlu0 %3417
      %3419 = vrot.lane.b32.xlu0 %v3071, 127
      %v3420 = vpop.permute.xlu0 %3419
      %3421 = vrot.lane.b32.xlu0 %v3072, 127
      %v3422 = vpop.permute.xlu0 %3421
      %3423 = vrot.lane.b32.xlu0 %v3073, 127
      %v3424 = vpop.permute.xlu0 %3423
      %3425 = vrot.lane.b32.xlu0 %v3074, 127
      %v3426 = vpop.permute.xlu0 %3425
      %v3427 = vsel %vm1509, %v1500, %v3412
      %v3428 = vsel %vm1509, %v3412, %v3414
      %v3429 = vsel %vm1509, %v1500, %v3416
      %v3430 = vsel %vm1509, %v3416, %v3418
      %v3431 = vsel %vm1509, %v1500, %v3420
      %v3432 = vsel %vm1509, %v3420, %v3422
      %v3433 = vsel %vm1509, %v1500, %v3424
      %v3434 = vsel %vm1509, %v3424, %v3426
      %v3451 = vunpack.c.l.b16 %v3193
      %v3452 = vunpack.c.h.b16 %v3193
      %v3453 = vunpack.c.l.b16 %v3194
      %v3454 = vunpack.c.l.b16 %v3195
      %v3455 = vunpack.c.h.b16 %v3195
      %v3456 = vunpack.c.l.b16 %v3196
      %v3457 = vunpack.c.l.b16 %v3197
      %v3458 = vunpack.c.h.b16 %v3197
      %v3459 = vunpack.c.l.b16 %v3198
      %v3460 = vunpack.c.l.b16 %v3199
      %v3461 = vunpack.c.h.b16 %v3199
      %v3462 = vunpack.c.l.b16 %v3200
      %v3463 = vunpack.c.l.b16 %v3201
      %v3464 = vunpack.c.h.b16 %v3201
      %v3465 = vunpack.c.l.b16 %v3202
      %v3466 = vunpack.c.l.b16 %v3203
      %v3467 = vunpack.c.h.b16 %v3203
      %v3468 = vunpack.c.l.b16 %v3204
      %v3469 = vunpack.c.l.b16 %v3205
      %v3470 = vunpack.c.h.b16 %v3205
      %v3471 = vunpack.c.l.b16 %v3206
      %v3472 = vunpack.c.l.b16 %v3207
      %v3473 = vunpack.c.h.b16 %v3207
      %v3474 = vunpack.c.l.b16 %v3208
      %v3475 = vpack.c.b16 %v3454, %v3451
      %v3476 = vpack.c.b16 %v3455, %v3452
      %v3477 = vpack.c.b16 %v3456, %v3453
      %v3478 = vpack.c.b16 %v3460, %v3457
      %v3479 = vpack.c.b16 %v3461, %v3458
      %v3480 = vpack.c.b16 %v3462, %v3459
      %v3481 = vpack.c.b16 %v3466, %v3463
      %v3482 = vpack.c.b16 %v3467, %v3464
      %v3483 = vpack.c.b16 %v3468, %v3465
      %v3484 = vpack.c.b16 %v3472, %v3469
      %v3485 = vpack.c.b16 %v3473, %v3470
      %v3486 = vpack.c.b16 %v3474, %v3471
      %3487 = vrot.lane.b32.xlu0 %v3475, 126
      %v3488 = vpop.permute.xlu0 %3487
      %3489 = vrot.lane.b32.xlu0 %v3476, 126
      %v3490 = vpop.permute.xlu0 %3489
      %3491 = vrot.lane.b32.xlu0 %v3477, 126
      %v3492 = vpop.permute.xlu0 %3491
      %3493 = vrot.lane.b32.xlu0 %v3478, 126
      %v3494 = vpop.permute.xlu0 %3493
      %3495 = vrot.lane.b32.xlu0 %v3479, 126
      %v3496 = vpop.permute.xlu0 %3495
      %3497 = vrot.lane.b32.xlu0 %v3480, 126
      %v3498 = vpop.permute.xlu0 %3497
      %3499 = vrot.lane.b32.xlu0 %v3481, 126
      %v3500 = vpop.permute.xlu0 %3499
      %3501 = vrot.lane.b32.xlu0 %v3482, 126
      %v3502 = vpop.permute.xlu0 %3501
      %3503 = vrot.lane.b32.xlu0 %v3483, 126
      %v3504 = vpop.permute.xlu0 %3503
      %3505 = vrot.lane.b32.xlu0 %v3484, 126
      %v3506 = vpop.permute.xlu0 %3505
      %3507 = vrot.lane.b32.xlu0 %v3485, 126
      %v3508 = vpop.permute.xlu0 %3507
      %3509 = vrot.lane.b32.xlu0 %v3486, 126
      %v3510 = vpop.permute.xlu0 %3509
      %v3511 = vsel %vm1552, %v3488, %v3490
      %v3512 = vsel %vm1552, %v3490, %v3492
      %v3513 = vsel %vm1552, %v3494, %v3496
      %v3514 = vsel %vm1552, %v3496, %v3498
      %v3515 = vsel %vm1552, %v3500, %v3502
      %v3516 = vsel %vm1552, %v3502, %v3504
      %v3517 = vsel %vm1552, %v3506, %v3508
      %v3518 = vsel %vm1552, %v3508, %v3510
      %v3535 = vunpack.c.l.b16 %v3235
      %v3536 = vunpack.c.h.b16 %v3235
      %v3537 = vunpack.c.l.b16 %v3236
      %v3538 = vunpack.c.l.b16 %v3237
      %v3539 = vunpack.c.h.b16 %v3237
      %v3540 = vunpack.c.l.b16 %v3238
      %v3541 = vunpack.c.l.b16 %v3239
      %v3542 = vunpack.c.h.b16 %v3239
      %v3543 = vunpack.c.l.b16 %v3240
      %v3544 = vunpack.c.l.b16 %v3241
      %v3545 = vunpack.c.h.b16 %v3241
      %v3546 = vunpack.c.l.b16 %v3242
      %v3547 = vunpack.c.l.b16 %v3243
      %v3548 = vunpack.c.h.b16 %v3243
      %v3549 = vunpack.c.l.b16 %v3244
      %v3550 = vunpack.c.l.b16 %v3245
      %v3551 = vunpack.c.h.b16 %v3245
      %v3552 = vunpack.c.l.b16 %v3246
      %v3553 = vunpack.c.l.b16 %v3247
      %v3554 = vunpack.c.h.b16 %v3247
      %v3555 = vunpack.c.l.b16 %v3248
      %v3556 = vunpack.c.l.b16 %v3249
      %v3557 = vunpack.c.h.b16 %v3249
      %v3558 = vunpack.c.l.b16 %v3250
      %v3559 = vpack.c.b16 %v3538, %v3535
      %v3560 = vpack.c.b16 %v3539, %v3536
      %v3561 = vpack.c.b16 %v3540, %v3537
      %v3562 = vpack.c.b16 %v3544, %v3541
      %v3563 = vpack.c.b16 %v3545, %v3542
      %v3564 = vpack.c.b16 %v3546, %v3543
      %v3565 = vpack.c.b16 %v3550, %v3547
      %v3566 = vpack.c.b16 %v3551, %v3548
      %v3567 = vpack.c.b16 %v3552, %v3549
      %v3568 = vpack.c.b16 %v3556, %v3553
      %v3569 = vpack.c.b16 %v3557, %v3554
      %v3570 = vpack.c.b16 %v3558, %v3555
      %3571 = vrot.lane.b32.xlu0 %v3559, 112
      %v3572 = vpop.permute.xlu0 %3571
      %3573 = vrot.lane.b32.xlu0 %v3560, 112
      %v3574 = vpop.permute.xlu0 %3573
      %3575 = vrot.lane.b32.xlu0 %v3561, 112
      %v3576 = vpop.permute.xlu0 %3575
      %3577 = vrot.lane.b32.xlu0 %v3562, 112
      %v3578 = vpop.permute.xlu0 %3577
      %3579 = vrot.lane.b32.xlu0 %v3563, 112
      %v3580 = vpop.permute.xlu0 %3579
      %3581 = vrot.lane.b32.xlu0 %v3564, 112
      %v3582 = vpop.permute.xlu0 %3581
      %3583 = vrot.lane.b32.xlu0 %v3565, 112
      %v3584 = vpop.permute.xlu0 %3583
      %3585 = vrot.lane.b32.xlu0 %v3566, 112
      %v3586 = vpop.permute.xlu0 %3585
      %3587 = vrot.lane.b32.xlu0 %v3567, 112
      %v3588 = vpop.permute.xlu0 %3587
      %3589 = vrot.lane.b32.xlu0 %v3568, 112
      %v3590 = vpop.permute.xlu0 %3589
      %3591 = vrot.lane.b32.xlu0 %v3569, 112
      %v3592 = vpop.permute.xlu0 %3591
      %3593 = vrot.lane.b32.xlu0 %v3570, 112
      %v3594 = vpop.permute.xlu0 %3593
      %v3595 = vsel %vm1595, %v3572, %v3574
      %v3596 = vsel %vm1595, %v3574, %v3576
      %v3597 = vsel %vm1595, %v3578, %v3580
      %v3598 = vsel %vm1595, %v3580, %v3582
      %v3599 = vsel %vm1595, %v3584, %v3586
      %v3600 = vsel %vm1595, %v3586, %v3588
      %v3601 = vsel %vm1595, %v3590, %v3592
      %v3602 = vsel %vm1595, %v3592, %v3594
      %3603 = vrot.lane.b32.xlu0 %v3067, 111
      %v3604 = vpop.permute.xlu0 %3603
      %3605 = vrot.lane.b32.xlu0 %v3068, 111
      %v3606 = vpop.permute.xlu0 %3605
      %3607 = vrot.lane.b32.xlu0 %v3069, 111
      %v3608 = vpop.permute.xlu0 %3607
      %3609 = vrot.lane.b32.xlu0 %v3070, 111
      %v3610 = vpop.permute.xlu0 %3609
      %3611 = vrot.lane.b32.xlu0 %v3071, 111
      %v3612 = vpop.permute.xlu0 %3611
      %3613 = vrot.lane.b32.xlu0 %v3072, 111
      %v3614 = vpop.permute.xlu0 %3613
      %3615 = vrot.lane.b32.xlu0 %v3073, 111
      %v3616 = vpop.permute.xlu0 %3615
      %3617 = vrot.lane.b32.xlu0 %v3074, 111
      %v3618 = vpop.permute.xlu0 %3617
      %v3619 = vsel %vm1608, %v3604, %v3606
      %v3620 = vsel %vm1608, %v3608, %v3610
      %v3621 = vsel %vm1608, %v3612, %v3614
      %v3622 = vsel %vm1608, %v3616, %v3618
      %v3633 = vunpack.c.l.b16 %v3277
      %v3634 = vunpack.c.h.b16 %v3277
      %v3635 = vunpack.c.l.b16 %v3278
      %v3636 = vunpack.c.l.b16 %v3279
      %v3637 = vunpack.c.h.b16 %v3279
      %v3638 = vunpack.c.l.b16 %v3280
      %v3639 = vunpack.c.l.b16 %v3281
      %v3640 = vunpack.c.h.b16 %v3281
      %v3641 = vunpack.c.l.b16 %v3282
      %v3642 = vunpack.c.h.b16 %v3282
      %v3643 = vunpack.c.l.b16 %v3283
      %v3644 = vunpack.c.h.b16 %v3283
      %v3645 = vunpack.c.l.b16 %v3284
      %v3646 = vunpack.c.h.b16 %v3284
      %v3647 = vunpack.c.l.b16 %v3285
      %v3648 = vunpack.c.h.b16 %v3285
      %v3649 = vunpack.c.l.b16 %v3286
      %v3650 = vunpack.c.h.b16 %v3286
      %v3651 = vpack.c.b16 %v3636, %v3633
      %v3652 = vpack.c.b16 %v3637, %v3634
      %v3653 = vpack.c.b16 %v3638, %v3635
      %v3654 = vpack.c.b16 %v3641, %v3639
      %v3655 = vpack.c.b16 %v3642, %v3640
      %v3656 = vpack.c.b16 %v3645, %v3643
      %v3657 = vpack.c.b16 %v3646, %v3644
      %v3658 = vpack.c.b16 %v3649, %v3647
      %v3659 = vpack.c.b16 %v3650, %v3648
      %3660 = vrot.lane.b32.xlu0 %v3651, 110
      %v3661 = vpop.permute.xlu0 %3660
      %3662 = vrot.lane.b32.xlu0 %v3652, 110
      %v3663 = vpop.permute.xlu0 %3662
      %3664 = vrot.lane.b32.xlu0 %v3653, 110
      %v3665 = vpop.permute.xlu0 %3664
      %3666 = vrot.lane.b32.xlu0 %v3654, 110
      %v3667 = vpop.permute.xlu0 %3666
      %3668 = vrot.lane.b32.xlu0 %v3655, 110
      %v3669 = vpop.permute.xlu0 %3668
      %3670 = vrot.lane.b32.xlu0 %v3656, 110
      %v3671 = vpop.permute.xlu0 %3670
      %3672 = vrot.lane.b32.xlu0 %v3657, 110
      %v3673 = vpop.permute.xlu0 %3672
      %3674 = vrot.lane.b32.xlu0 %v3658, 110
      %v3675 = vpop.permute.xlu0 %3674
      %3676 = vrot.lane.b32.xlu0 %v3659, 110
      %v3677 = vpop.permute.xlu0 %3676
      %v3678 = vsel %vm1642, %v3661, %v3663
      %v3679 = vsel %vm1642, %v3663, %v3665
      %v3680 = vsel %vm1642, %v3667, %v3669
      %v3681 = vsel %vm1642, %v3669, %v3665
      %v3682 = vsel %vm1642, %v3671, %v3673
      %v3683 = vsel %vm1642, %v3673, %v3665
      %v3684 = vsel %vm1642, %v3675, %v3677
      %v3685 = vsel %vm1642, %v3677, %v3665
      %v3696 = vunpack.c.l.b16 %v3313
      %v3697 = vunpack.c.h.b16 %v3313
      %v3698 = vunpack.c.l.b16 %v3314
      %v3699 = vunpack.c.l.b16 %v3315
      %v3700 = vunpack.c.h.b16 %v3315
      %v3701 = vunpack.c.l.b16 %v3316
      %v3702 = vunpack.c.l.b16 %v3317
      %v3703 = vunpack.c.h.b16 %v3317
      %v3704 = vunpack.c.l.b16 %v3318
      %v3705 = vunpack.c.h.b16 %v3318
      %v3706 = vunpack.c.l.b16 %v3319
      %v3707 = vunpack.c.h.b16 %v3319
      %v3708 = vunpack.c.l.b16 %v3320
      %v3709 = vunpack.c.h.b16 %v3320
      %v3710 = vunpack.c.l.b16 %v3321
      %v3711 = vunpack.c.h.b16 %v3321
      %v3712 = vunpack.c.l.b16 %v3322
      %v3713 = vunpack.c.h.b16 %v3322
      %v3714 = vpack.c.b16 %v3699, %v3696
      %v3715 = vpack.c.b16 %v3700, %v3697
      %v3716 = vpack.c.b16 %v3701, %v3698
      %v3717 = vpack.c.b16 %v3704, %v3702
      %v3718 = vpack.c.b16 %v3705, %v3703
      %v3719 = vpack.c.b16 %v3708, %v3706
      %v3720 = vpack.c.b16 %v3709, %v3707
      %v3721 = vpack.c.b16 %v3712, %v3710
      %v3722 = vpack.c.b16 %v3713, %v3711
      %3723 = vrot.lane.b32.xlu0 %v3714, 96
      %v3724 = vpop.permute.xlu0 %3723
      %3725 = vrot.lane.b32.xlu0 %v3715, 96
      %v3726 = vpop.permute.xlu0 %3725
      %3727 = vrot.lane.b32.xlu0 %v3716, 96
      %v3728 = vpop.permute.xlu0 %3727
      %3729 = vrot.lane.b32.xlu0 %v3717, 96
      %v3730 = vpop.permute.xlu0 %3729
      %3731 = vrot.lane.b32.xlu0 %v3718, 96
      %v3732 = vpop.permute.xlu0 %3731
      %3733 = vrot.lane.b32.xlu0 %v3719, 96
      %v3734 = vpop.permute.xlu0 %3733
      %3735 = vrot.lane.b32.xlu0 %v3720, 96
      %v3736 = vpop.permute.xlu0 %3735
      %3737 = vrot.lane.b32.xlu0 %v3721, 96
      %v3738 = vpop.permute.xlu0 %3737
      %3739 = vrot.lane.b32.xlu0 %v3722, 96
      %v3740 = vpop.permute.xlu0 %3739
      %v3741 = vsel %vm1678, %v3724, %v3726
      %v3742 = vsel %vm1678, %v3726, %v3728
      %v3743 = vsel %vm1678, %v3730, %v3732
      %v3744 = vsel %vm1678, %v3732, %v3728
      %v3745 = vsel %vm1678, %v3734, %v3736
      %v3746 = vsel %vm1678, %v3736, %v3728
      %v3747 = vsel %vm1678, %v3738, %v3740
      %v3748 = vsel %vm1678, %v3740, %v3728
      %3749 = vrot.lane.b32.xlu0 %v3067, 95
      %v3750 = vpop.permute.xlu0 %3749
      %3751 = vrot.lane.b32.xlu0 %v3068, 95
      %v3752 = vpop.permute.xlu0 %3751
      %3753 = vrot.lane.b32.xlu0 %v3069, 95
      %v3754 = vpop.permute.xlu0 %3753
      %3755 = vrot.lane.b32.xlu0 %v3070, 95
      %v3756 = vpop.permute.xlu0 %3755
      %3757 = vrot.lane.b32.xlu0 %v3071, 95
      %v3758 = vpop.permute.xlu0 %3757
      %3759 = vrot.lane.b32.xlu0 %v3072, 95
      %v3760 = vpop.permute.xlu0 %3759
      %3761 = vrot.lane.b32.xlu0 %v3073, 95
      %v3762 = vpop.permute.xlu0 %3761
      %3763 = vrot.lane.b32.xlu0 %v3074, 95
      %v3764 = vpop.permute.xlu0 %3763
      %v3765 = vsel %vm1693, %v3750, %v3752
      %v3766 = vsel %vm1693, %v3752, %v1688
      %v3767 = vsel %vm1693, %v3754, %v3756
      %v3768 = vsel %vm1693, %v3756, %v1688
      %v3769 = vsel %vm1693, %v3758, %v3760
      %v3770 = vsel %vm1693, %v3760, %v1688
      %v3771 = vsel %vm1693, %v3762, %v3764
      %v3772 = vsel %vm1693, %v3764, %v1688
      %v3783 = vunpack.c.l.b16 %v3349
      %v3784 = vunpack.c.h.b16 %v3349
      %v3785 = vunpack.c.l.b16 %v3350
      %v3786 = vunpack.c.l.b16 %v3351
      %v3787 = vunpack.c.h.b16 %v3351
      %v3788 = vunpack.c.l.b16 %v3352
      %v3789 = vunpack.c.l.b16 %v3353
      %v3790 = vunpack.c.h.b16 %v3353
      %v3791 = vunpack.c.l.b16 %v3354
      %v3792 = vunpack.c.h.b16 %v3354
      %v3793 = vunpack.c.l.b16 %v3355
      %v3794 = vunpack.c.h.b16 %v3355
      %v3795 = vunpack.c.l.b16 %v3356
      %v3796 = vunpack.c.h.b16 %v3356
      %v3797 = vunpack.c.l.b16 %v3357
      %v3798 = vunpack.c.h.b16 %v3357
      %v3799 = vunpack.c.l.b16 %v3358
      %v3800 = vunpack.c.h.b16 %v3358
      %v3801 = vpack.c.b16 %v3786, %v3783
      %v3802 = vpack.c.b16 %v3787, %v3784
      %v3803 = vpack.c.b16 %v3788, %v3785
      %v3804 = vpack.c.b16 %v3791, %v3789
      %v3805 = vpack.c.b16 %v3792, %v3790
      %v3806 = vpack.c.b16 %v3795, %v3793
      %v3807 = vpack.c.b16 %v3796, %v3794
      %v3808 = vpack.c.b16 %v3799, %v3797
      %v3809 = vpack.c.b16 %v3800, %v3798
      %3810 = vrot.lane.b32.xlu0 %v3801, 94
      %v3811 = vpop.permute.xlu0 %3810
      %3812 = vrot.lane.b32.xlu0 %v3802, 94
      %v3813 = vpop.permute.xlu0 %3812
      %3814 = vrot.lane.b32.xlu0 %v3803, 94
      %v3815 = vpop.permute.xlu0 %3814
      %3816 = vrot.lane.b32.xlu0 %v3804, 94
      %v3817 = vpop.permute.xlu0 %3816
      %3818 = vrot.lane.b32.xlu0 %v3805, 94
      %v3819 = vpop.permute.xlu0 %3818
      %3820 = vrot.lane.b32.xlu0 %v3806, 94
      %v3821 = vpop.permute.xlu0 %3820
      %3822 = vrot.lane.b32.xlu0 %v3807, 94
      %v3823 = vpop.permute.xlu0 %3822
      %3824 = vrot.lane.b32.xlu0 %v3808, 94
      %v3825 = vpop.permute.xlu0 %3824
      %3826 = vrot.lane.b32.xlu0 %v3809, 94
      %v3827 = vpop.permute.xlu0 %3826
      %v3828 = vsel %vm1729, %v3811, %v3813
      %v3829 = vsel %vm1729, %v3813, %v3815
      %v3830 = vsel %vm1729, %v3817, %v3819
      %v3831 = vsel %vm1729, %v3819, %v3815
      %v3832 = vsel %vm1729, %v3821, %v3823
      %v3833 = vsel %vm1729, %v3823, %v3815
      %v3834 = vsel %vm1729, %v3825, %v3827
      %v3835 = vsel %vm1729, %v3827, %v3815
      %v3836 = vld [vmem:[%s14] sm:$0xff]
      %v3837 = vld [vmem:[%s14 + $0x8] sm:$0xff]
      %v3838 = vld [vmem:[%s14 + $0x10] sm:$0xf]
      %v3839 = vld [vmem:[%s14 + $0x14] sm:$0xff]
      %v3840 = vld [vmem:[%s14 + $0x1c] sm:$0xff]
      %v3841 = vld [vmem:[%s14 + $0x24] sm:$0xf]
      %v3842 = vld [vmem:[%s14 + $0x28] sm:$0xff]
      %v3843 = vld [vmem:[%s14 + $0x30] sm:$0xff]
      %v3844 = vld [vmem:[%s14 + $0x38] sm:$0xf]
      %v3845 = vld [vmem:[%s14 + $0x3c] sm:$0xff]
      %v3846 = vld [vmem:[%s14 + $0x44] sm:$0xff]
      %v3847 = vld [vmem:[%s14 + $0x4c] sm:$0xf]
      %v3848 = vld [vmem:[%s14 + $0x50] sm:$0xff]
      %v3849 = vld [vmem:[%s14 + $0x58] sm:$0xff]
      %v3850 = vld [vmem:[%s14 + $0x60] sm:$0xf]
      %v3851 = vld [vmem:[%s14 + $0x64] sm:$0xff]
      %v3852 = vld [vmem:[%s14 + $0x6c] sm:$0xff]
      %v3853 = vld [vmem:[%s14 + $0x74] sm:$0xf]
      %v3854 = vld [vmem:[%s14 + $0x78] sm:$0xff]
      %v3855 = vld [vmem:[%s14 + $0x80] sm:$0xff]
      %v3856 = vld [vmem:[%s14 + $0x88] sm:$0xf]
      %v3857 = vld [vmem:[%s14 + $0x8c] sm:$0xff]
      %v3858 = vld [vmem:[%s14 + $0x94] sm:$0xff]
      %v3859 = vld [vmem:[%s14 + $0x9c] sm:$0xf]
      %3861 = vset.pattern.permute.xlu0 0
      %3862 = vperm.xlu0 %3861, %v3027
      %v3863 = vpop.permute.xlu0 %3862
      %3866 = vset.pattern.permute.xlu0 0
      %3867 = vperm.xlu0 %3866, %v3028
      %v3868 = vpop.permute.xlu0 %3867
      %3871 = vset.pattern.permute.xlu0 0
      %3872 = vperm.xlu0 %3871, %v3029
      %v3873 = vpop.permute.xlu0 %3872
      %3876 = vset.pattern.permute.xlu0 0
      %3877 = vperm.xlu0 %3876, %v3030
      %v3878 = vpop.permute.xlu0 %3877
      %3881 = vset.pattern.permute.xlu0 0
      %3882 = vperm.xlu0 %3881, %v3031
      %v3883 = vpop.permute.xlu0 %3882
      %3886 = vset.pattern.permute.xlu0 0
      %3887 = vperm.xlu0 %3886, %v3032
      %v3888 = vpop.permute.xlu0 %3887
      %3891 = vset.pattern.permute.xlu0 0
      %3892 = vperm.xlu0 %3891, %v3033
      %v3893 = vpop.permute.xlu0 %3892
      %3896 = vset.pattern.permute.xlu0 0
      %3897 = vperm.xlu0 %3896, %v3034
      %v3898 = vpop.permute.xlu0 %3897
      %v3924 = vunpack.c.l.b16 %v3836
      %v3925 = vunpack.c.h.b16 %v3836
      %v3926 = vunpack.c.l.b16 %v3837
      %v3927 = vunpack.c.h.b16 %v3837
      %v3928 = vunpack.c.l.b16 %v3838
      %v3929 = vunpack.c.l.b16 %v3839
      %v3930 = vunpack.c.h.b16 %v3839
      %v3931 = vunpack.c.l.b16 %v3840
      %v3932 = vunpack.c.h.b16 %v3840
      %v3933 = vunpack.c.l.b16 %v3841
      %v3934 = vunpack.c.l.b16 %v3842
      %v3935 = vunpack.c.h.b16 %v3842
      %v3936 = vunpack.c.l.b16 %v3843
      %v3937 = vunpack.c.h.b16 %v3843
      %v3938 = vunpack.c.l.b16 %v3844
      %v3939 = vunpack.c.l.b16 %v3845
      %v3940 = vunpack.c.h.b16 %v3845
      %v3941 = vunpack.c.l.b16 %v3846
      %v3942 = vunpack.c.h.b16 %v3846
      %v3943 = vunpack.c.l.b16 %v3847
      %v3944 = vunpack.c.l.b16 %v3848
      %v3945 = vunpack.c.h.b16 %v3848
      %v3946 = vunpack.c.l.b16 %v3849
      %v3947 = vunpack.c.h.b16 %v3849
      %v3948 = vunpack.c.l.b16 %v3850
      %v3949 = vunpack.c.l.b16 %v3851
      %v3950 = vunpack.c.h.b16 %v3851
      %v3951 = vunpack.c.l.b16 %v3852
      %v3952 = vunpack.c.h.b16 %v3852
      %v3953 = vunpack.c.l.b16 %v3853
      %v3954 = vunpack.c.l.b16 %v3854
      %v3955 = vunpack.c.h.b16 %v3854
      %v3956 = vunpack.c.l.b16 %v3855
      %v3957 = vunpack.c.h.b16 %v3855
      %v3958 = vunpack.c.l.b16 %v3856
      %v3959 = vunpack.c.l.b16 %v3857
      %v3960 = vunpack.c.h.b16 %v3857
      %v3961 = vunpack.c.l.b16 %v3858
      %v3962 = vunpack.c.h.b16 %v3858
      %v3963 = vunpack.c.l.b16 %v3859
      %v3964 = vpack.c.b16 %v3929, %v3924
      %v3965 = vpack.c.b16 %v3930, %v3925
      %v3966 = vpack.c.b16 %v3931, %v3926
      %v3967 = vpack.c.b16 %v3932, %v3927
      %v3968 = vpack.c.b16 %v3933, %v3928
      %v3969 = vpack.c.b16 %v3939, %v3934
      %v3970 = vpack.c.b16 %v3940, %v3935
      %v3971 = vpack.c.b16 %v3941, %v3936
      %v3972 = vpack.c.b16 %v3942, %v3937
      %v3973 = vpack.c.b16 %v3943, %v3938
      %v3974 = vpack.c.b16 %v3949, %v3944
      %v3975 = vpack.c.b16 %v3950, %v3945
      %v3976 = vpack.c.b16 %v3951, %v3946
      %v3977 = vpack.c.b16 %v3952, %v3947
      %v3978 = vpack.c.b16 %v3953, %v3948
      %v3979 = vpack.c.b16 %v3959, %v3954
      %v3980 = vpack.c.b16 %v3960, %v3955
      %v3981 = vpack.c.b16 %v3961, %v3956
      %v3982 = vpack.c.b16 %v3962, %v3957
      %v3983 = vpack.c.b16 %v3963, %v3958
      %4000 = vrot.lane.b32.xlu0 %v3399, 17
      %v4001 = vpop.permute.xlu0 %4000
      %4002 = vrot.lane.b32.xlu0 %v3400, 17
      %v4003 = vpop.permute.xlu0 %4002
      %4004 = vrot.lane.b32.xlu0 %v3401, 17
      %v4005 = vpop.permute.xlu0 %4004
      %4006 = vrot.lane.b32.xlu0 %v3402, 17
      %v4007 = vpop.permute.xlu0 %4006
      %4008 = vrot.lane.b32.xlu0 %v3403, 17
      %v4009 = vpop.permute.xlu0 %4008
      %4010 = vrot.lane.b32.xlu0 %v3404, 17
      %v4011 = vpop.permute.xlu0 %4010
      %4012 = vrot.lane.b32.xlu0 %v3405, 17
      %v4013 = vpop.permute.xlu0 %4012
      %4014 = vrot.lane.b32.xlu0 %v3406, 17
      %v4015 = vpop.permute.xlu0 %4014
      %4016 = vrot.lane.b32.xlu0 %v3407, 17
      %v4017 = vpop.permute.xlu0 %4016
      %4018 = vrot.lane.b32.xlu0 %v3408, 17
      %v4019 = vpop.permute.xlu0 %4018
      %4020 = vrot.lane.b32.xlu0 %v3409, 17
      %v4021 = vpop.permute.xlu0 %4020
      %4022 = vrot.lane.b32.xlu0 %v3410, 17
      %v4023 = vpop.permute.xlu0 %4022
      %4024 = vrot.lane.b32.xlu0 %v3427, 17
      %v4025 = vpop.permute.xlu0 %4024
      %4026 = vrot.lane.b32.xlu0 %v3428, 17
      %v4027 = vpop.permute.xlu0 %4026
      %4028 = vrot.lane.b32.xlu0 %v3414, 17
      %v4029 = vpop.permute.xlu0 %4028
      %4030 = vrot.lane.b32.xlu0 %v3429, 17
      %v4031 = vpop.permute.xlu0 %4030
      %4032 = vrot.lane.b32.xlu0 %v3430, 17
      %v4033 = vpop.permute.xlu0 %4032
      %4034 = vrot.lane.b32.xlu0 %v3418, 17
      %v4035 = vpop.permute.xlu0 %4034
      %4036 = vrot.lane.b32.xlu0 %v3431, 17
      %v4037 = vpop.permute.xlu0 %4036
      %4038 = vrot.lane.b32.xlu0 %v3432, 17
      %v4039 = vpop.permute.xlu0 %4038
      %4040 = vrot.lane.b32.xlu0 %v3422, 17
      %v4041 = vpop.permute.xlu0 %4040
      %4042 = vrot.lane.b32.xlu0 %v3433, 17
      %v4043 = vpop.permute.xlu0 %4042
      %4044 = vrot.lane.b32.xlu0 %v3434, 17
      %v4045 = vpop.permute.xlu0 %4044
      %4046 = vrot.lane.b32.xlu0 %v3426, 17
      %v4047 = vpop.permute.xlu0 %4046
      %4048 = vrot.lane.b32.xlu0 %v3511, 17
      %v4049 = vpop.permute.xlu0 %4048
      %4050 = vrot.lane.b32.xlu0 %v3512, 17
      %v4051 = vpop.permute.xlu0 %4050
      %4052 = vrot.lane.b32.xlu0 %v3492, 17
      %v4053 = vpop.permute.xlu0 %4052
      %4054 = vrot.lane.b32.xlu0 %v3513, 17
      %v4055 = vpop.permute.xlu0 %4054
      %4056 = vrot.lane.b32.xlu0 %v3514, 17
      %v4057 = vpop.permute.xlu0 %4056
      %4058 = vrot.lane.b32.xlu0 %v3498, 17
      %v4059 = vpop.permute.xlu0 %4058
      %4060 = vrot.lane.b32.xlu0 %v3515, 17
      %v4061 = vpop.permute.xlu0 %4060
      %4062 = vrot.lane.b32.xlu0 %v3516, 17
      %v4063 = vpop.permute.xlu0 %4062
      %4064 = vrot.lane.b32.xlu0 %v3504, 17
      %v4065 = vpop.permute.xlu0 %4064
      %4066 = vrot.lane.b32.xlu0 %v3517, 17
      %v4067 = vpop.permute.xlu0 %4066
      %4068 = vrot.lane.b32.xlu0 %v3518, 17
      %v4069 = vpop.permute.xlu0 %4068
      %4070 = vrot.lane.b32.xlu0 %v3510, 17
      %v4071 = vpop.permute.xlu0 %4070
      %4072 = vrot.lane.b32.xlu0 %v3595, 17
      %v4073 = vpop.permute.xlu0 %4072
      %4074 = vrot.lane.b32.xlu0 %v3596, 17
      %v4075 = vpop.permute.xlu0 %4074
      %4076 = vrot.lane.b32.xlu0 %v3576, 17
      %v4077 = vpop.permute.xlu0 %4076
      %4078 = vrot.lane.b32.xlu0 %v3597, 17
      %v4079 = vpop.permute.xlu0 %4078
      %4080 = vrot.lane.b32.xlu0 %v3598, 17
      %v4081 = vpop.permute.xlu0 %4080
      %4082 = vrot.lane.b32.xlu0 %v3582, 17
      %v4083 = vpop.permute.xlu0 %4082
      %4084 = vrot.lane.b32.xlu0 %v3599, 17
      %v4085 = vpop.permute.xlu0 %4084
      %4086 = vrot.lane.b32.xlu0 %v3600, 17
      %v4087 = vpop.permute.xlu0 %4086
      %4088 = vrot.lane.b32.xlu0 %v3588, 17
      %v4089 = vpop.permute.xlu0 %4088
      %4090 = vrot.lane.b32.xlu0 %v3601, 17
      %v4091 = vpop.permute.xlu0 %4090
      %4092 = vrot.lane.b32.xlu0 %v3602, 17
      %v4093 = vpop.permute.xlu0 %4092
      %4094 = vrot.lane.b32.xlu0 %v3594, 17
      %v4095 = vpop.permute.xlu0 %4094
      %4096 = vrot.lane.b32.xlu0 %v3604, 17
      %v4097 = vpop.permute.xlu0 %4096
      %4098 = vrot.lane.b32.xlu0 %v3619, 17
      %v4099 = vpop.permute.xlu0 %4098
      %4100 = vrot.lane.b32.xlu0 %v3606, 17
      %v4101 = vpop.permute.xlu0 %4100
      %4102 = vrot.lane.b32.xlu0 %v3608, 17
      %v4103 = vpop.permute.xlu0 %4102
      %4104 = vrot.lane.b32.xlu0 %v3620, 17
      %v4105 = vpop.permute.xlu0 %4104
      %4106 = vrot.lane.b32.xlu0 %v3610, 17
      %v4107 = vpop.permute.xlu0 %4106
      %4108 = vrot.lane.b32.xlu0 %v3612, 17
      %v4109 = vpop.permute.xlu0 %4108
      %4110 = vrot.lane.b32.xlu0 %v3621, 17
      %v4111 = vpop.permute.xlu0 %4110
      %4112 = vrot.lane.b32.xlu0 %v3614, 17
      %v4113 = vpop.permute.xlu0 %4112
      %4114 = vrot.lane.b32.xlu0 %v3616, 17
      %v4115 = vpop.permute.xlu0 %4114
      %4116 = vrot.lane.b32.xlu0 %v3622, 17
      %v4117 = vpop.permute.xlu0 %4116
      %4118 = vrot.lane.b32.xlu0 %v3618, 17
      %v4119 = vpop.permute.xlu0 %4118
      %4120 = vrot.lane.b32.xlu0 %v3661, 17
      %v4121 = vpop.permute.xlu0 %4120
      %4122 = vrot.lane.b32.xlu0 %v3678, 17
      %v4123 = vpop.permute.xlu0 %4122
      %4124 = vrot.lane.b32.xlu0 %v3679, 17
      %v4125 = vpop.permute.xlu0 %4124
      %4126 = vrot.lane.b32.xlu0 %v3667, 17
      %v4127 = vpop.permute.xlu0 %4126
      %4128 = vrot.lane.b32.xlu0 %v3680, 17
      %v4129 = vpop.permute.xlu0 %4128
      %4130 = vrot.lane.b32.xlu0 %v3681, 17
      %v4131 = vpop.permute.xlu0 %4130
      %4132 = vrot.lane.b32.xlu0 %v3671, 17
      %v4133 = vpop.permute.xlu0 %4132
      %4134 = vrot.lane.b32.xlu0 %v3682, 17
      %v4135 = vpop.permute.xlu0 %4134
      %4136 = vrot.lane.b32.xlu0 %v3683, 17
      %v4137 = vpop.permute.xlu0 %4136
      %4138 = vrot.lane.b32.xlu0 %v3675, 17
      %v4139 = vpop.permute.xlu0 %4138
      %4140 = vrot.lane.b32.xlu0 %v3684, 17
      %v4141 = vpop.permute.xlu0 %4140
      %4142 = vrot.lane.b32.xlu0 %v3685, 17
      %v4143 = vpop.permute.xlu0 %4142
      %4144 = vrot.lane.b32.xlu0 %v3724, 17
      %v4145 = vpop.permute.xlu0 %4144
      %4146 = vrot.lane.b32.xlu0 %v3741, 17
      %v4147 = vpop.permute.xlu0 %4146
      %4148 = vrot.lane.b32.xlu0 %v3742, 17
      %v4149 = vpop.permute.xlu0 %4148
      %4150 = vrot.lane.b32.xlu0 %v3730, 17
      %v4151 = vpop.permute.xlu0 %4150
      %4152 = vrot.lane.b32.xlu0 %v3743, 17
      %v4153 = vpop.permute.xlu0 %4152
      %4154 = vrot.lane.b32.xlu0 %v3744, 17
      %v4155 = vpop.permute.xlu0 %4154
      %4156 = vrot.lane.b32.xlu0 %v3734, 17
      %v4157 = vpop.permute.xlu0 %4156
      %4158 = vrot.lane.b32.xlu0 %v3745, 17
      %v4159 = vpop.permute.xlu0 %4158
      %4160 = vrot.lane.b32.xlu0 %v3746, 17
      %v4161 = vpop.permute.xlu0 %4160
      %4162 = vrot.lane.b32.xlu0 %v3738, 17
      %v4163 = vpop.permute.xlu0 %4162
      %4164 = vrot.lane.b32.xlu0 %v3747, 17
      %v4165 = vpop.permute.xlu0 %4164
      %4166 = vrot.lane.b32.xlu0 %v3748, 17
      %v4167 = vpop.permute.xlu0 %4166
      %4168 = vrot.lane.b32.xlu0 %v3750, 17
      %v4169 = vpop.permute.xlu0 %4168
      %4170 = vrot.lane.b32.xlu0 %v3765, 17
      %v4171 = vpop.permute.xlu0 %4170
      %4172 = vrot.lane.b32.xlu0 %v3766, 17
      %v4173 = vpop.permute.xlu0 %4172
      %4174 = vrot.lane.b32.xlu0 %v3754, 17
      %v4175 = vpop.permute.xlu0 %4174
      %4176 = vrot.lane.b32.xlu0 %v3767, 17
      %v4177 = vpop.permute.xlu0 %4176
      %4178 = vrot.lane.b32.xlu0 %v3768, 17
      %v4179 = vpop.permute.xlu0 %4178
      %4180 = vrot.lane.b32.xlu0 %v3758, 17
      %v4181 = vpop.permute.xlu0 %4180
      %4182 = vrot.lane.b32.xlu0 %v3769, 17
      %v4183 = vpop.permute.xlu0 %4182
      %4184 = vrot.lane.b32.xlu0 %v3770, 17
      %v4185 = vpop.permute.xlu0 %4184
      %4186 = vrot.lane.b32.xlu0 %v3762, 17
      %v4187 = vpop.permute.xlu0 %4186
      %4188 = vrot.lane.b32.xlu0 %v3771, 17
      %v4189 = vpop.permute.xlu0 %4188
      %4190 = vrot.lane.b32.xlu0 %v3772, 17
      %v4191 = vpop.permute.xlu0 %4190
      %4192 = vrot.lane.b32.xlu0 %v3811, 17
      %v4193 = vpop.permute.xlu0 %4192
      %4194 = vrot.lane.b32.xlu0 %v3828, 17
      %v4195 = vpop.permute.xlu0 %4194
      %4196 = vrot.lane.b32.xlu0 %v3829, 17
      %v4197 = vpop.permute.xlu0 %4196
      %4198 = vrot.lane.b32.xlu0 %v3817, 17
      %v4199 = vpop.permute.xlu0 %4198
      %4200 = vrot.lane.b32.xlu0 %v3830, 17
      %v4201 = vpop.permute.xlu0 %4200
      %4202 = vrot.lane.b32.xlu0 %v3831, 17
      %v4203 = vpop.permute.xlu0 %4202
      %4204 = vrot.lane.b32.xlu0 %v3821, 17
      %v4205 = vpop.permute.xlu0 %4204
      %4206 = vrot.lane.b32.xlu0 %v3832, 17
      %v4207 = vpop.permute.xlu0 %4206
      %4208 = vrot.lane.b32.xlu0 %v3833, 17
      %v4209 = vpop.permute.xlu0 %4208
      %4210 = vrot.lane.b32.xlu0 %v3825, 17
      %v4211 = vpop.permute.xlu0 %4210
      %4212 = vrot.lane.b32.xlu0 %v3834, 17
      %v4213 = vpop.permute.xlu0 %4212
      %4214 = vrot.lane.b32.xlu0 %v3835, 17
      %v4215 = vpop.permute.xlu0 %4214
      %v4216 = vsel %vm1958, %v4001, %v4003
      %v4217 = vsel %vm1958, %v4003, %v4005
      %v4218 = vsel %vm1958, %v4007, %v4009
      %v4219 = vsel %vm1958, %v4009, %v4011
      %v4220 = vsel %vm1958, %v4013, %v4015
      %v4221 = vsel %vm1958, %v4015, %v4017
      %v4222 = vsel %vm1958, %v4019, %v4021
      %v4223 = vsel %vm1958, %v4021, %v4023
      %v4224 = vsel %vm1958, %v4025, %v4027
      %v4225 = vsel %vm1958, %v4027, %v4029
      %v4226 = vsel %vm1958, %v4031, %v4033
      %v4227 = vsel %vm1958, %v4033, %v4035
      %v4228 = vsel %vm1958, %v4037, %v4039
      %v4229 = vsel %vm1958, %v4039, %v4041
      %v4230 = vsel %vm1958, %v4043, %v4045
      %v4231 = vsel %vm1958, %v4045, %v4047
      %v4232 = vsel %vm1958, %v4049, %v4051
      %v4233 = vsel %vm1958, %v4051, %v4053
      %v4234 = vsel %vm1958, %v4055, %v4057
      %v4235 = vsel %vm1958, %v4057, %v4059
      %v4236 = vsel %vm1958, %v4061, %v4063
      %v4237 = vsel %vm1958, %v4063, %v4065
      %v4238 = vsel %vm1958, %v4067, %v4069
      %v4239 = vsel %vm1958, %v4069, %v4071
      %v4240 = vsel %vm1958, %v4073, %v4075
      %v4241 = vsel %vm1958, %v4075, %v4077
      %v4242 = vsel %vm1958, %v4079, %v4081
      %v4243 = vsel %vm1958, %v4081, %v4083
      %v4244 = vsel %vm1958, %v4085, %v4087
      %v4245 = vsel %vm1958, %v4087, %v4089
      %v4246 = vsel %vm1958, %v4091, %v4093
      %v4247 = vsel %vm1958, %v4093, %v4095
      %v4248 = vsel %vm1958, %v4097, %v4099
      %v4249 = vsel %vm1958, %v4099, %v4101
      %v4250 = vsel %vm1958, %v4103, %v4105
      %v4251 = vsel %vm1958, %v4105, %v4107
      %v4252 = vsel %vm1958, %v4109, %v4111
      %v4253 = vsel %vm1958, %v4111, %v4113
      %v4254 = vsel %vm1958, %v4115, %v4117
      %v4255 = vsel %vm1958, %v4117, %v4119
      %v4256 = vsel %vm1958, %v4121, %v4123
      %v4257 = vsel %vm1958, %v4123, %v4125
      %v4258 = vsel %vm1958, %v4127, %v4129
      %v4259 = vsel %vm1958, %v4129, %v4131
      %v4260 = vsel %vm1958, %v4133, %v4135
      %v4261 = vsel %vm1958, %v4135, %v4137
      %v4262 = vsel %vm1958, %v4139, %v4141
      %v4263 = vsel %vm1958, %v4141, %v4143
      %v4264 = vsel %vm1958, %v4145, %v4147
      %v4265 = vsel %vm1958, %v4147, %v4149
      %v4266 = vsel %vm1958, %v4151, %v4153
      %v4267 = vsel %vm1958, %v4153, %v4155
      %v4268 = vsel %vm1958, %v4157, %v4159
      %v4269 = vsel %vm1958, %v4159, %v4161
      %v4270 = vsel %vm1958, %v4163, %v4165
      %v4271 = vsel %vm1958, %v4165, %v4167
      %v4272 = vsel %vm1958, %v4169, %v4171
      %v4273 = vsel %vm1958, %v4171, %v4173
      %v4274 = vsel %vm1958, %v4175, %v4177
      %v4275 = vsel %vm1958, %v4177, %v4179
      %v4276 = vsel %vm1958, %v4181, %v4183
      %v4277 = vsel %vm1958, %v4183, %v4185
      %v4278 = vsel %vm1958, %v4187, %v4189
      %v4279 = vsel %vm1958, %v4189, %v4191
      %v4280 = vsel %vm1958, %v4193, %v4195
      %v4281 = vsel %vm1958, %v4195, %v4197
      %v4282 = vsel %vm1958, %v4199, %v4201
      %v4283 = vsel %vm1958, %v4201, %v4203
      %v4284 = vsel %vm1958, %v4205, %v4207
      %v4285 = vsel %vm1958, %v4207, %v4209
      %v4286 = vsel %vm1958, %v4211, %v4213
      %v4287 = vsel %vm1958, %v4213, %v4215
      %v4361 = vsel %vm2313, %v3968, 0
      %v4364 = vsel %vm2313, %v3973, 0
      %v4367 = vsel %vm2313, %v3978, 0
      %v4370 = vsel %vm2313, %v3983, 0
      %4372 = vmatpush.bf16.msra.mxu0 %v4230
      %4373 = vmatpush.bf16.msra.mxu0 %v4228
      %4374 = vmatpush.bf16.msra.mxu0 %v4226
      %4375 = vmatpush.bf16.msra.mxu0 %v4224
      %4376 = vmatpush.bf16.msra.mxu0 %v4222
      %4377 = vmatpush.bf16.msra.mxu0 %v4220
      %4378 = vmatpush.bf16.msra.mxu0 %v4218
      %4379 = vmatpush.bf16.msra.mxu0 %v4216
      %4380 = vmatmul.bf16.gmra.mxu0 %v3964
      %v4381 = vpop.f32.mrf.mxu0
      %v4382 = vadd.f32 %v3863, %v4381
      %v4383 = vpop.f32.mrf.mxu0
      %v4384 = vadd.f32 %v3868, %v4383
      %4385 = vmatmul.bf16.gmra.mxu0 %v3969
      %v4386 = vpop.f32.mrf.mxu0
      %v4387 = vadd.f32 %v3873, %v4386
      %v4388 = vpop.f32.mrf.mxu0
      %v4389 = vadd.f32 %v3878, %v4388
      %4390 = vmatmul.bf16.gmra.mxu0 %v3974
      %v4391 = vpop.f32.mrf.mxu0
      %v4392 = vadd.f32 %v3883, %v4391
      %v4393 = vpop.f32.mrf.mxu0
      %v4394 = vadd.f32 %v3888, %v4393
      %4395 = vmatmul.bf16.gmra.mxu0 %v3979
      %v4396 = vpop.f32.mrf.mxu0
      %v4397 = vadd.f32 %v3893, %v4396
      %v4398 = vpop.f32.mrf.mxu0
      %v4399 = vadd.f32 %v3898, %v4398
      %4400 = vdwg.mxu0
      %4401 = vmatpush.bf16.msra.mxu0 %v4246
      %4402 = vmatpush.bf16.msra.mxu0 %v4244
      %4403 = vmatpush.bf16.msra.mxu0 %v4242
      %4404 = vmatpush.bf16.msra.mxu0 %v4240
      %4405 = vmatpush.bf16.msra.mxu0 %v4238
      %4406 = vmatpush.bf16.msra.mxu0 %v4236
      %4407 = vmatpush.bf16.msra.mxu0 %v4234
      %4408 = vmatpush.bf16.msra.mxu0 %v4232
      %4409 = vmatmul.bf16.gmra.mxu0 %v3965
      %v4410 = vpop.f32.mrf.mxu0
      %v4411 = vadd.f32 %v4382, %v4410
      %v4412 = vpop.f32.mrf.mxu0
      %v4413 = vadd.f32 %v4384, %v4412
      %4414 = vmatmul.bf16.gmra.mxu0 %v3970
      %v4415 = vpop.f32.mrf.mxu0
      %v4416 = vadd.f32 %v4387, %v4415
      %v4417 = vpop.f32.mrf.mxu0
      %v4418 = vadd.f32 %v4389, %v4417
      %4419 = vmatmul.bf16.gmra.mxu0 %v3975
      %v4420 = vpop.f32.mrf.mxu0
      %v4421 = vadd.f32 %v4392, %v4420
      %v4422 = vpop.f32.mrf.mxu0
      %v4423 = vadd.f32 %v4394, %v4422
      %4424 = vmatmul.bf16.gmra.mxu0 %v3980
      %v4425 = vpop.f32.mrf.mxu0
      %v4426 = vadd.f32 %v4397, %v4425
      %v4427 = vpop.f32.mrf.mxu0
      %v4428 = vadd.f32 %v4399, %v4427
      %4429 = vdwg.mxu0
      %4430 = vmatpush.bf16.msra.mxu0 %v4262
      %4431 = vmatpush.bf16.msra.mxu0 %v4260
      %4432 = vmatpush.bf16.msra.mxu0 %v4258
      %4433 = vmatpush.bf16.msra.mxu0 %v4256
      %4434 = vmatpush.bf16.msra.mxu0 %v4254
      %4435 = vmatpush.bf16.msra.mxu0 %v4252
      %4436 = vmatpush.bf16.msra.mxu0 %v4250
      %4437 = vmatpush.bf16.msra.mxu0 %v4248
      %4438 = vmatmul.bf16.gmra.mxu0 %v3966
      %v4439 = vpop.f32.mrf.mxu0
      %v4440 = vadd.f32 %v4411, %v4439
      %v4441 = vpop.f32.mrf.mxu0
      %v4442 = vadd.f32 %v4413, %v4441
      %4443 = vmatmul.bf16.gmra.mxu0 %v3971
      %v4444 = vpop.f32.mrf.mxu0
      %v4445 = vadd.f32 %v4416, %v4444
      %v4446 = vpop.f32.mrf.mxu0
      %v4447 = vadd.f32 %v4418, %v4446
      %4448 = vmatmul.bf16.gmra.mxu0 %v3976
      %v4449 = vpop.f32.mrf.mxu0
      %v4450 = vadd.f32 %v4421, %v4449
      %v4451 = vpop.f32.mrf.mxu0
      %v4452 = vadd.f32 %v4423, %v4451
      %4453 = vmatmul.bf16.gmra.mxu0 %v3981
      %v4454 = vpop.f32.mrf.mxu0
      %v4455 = vadd.f32 %v4426, %v4454
      %v4456 = vpop.f32.mrf.mxu0
      %v4457 = vadd.f32 %v4428, %v4456
      %4458 = vdwg.mxu0
      %4459 = vmatpush.bf16.msra.mxu0 %v4278
      %4460 = vmatpush.bf16.msra.mxu0 %v4276
      %4461 = vmatpush.bf16.msra.mxu0 %v4274
      %4462 = vmatpush.bf16.msra.mxu0 %v4272
      %4463 = vmatpush.bf16.msra.mxu0 %v4270
      %4464 = vmatpush.bf16.msra.mxu0 %v4268
      %4465 = vmatpush.bf16.msra.mxu0 %v4266
      %4466 = vmatpush.bf16.msra.mxu0 %v4264
      %4467 = vmatmul.bf16.gmra.mxu0 %v3967
      %v4468 = vpop.f32.mrf.mxu0
      %v4469 = vadd.f32 %v4440, %v4468
      %v4470 = vpop.f32.mrf.mxu0
      %v4471 = vadd.f32 %v4442, %v4470
      %4472 = vmatmul.bf16.gmra.mxu0 %v3972
      %v4473 = vpop.f32.mrf.mxu0
      %v4474 = vadd.f32 %v4445, %v4473
      %v4475 = vpop.f32.mrf.mxu0
      %v4476 = vadd.f32 %v4447, %v4475
      %4477 = vmatmul.bf16.gmra.mxu0 %v3977
      %v4478 = vpop.f32.mrf.mxu0
      %v4479 = vadd.f32 %v4450, %v4478
      %v4480 = vpop.f32.mrf.mxu0
      %v4481 = vadd.f32 %v4452, %v4480
      %4482 = vmatmul.bf16.gmra.mxu0 %v3982
      %v4483 = vpop.f32.mrf.mxu0
      %v4484 = vadd.f32 %v4455, %v4483
      %v4485 = vpop.f32.mrf.mxu0
      %v4486 = vadd.f32 %v4457, %v4485
      %4487 = vdwg.mxu0
      %4488 = vmatpush.bf16.msra.mxu0 0
      %4489 = vmatpush.bf16.msra.mxu0 0
      %4490 = vmatpush.bf16.msra.mxu0 0
      %4491 = vmatpush.bf16.msra.mxu0 0
      %4492 = vmatpush.bf16.msra.mxu0 %v4286
      %4493 = vmatpush.bf16.msra.mxu0 %v4284
      %4494 = vmatpush.bf16.msra.mxu0 %v4282
      %4495 = vmatpush.bf16.msra.mxu0 %v4280
      %4496 = vmatmul.bf16.gmra.mxu0 %v4361
      %v4497 = vpop.f32.mrf.mxu0
      %v4498 = vadd.f32 %v4469, %v4497
      %v4499 = vpop.f32.mrf.mxu0
      %v4500 = vadd.f32 %v4471, %v4499
      %4501 = vmatmul.bf16.gmra.mxu0 %v4364
      %v4502 = vpop.f32.mrf.mxu0
      %v4503 = vadd.f32 %v4474, %v4502
      %v4504 = vpop.f32.mrf.mxu0
      %v4505 = vadd.f32 %v4476, %v4504
      %4506 = vmatmul.bf16.gmra.mxu0 %v4367
      %v4507 = vpop.f32.mrf.mxu0
      %v4508 = vadd.f32 %v4479, %v4507
      %v4509 = vpop.f32.mrf.mxu0
      %v4510 = vadd.f32 %v4481, %v4509
      %4511 = vmatmul.bf16.gmra.mxu0 %v4370
      %v4512 = vpop.f32.mrf.mxu0
      %v4513 = vadd.f32 %v4484, %v4512
      %v4514 = vpop.f32.mrf.mxu0
      %v4515 = vadd.f32 %v4486, %v4514
      %4516 = vdwg.mxu0
      %4517 = vmatpush.bf16.msra.mxu0 %v4231
      %4518 = vmatpush.bf16.msra.mxu0 %v4229
      %4519 = vmatpush.bf16.msra.mxu0 %v4227
      %4520 = vmatpush.bf16.msra.mxu0 %v4225
      %4521 = vmatpush.bf16.msra.mxu0 %v4223
      %4522 = vmatpush.bf16.msra.mxu0 %v4221
      %4523 = vmatpush.bf16.msra.mxu0 %v4219
      %4524 = vmatpush.bf16.msra.mxu0 %v4217
      %4525 = vmatmul.bf16.gmra.mxu0 %v3964
      %v4526 = vpop.f32.mrf.mxu0
      %v4527 = vadd.f32 %v3863, %v4526
      %v4528 = vpop.f32.mrf.mxu0
      %v4529 = vadd.f32 %v3868, %v4528
      %4530 = vmatmul.bf16.gmra.mxu0 %v3969
      %v4531 = vpop.f32.mrf.mxu0
      %v4532 = vadd.f32 %v3873, %v4531
      %v4533 = vpop.f32.mrf.mxu0
      %v4534 = vadd.f32 %v3878, %v4533
      %4535 = vmatmul.bf16.gmra.mxu0 %v3974
      %v4536 = vpop.f32.mrf.mxu0
      %v4537 = vadd.f32 %v3883, %v4536
      %v4538 = vpop.f32.mrf.mxu0
      %v4539 = vadd.f32 %v3888, %v4538
      %4540 = vmatmul.bf16.gmra.mxu0 %v3979
      %v4541 = vpop.f32.mrf.mxu0
      %v4542 = vadd.f32 %v3893, %v4541
      %v4543 = vpop.f32.mrf.mxu0
      %v4544 = vadd.f32 %v3898, %v4543
      %4545 = vdwg.mxu0
      %4546 = vmatpush.bf16.msra.mxu0 %v4247
      %4547 = vmatpush.bf16.msra.mxu0 %v4245
      %4548 = vmatpush.bf16.msra.mxu0 %v4243
      %4549 = vmatpush.bf16.msra.mxu0 %v4241
      %4550 = vmatpush.bf16.msra.mxu0 %v4239
      %4551 = vmatpush.bf16.msra.mxu0 %v4237
      %4552 = vmatpush.bf16.msra.mxu0 %v4235
      %4553 = vmatpush.bf16.msra.mxu0 %v4233
      %4554 = vmatmul.bf16.gmra.mxu0 %v3965
      %v4555 = vpop.f32.mrf.mxu0
      %v4556 = vadd.f32 %v4527, %v4555
      %v4557 = vpop.f32.mrf.mxu0
      %v4558 = vadd.f32 %v4529, %v4557
      %4559 = vmatmul.bf16.gmra.mxu0 %v3970
      %v4560 = vpop.f32.mrf.mxu0
      %v4561 = vadd.f32 %v4532, %v4560
      %v4562 = vpop.f32.mrf.mxu0
      %v4563 = vadd.f32 %v4534, %v4562
      %4564 = vmatmul.bf16.gmra.mxu0 %v3975
      %v4565 = vpop.f32.mrf.mxu0
      %v4566 = vadd.f32 %v4537, %v4565
      %v4567 = vpop.f32.mrf.mxu0
      %v4568 = vadd.f32 %v4539, %v4567
      %4569 = vmatmul.bf16.gmra.mxu0 %v3980
      %v4570 = vpop.f32.mrf.mxu0
      %v4571 = vadd.f32 %v4542, %v4570
      %v4572 = vpop.f32.mrf.mxu0
      %v4573 = vadd.f32 %v4544, %v4572
      %4574 = vdwg.mxu0
      %4575 = vmatpush.bf16.msra.mxu0 %v4263
      %4576 = vmatpush.bf16.msra.mxu0 %v4261
      %4577 = vmatpush.bf16.msra.mxu0 %v4259
      %4578 = vmatpush.bf16.msra.mxu0 %v4257
      %4579 = vmatpush.bf16.msra.mxu0 %v4255
      %4580 = vmatpush.bf16.msra.mxu0 %v4253
      %4581 = vmatpush.bf16.msra.mxu0 %v4251
      %4582 = vmatpush.bf16.msra.mxu0 %v4249
      %4583 = vmatmul.bf16.gmra.mxu0 %v3966
      %v4584 = vpop.f32.mrf.mxu0
      %v4585 = vadd.f32 %v4556, %v4584
      %v4586 = vpop.f32.mrf.mxu0
      %v4587 = vadd.f32 %v4558, %v4586
      %4588 = vmatmul.bf16.gmra.mxu0 %v3971
      %v4589 = vpop.f32.mrf.mxu0
      %v4590 = vadd.f32 %v4561, %v4589
      %v4591 = vpop.f32.mrf.mxu0
      %v4592 = vadd.f32 %v4563, %v4591
      %4593 = vmatmul.bf16.gmra.mxu0 %v3976
      %v4594 = vpop.f32.mrf.mxu0
      %v4595 = vadd.f32 %v4566, %v4594
      %v4596 = vpop.f32.mrf.mxu0
      %v4597 = vadd.f32 %v4568, %v4596
      %4598 = vmatmul.bf16.gmra.mxu0 %v3981
      %v4599 = vpop.f32.mrf.mxu0
      %v4600 = vadd.f32 %v4571, %v4599
      %v4601 = vpop.f32.mrf.mxu0
      %v4602 = vadd.f32 %v4573, %v4601
      %4603 = vdwg.mxu0
      %4604 = vmatpush.bf16.msra.mxu0 %v4279
      %4605 = vmatpush.bf16.msra.mxu0 %v4277
      %4606 = vmatpush.bf16.msra.mxu0 %v4275
      %4607 = vmatpush.bf16.msra.mxu0 %v4273
      %4608 = vmatpush.bf16.msra.mxu0 %v4271
      %4609 = vmatpush.bf16.msra.mxu0 %v4269
      %4610 = vmatpush.bf16.msra.mxu0 %v4267
      %4611 = vmatpush.bf16.msra.mxu0 %v4265
      %4612 = vmatmul.bf16.gmra.mxu0 %v3967
      %v4613 = vpop.f32.mrf.mxu0
      %v4614 = vadd.f32 %v4585, %v4613
      %v4615 = vpop.f32.mrf.mxu0
      %v4616 = vadd.f32 %v4587, %v4615
      %4617 = vmatmul.bf16.gmra.mxu0 %v3972
      %v4618 = vpop.f32.mrf.mxu0
      %v4619 = vadd.f32 %v4590, %v4618
      %v4620 = vpop.f32.mrf.mxu0
      %v4621 = vadd.f32 %v4592, %v4620
      %4622 = vmatmul.bf16.gmra.mxu0 %v3977
      %v4623 = vpop.f32.mrf.mxu0
      %v4624 = vadd.f32 %v4595, %v4623
      %v4625 = vpop.f32.mrf.mxu0
      %v4626 = vadd.f32 %v4597, %v4625
      %4627 = vmatmul.bf16.gmra.mxu0 %v3982
      %v4628 = vpop.f32.mrf.mxu0
      %v4629 = vadd.f32 %v4600, %v4628
      %v4630 = vpop.f32.mrf.mxu0
      %v4631 = vadd.f32 %v4602, %v4630
      %4632 = vdwg.mxu0
      %4633 = vmatpush.bf16.msra.mxu0 0
      %4634 = vmatpush.bf16.msra.mxu0 0
      %4635 = vmatpush.bf16.msra.mxu0 0
      %4636 = vmatpush.bf16.msra.mxu0 0
      %4637 = vmatpush.bf16.msra.mxu0 %v4287
      %4638 = vmatpush.bf16.msra.mxu0 %v4285
      %4639 = vmatpush.bf16.msra.mxu0 %v4283
      %4640 = vmatpush.bf16.msra.mxu0 %v4281
      %4641 = vmatmul.bf16.gmra.mxu0 %v4361
      %v4642 = vpop.f32.mrf.mxu0
      %v4643 = vadd.f32 %v4614, %v4642
      %v4644 = vpop.f32.mrf.mxu0
      %v4645 = vadd.f32 %v4616, %v4644
      %4646 = vmatmul.bf16.gmra.mxu0 %v4364
      %v4647 = vpop.f32.mrf.mxu0
      %v4648 = vadd.f32 %v4619, %v4647
      %v4649 = vpop.f32.mrf.mxu0
      %v4650 = vadd.f32 %v4621, %v4649
      %4651 = vmatmul.bf16.gmra.mxu0 %v4367
      %v4652 = vpop.f32.mrf.mxu0
      %v4653 = vadd.f32 %v4624, %v4652
      %v4654 = vpop.f32.mrf.mxu0
      %v4655 = vadd.f32 %v4626, %v4654
      %4656 = vmatmul.bf16.gmra.mxu0 %v4370
      %v4657 = vpop.f32.mrf.mxu0
      %v4658 = vadd.f32 %v4629, %v4657
      %v4659 = vpop.f32.mrf.mxu0
      %v4660 = vadd.f32 %v4631, %v4659
      %4661 = vdwg.mxu0
      %v4662 = vld [vmem:[%s575] sm:$0xff]
      %v4663 = vld [vmem:[%s575 + $0x8] sm:$0xff]
      %v4664 = vld [vmem:[%s575 + $0x10] sm:$0xff]
      %v4665 = vld [vmem:[%s575 + $0x18] sm:$0xff]
      %v4666 = vld [vmem:[%s575 + $0x20] sm:$0xff]
      %v4667 = vld [vmem:[%s575 + $0x28] sm:$0xff]
      %v4668 = vld [vmem:[%s575 + $0x30] sm:$0xff]
      %v4669 = vld [vmem:[%s575 + $0x38] sm:$0xff]
      %v4670 = vld [vmem:[%s575 + $0x40] sm:$0xff]
      %v4671 = vld [vmem:[%s575 + $0x48] sm:$0xff]
      %v4672 = vld [vmem:[%s575 + $0x50] sm:$0xff]
      %v4673 = vld [vmem:[%s575 + $0x58] sm:$0xff]
      %v4674 = vld [vmem:[%s575 + $0x60] sm:$0xff]
      %v4675 = vld [vmem:[%s575 + $0x68] sm:$0xff]
      %v4676 = vld [vmem:[%s575 + $0x70] sm:$0xff]
      %v4677 = vld [vmem:[%s575 + $0x78] sm:$0xff]
      %v4678 = vadd.f32 %v4662, %v4498
      %v4679 = vadd.f32 %v4663, %v4643
      %v4680 = vadd.f32 %v4664, %v4500
      %v4681 = vadd.f32 %v4665, %v4645
      %v4682 = vadd.f32 %v4666, %v4503
      %v4683 = vadd.f32 %v4667, %v4648
      %v4684 = vadd.f32 %v4668, %v4505
      %v4685 = vadd.f32 %v4669, %v4650
      %v4686 = vadd.f32 %v4670, %v4508
      %v4687 = vadd.f32 %v4671, %v4653
      %v4688 = vadd.f32 %v4672, %v4510
      %v4689 = vadd.f32 %v4673, %v4655
      %v4690 = vadd.f32 %v4674, %v4513
      %v4691 = vadd.f32 %v4675, %v4658
      %v4692 = vadd.f32 %v4676, %v4515
      %v4693 = vadd.f32 %v4677, %v4660
      %4694 = vst [vmem:[%s575] sm:$0xff] %v4678
      %4695 = vst [vmem:[%s575 + $0x8] sm:$0xff] %v4679
      %4696 = vst [vmem:[%s575 + $0x10] sm:$0xff] %v4680
      %4697 = vst [vmem:[%s575 + $0x18] sm:$0xff] %v4681
      %4698 = vst [vmem:[%s575 + $0x20] sm:$0xff] %v4682
      %4699 = vst [vmem:[%s575 + $0x28] sm:$0xff] %v4683
      %4700 = vst [vmem:[%s575 + $0x30] sm:$0xff] %v4684
      %4701 = vst [vmem:[%s575 + $0x38] sm:$0xff] %v4685
      %4702 = vst [vmem:[%s575 + $0x40] sm:$0xff] %v4686
      %4703 = vst [vmem:[%s575 + $0x48] sm:$0xff] %v4687
      %4704 = vst [vmem:[%s575 + $0x50] sm:$0xff] %v4688
      %4705 = vst [vmem:[%s575 + $0x58] sm:$0xff] %v4689
      %4706 = vst [vmem:[%s575 + $0x60] sm:$0xff] %v4690
      %4707 = vst [vmem:[%s575 + $0x68] sm:$0xff] %v4691
      %4708 = vst [vmem:[%s575 + $0x70] sm:$0xff] %v4692
      %4709 = vst [vmem:[%s575 + $0x78] sm:$0xff] %v4693
      %p4710 = scmp.lt.s32.totalorder %s29, 1
      %s4711 = scalar_select %p4710, %s29, 1
      %s4712 = smul.addr %s4711, 16
      %s4713 = smul.addr %s4712, 8
      %s4714 = scalar_lea.vmem %s18, %s4713
      // Predicated region
      $region93: #{resblock_forward.1} parent=91 // pred_check
        %p4715 = pneg %p430
      $region94: #{resblock_forward.1} parent=91 // pred_check_branch
        %4717 = sbr.rel (%p4715) target = $region96
      $region95: #{resblock_forward.1} parent=91 // pred_region
        _
      $region96: #{resblock_forward.1} parent=91 // pred_fallthru
        _
    $region92: #{resblock_forward.1} parent=5 // pred_fallthru
      _
    %p4718 = scmp.le.s32.totalorder 2, %s24
    // Predicated region
    $region97: #{resblock_forward.1} parent=5 // pred_check
      %p4719 = pneg %p4718
    $region98: #{resblock_forward.1} parent=5 // pred_check_branch
      %4721 = sbr.rel (%p4719) target = $region100
    $region99: #{resblock_forward.1} parent=5 // pred_region
      %s4722 = ssub.s32 %s24, 2
      // Predicated region
      $region101: #{resblock_forward.1} parent=99 // pred_check
        %p4723 = pneg %p436
      $region102: #{resblock_forward.1} parent=99 // pred_check_branch
        %4725 = sbr.rel (%p4723) target = $region104
      $region103: #{resblock_forward.1} parent=99 // pred_region
        %p4726 = scmp.lt.s32.totalorder %s30, 1
        %s4727 = scalar_select %p4726, %s30, 1
        %s4728 = smul.addr %s4727, 16
        %s4729 = smul.addr %s4728, 8
        %s4730 = scalar_lea.vmem %s18, %s4729
      $region104: #{resblock_forward.1} parent=99 // pred_fallthru
        _
    $region100: #{resblock_forward.1} parent=5 // pred_fallthru
      _
  $region6: #{resblock_forward.1} parent=0 // loop_footer
    %s28 = sadd.s32 1, %s24
  $region7: #{resblock_forward.1} parent=0 // loop_footer_branch
    %23 = sbr.rel target = $region3
  $region8: #{resblock_forward.1} parent=0 // loop_exit
    _

</llo_original>
